<compile_context>
chip_gen: v7x
topology: tpu7x:2x2x1
jax: 0.10.0
libtpu: 0.0.40
codegen_flags: <defaults>
</compile_context>

<pallas_src>
import math
from functools import partial

import numpy as np
import jax
import jax.numpy as jnp
from jax.experimental import pallas as pl
from jax.experimental.pallas import tpu as pltpu

# ----------------------------- module config --------------------------------
D_IN, D_OUT, D_HIDDEN, N_LAYERS = 3, 5, 32, 5
SKIP_IN = (4,)
BIAS = 0.5
SCALE = 1.0
SOFTPLUS_BETA = 100.0
SOFTPLUS_THRESHOLD = 20.0          # PyTorch nn.Softplus default threshold

DIMS = [D_IN] + [D_HIDDEN] * N_LAYERS + [D_OUT]
NUM_LAYERS = len(DIMS)             # 7
L = NUM_LAYERS - 1                 # 6 linear layers
SKIP_SPLIT = D_HIDDEN - D_IN       # 29: lin4 input cols fed by h vs. by inputs
INV_SQRT2 = 1.0 / math.sqrt(2.0)
OUT_ROWS = 8                       # sublane-padded output rows (rows 5..7 zero)


# --------------------------- parameter init ---------------------------------
def init_params(key):
    """Geometric init (multires=0, inside_outside=False). Returns a list of
    (W, b) with W in torch nn.Linear layout (out_dim, in_dim).  weight_norm at
    init is the identity reparameterization, so effective forward weights
    equal these."""
    params = []
    for l in range(L):
        in_dim = DIMS[l]
        out_dim = DIMS[l + 1] - DIMS[0] if (l + 1) in SKIP_IN else DIMS[l + 1]
        key, kw = jax.random.split(key)
        if l == NUM_LAYERS - 2:
            mean = math.sqrt(math.pi) / math.sqrt(DIMS[l])
            W = mean + 1e-4 * jax.random.normal(kw, (out_dim, in_dim), jnp.float32)
            b = jnp.full((out_dim,), -BIAS, jnp.float32)
        else:
            std = math.sqrt(2.0) / math.sqrt(out_dim)
            W = std * jax.random.normal(kw, (out_dim, in_dim), jnp.float32)
            b = jnp.zeros((out_dim,), jnp.float32)
        params.append((W, b))
    return params


# -------------------- host-side constant folding + packing -------------------
def pack_params(params, compute_dtype=jnp.bfloat16):
    """Fold scale / sqrt(2) constants into the weights and pack into 3 slabs:
      xw : (2*D_HIDDEN, D_IN)  f32    -- [W0*scale ; W4[:,29:]*scale/sqrt(2)]
                                         (coordinate matmuls stay f32)
      hw : (5, 32, 32) compute_dtype  -- [W1, W2, W3(pad rows), W4[:,:29]/sqrt2
                                          (pad cols), W5(pad rows)]
      bs : (32, 6) f32                -- biases as columns (zero-padded rows)
    Biases stay f32 (added after the f32-accumulated matmul)."""
    (W0, b0), (W1, b1), (W2, b2), (W3, b3), (W4, b4), (W5, b5) = params

    W0f = W0 * SCALE if SCALE != 1.0 else W0
    Wh = W4[:, :SKIP_SPLIT] * INV_SQRT2              # (32, 29)
    Wx = W4[:, SKIP_SPLIT:] * (SCALE * INV_SQRT2)    # (32, 3)
    if SCALE != 1.0:                                 # fold 1/scale into SDF row
        W5 = W5.at[0, :].set(W5[0, :] / SCALE)
        b5 = b5.at[0].set(b5[0] / SCALE)

    def pad2(a, rows, cols):
        return jnp.zeros((rows, cols), a.dtype).at[:a.shape[0], :a.shape[1]].set(a)

    xw = jnp.concatenate([W0f, Wx], axis=0).astype(jnp.float32)           # (64, 3)
    hw = jnp.stack([
        W1, W2,
        pad2(W3, D_HIDDEN, D_HIDDEN),    # rows 29..31 zero
        pad2(Wh, D_HIDDEN, D_HIDDEN),    # cols 29..31 zero (kills junk h rows)
        pad2(W5, D_HIDDEN, D_HIDDEN),    # rows 5..31  zero
    ], axis=0).astype(compute_dtype)                                      # (5,32,32)

    def padb(b):
        return jnp.zeros((D_HIDDEN,), jnp.float32).at[:b.shape[0]].set(b)

    bs = jnp.stack([padb(b0), padb(b1), padb(b2),
                    padb(b3), padb(b4), padb(b5)], axis=0).T              # (32, 6)
    return xw, hw, bs


# ------------------------------- kernel --------------------------------------
def _softplus(h, act_dtype):
    # PyTorch Softplus(beta=100, threshold=20):
    #   x if beta*x > 20 else log(1 + exp(beta*x)) / beta
    h = h.astype(act_dtype)
    z = h * jnp.asarray(SOFTPLUS_BETA, act_dtype)
    sp = jnp.log(1.0 + jnp.exp(jnp.minimum(z, SOFTPLUS_THRESHOLD))) / SOFTPLUS_BETA
    return jnp.where(z > SOFTPLUS_THRESHOLD, h, sp)


def sdf_kernel(x_ref, xw_ref, hw_ref, bs_ref, out_ref, *, compute_dtype, act_dtype):
    bs = bs_ref[...]                                            # (32, 6) f32

    # ---- layer 0: f32 K=3 matmul on the raw coordinates ---------------------
    x = x_ref[...]                                              # (3, TB) f32
    h = jnp.dot(xw_ref[:D_HIDDEN, :], x, preferred_element_type=jnp.float32)
    h = _softplus(h + bs[:, 0:1], act_dtype)

    # ---- layers 1..3: plain 32x32 hidden layers ------------------------------
    for l in (1, 2, 3):
        h = jnp.dot(hw_ref[l - 1], h.astype(compute_dtype),
                    preferred_element_type=jnp.float32) + bs[:, l:l + 1]
        h = _softplus(h, act_dtype)

    # ---- layer 4 (skip): lin4(cat([h, inputs], 1) / sqrt(2)); sqrt(2) folded.
    # Recompute the skip term here (f32, K=3) instead of carrying a (32, TB)
    # live value across layers 1-3 (avoids vreg spills at large TB).
    x4 = x_ref[...]                                             # re-read from VMEM
    skip = jnp.dot(xw_ref[D_HIDDEN:, :], x4, preferred_element_type=jnp.float32)
    h = (jnp.dot(hw_ref[3], h.astype(compute_dtype),
                 preferred_element_type=jnp.float32) + skip + bs[:, 4:5])
    h = _softplus(h, act_dtype)

    # ---- layer 5 (output): W5 rows 5..31 zero-padded; 1/scale folded in row 0.
    y = jnp.dot(hw_ref[4], h.astype(compute_dtype),
                preferred_element_type=jnp.float32) + bs[:, 5:6]
    out_ref[...] = y[:OUT_ROWS, :].astype(out_ref.dtype)        # unmasked (8,TB) vst


# ------------------------------- wrapper --------------------------------------
def _round_up(a, m):
    return ((a + m - 1) // m) * m


def _pick_tb(n, tb):
    """Lane-align the tile, clamp to the batch, and guarantee >= 2 grid steps
    whenever the batch allows so both v7x TensorCores get work."""
    n_lane = _round_up(n, 128)
    tb = max(128, min(int(tb), n_lane))
    if n_lane >= 256:
        tb = min(tb, (n_lane // 2) // 128 * 128)
    return max(128, (tb // 128) * 128)


def sdf_forward_packed(x, xw, hw, bs, *, tb=1024, act_dtype=jnp.float32):
    """x: (N, 3) points -> (N, 5) [sdf, features...], using pre-packed slabs."""
    N = x.shape[0]
    compute_dtype = hw.dtype
    tb = _pick_tb(N, tb)
    n_pad = _round_up(N, tb)

    # TODO(synk): optionally accept/return the transposed (3,N)/(8,N) layout to
    # skip this pad/transpose HBM copy entirely for very large point clouds.
    x_t = jnp.pad(x, ((0, n_pad - N), (0, 0))).T                # (3, n_pad)

    flops = int(n_pad) * (2 * 2 * D_IN * D_HIDDEN + 4 * 2 * D_HIDDEN * D_HIDDEN)
    transcendentals = int(n_pad) * 5 * D_HIDDEN * 2
    bytes_accessed = int(4 * n_pad * (D_IN + OUT_ROWS)
                         + xw.size * 4 + hw.size * hw.dtype.itemsize + bs.size * 4)

    kernel = partial(sdf_kernel, compute_dtype=compute_dtype, act_dtype=act_dtype)
    out_t = pl.pallas_call(
        kernel,
        out_shape=jax.ShapeDtypeStruct((OUT_ROWS, n_pad), jnp.float32),
        grid_spec=pltpu.PrefetchScalarGridSpec(
            num_scalar_prefetch=0,
            grid=(n_pad // tb,),
            in_specs=[
                pl.BlockSpec((D_IN, tb), lambda i: (0, i)),      # points (lane-dense)
                pl.BlockSpec(xw.shape, lambda i: (0, 0)),        # f32 coord weights
                pl.BlockSpec(hw.shape, lambda i: (0, 0, 0)),     # hidden weights
                pl.BlockSpec(bs.shape, lambda i: (0, 0)),        # biases
            ],
            out_specs=pl.BlockSpec((OUT_ROWS, tb), lambda i: (0, i)),
        ),
        compiler_params=pltpu.CompilerParams(dimension_semantics=("parallel",)),
        cost_estimate=pl.CostEstimate(flops=flops,
                                      transcendentals=transcendentals,
                                      bytes_accessed=bytes_accessed),
    )(x_t, xw, hw, bs)
    return out_t.T[:N, :D_OUT]


def make_sdf_forward(params, *, tb=1024, compute_dtype=jnp.bfloat16,
                     act_dtype=jnp.float32):
    """Pack the weights once and return a jitted forward fn.
    compute_dtype: MXU operand dtype for the 32x32 hidden layers (bf16 default;
      the K=3 coordinate matmuls always run f32).
    act_dtype: softplus dtype (f32 default; bf16 recommended on v6e/v7x)."""
    xw, hw, bs = pack_params(params, compute_dtype)

    @jax.jit
    def fwd(x):
        return sdf_forward_packed(x, xw, hw, bs, tb=tb, act_dtype=act_dtype)

    return fwd


# --------------------------- pure-JAX reference -------------------------------
def sdf_ref(x, params):
    hi = jax.lax.Precision.HIGHEST
    inputs = x * SCALE
    h = inputs
    for l, (W, b) in enumerate(params):
        if l in SKIP_IN:
            h = jnp.concatenate([h, inputs], axis=1) / math.sqrt(2.0)
        h = jnp.dot(h, W.T, precision=hi) + b
        if l < L - 1:
            z = h * SOFTPLUS_BETA
            sp = jnp.log1p(jnp.exp(jnp.minimum(z, SOFTPLUS_THRESHOLD))) / SOFTPLUS_BETA
            h = jnp.where(z > SOFTPLUS_THRESHOLD, h, sp)
    return jnp.concatenate([h[:, :1] / SCALE, h[:, 1:]], axis=-1)


# TODO(synk): .gradient()/.sdf()/.sdf_hidden_appearance() are thin autodiff /
# slice wrappers over forward; only the forward hot path is implemented in-kernel.

if __name__ == "__main__":
    key = jax.random.PRNGKey(0)
    kx, kp = jax.random.split(key)

    params = init_params(kp)
    N = 2048                                  # grid = 2 "parallel" tiles at TB=1024
    x = jax.random.normal(kx, (N, D_IN), jnp.float32)
    ref = jax.block_until_ready(sdf_ref(x, params))

    # f32 MXU operands: close to the (HIGHEST-precision) reference.
    fwd_f32 = make_sdf_forward(params, compute_dtype=jnp.float32)
    out_f32 = jax.block_until_ready(fwd_f32(x))
    np.testing.assert_allclose(np.asarray(out_f32), np.asarray(ref),
                               atol=2e-3, rtol=2e-3)

    # Default fast path: bf16 hidden-layer operands, f32 accumulation, f32
    # coordinate matmuls + softplus.  Numerics differ from f32 by design.
    fwd_bf16 = make_sdf_forward(params)
    out_bf16 = jax.block_until_ready(fwd_bf16(x))
    assert bool(jnp.all(jnp.isfinite(out_bf16)))
    np.testing.assert_allclose(np.asarray(out_bf16), np.asarray(ref),
                               atol=0.25, rtol=0.1)

    # bf16 softplus variant (recommended on v6e/v7x where EUP/VPU are bf16).
    fwd_fast = make_sdf_forward(params, act_dtype=jnp.bfloat16)
    out_fast = jax.block_until_ready(fwd_fast(x))
    assert bool(jnp.all(jnp.isfinite(out_fast)))
    np.testing.assert_allclose(np.asarray(out_fast), np.asarray(ref),
                               atol=0.3, rtol=0.15)

    # Odd batch size: exercises padding and the >=2-tile grid cap.
    x_small = jax.random.normal(jax.random.PRNGKey(1), (333, D_IN), jnp.float32)
    out_small = jax.block_until_ready(fwd_f32(x_small))
    np.testing.assert_allclose(np.asarray(out_small),
                               np.asarray(sdf_ref(x_small, params)),
                               atol=2e-3, rtol=2e-3)

    print("KERNEL_OK")
</pallas_src>

<mosaic_0001>
module attributes {stable_mosaic.version = 11 : i64} {
  func.func @sdf_kernel(%arg0: i32, %arg1: memref<3x1024xf32, #tpu.memory_space<vmem>>, %arg2: memref<64x3xf32, #tpu.memory_space<vmem>>, %arg3: memref<5x32x32xf32, #tpu.memory_space<vmem>>, %arg4: memref<32x6xf32, #tpu.memory_space<vmem>>, %arg5: memref<8x1024xf32, #tpu.memory_space<vmem>>) attributes {dimension_semantics = [#tpu.dimension_semantics<parallel>], iteration_bounds = array<i64: 2>, scalar_prefetch = 0 : i64, scratch_operands = 0 : i64, tpu.core_type = #tpu.core_type<tc>, window_params = [{transform_indices = @transform_0, window_bounds = array<i64: 3, 1024>}, {pipeline_mode = #tpu.pipeline_mode<synchronous>, transform_indices = @transform_1, window_bounds = array<i64: 64, 3>}, {pipeline_mode = #tpu.pipeline_mode<synchronous>, transform_indices = @transform_2, window_bounds = array<i64: 5, 32, 32>}, {pipeline_mode = #tpu.pipeline_mode<synchronous>, transform_indices = @transform_3, window_bounds = array<i64: 32, 6>}, {transform_indices = @transform_4, window_bounds = array<i64: 8, 1024>}]} {
    %c0 = arith.constant 0 : index
    %c0_0 = arith.constant 0 : index
    %0 = vector.load %arg4[%c0, %c0_0] : memref<32x6xf32, #tpu.memory_space<vmem>>, vector<32x6xf32>
    %c0_1 = arith.constant 0 : index
    %c0_2 = arith.constant 0 : index
    %1 = vector.load %arg1[%c0_1, %c0_2] : memref<3x1024xf32, #tpu.memory_space<vmem>>, vector<3x1024xf32>
    %c0_3 = arith.constant 0 : index
    %c0_4 = arith.constant 0 : index
    %2 = vector.load %arg2[%c0_3, %c0_4] : memref<64x3xf32, #tpu.memory_space<vmem>>, vector<32x3xf32>
    %cst = arith.constant dense<0.000000e+00> : vector<32x1024xf32>
    %3 = tpu.matmul %2, %1, %cst {dimension_numbers = #tpu.dot_dimension_numbers<[1], [0], [0], [1], [0, 0, 1, 1], [], []>} : vector<32x3xf32>, vector<3x1024xf32>, vector<32x1024xf32> -> vector<32x1024xf32>
    %4 = vector.extract_strided_slice %0 {offsets = [0, 0], sizes = [32, 1], strides = [1, 1]} : vector<32x6xf32> to vector<32x1xf32>
    %5 = vector.broadcast %4 : vector<32x1xf32> to vector<32x1024xf32>
    %6 = arith.addf %3, %5 : vector<32x1024xf32>
    %cst_5 = arith.constant 1.000000e+02 : f32
    %7 = vector.broadcast %cst_5 : f32 to vector<32x1024xf32>
    %8 = arith.mulf %6, %7 : vector<32x1024xf32>
    %cst_6 = arith.constant 2.000000e+01 : f32
    %9 = vector.broadcast %cst_6 : f32 to vector<32x1024xf32>
    %10 = arith.minimumf %8, %9 : vector<32x1024xf32>
    %11 = math.exp %10 : vector<32x1024xf32>
    %cst_7 = arith.constant 1.000000e+00 : f32
    %12 = vector.broadcast %cst_7 : f32 to vector<32x1024xf32>
    %13 = arith.addf %12, %11 : vector<32x1024xf32>
    %14 = math.log %13 : vector<32x1024xf32>
    %cst_8 = arith.constant 1.000000e+02 : f32
    %15 = vector.broadcast %cst_8 : f32 to vector<32x1024xf32>
    %16 = arith.divf %14, %15 : vector<32x1024xf32>
    %cst_9 = arith.constant 2.000000e+01 : f32
    %17 = vector.broadcast %cst_9 : f32 to vector<32x1024xf32>
    %18 = arith.cmpf ogt, %8, %17 : vector<32x1024xf32>
    %19 = arith.select %18, %6, %16 : vector<32x1024xi1>, vector<32x1024xf32>
    %c0_10 = arith.constant 0 : index
    %c0_11 = arith.constant 0 : index
    %c0_12 = arith.constant 0 : index
    %20 = vector.load %arg3[%c0_10, %c0_11, %c0_12] : memref<5x32x32xf32, #tpu.memory_space<vmem>>, vector<1x32x32xf32>
    %21 = vector.shape_cast %20 : vector<1x32x32xf32> to vector<32x32xf32>
    %cst_13 = arith.constant dense<0.000000e+00> : vector<32x1024xf32>
    %22 = tpu.matmul %21, %19, %cst_13 {dimension_numbers = #tpu.dot_dimension_numbers<[1], [0], [0], [1], [0, 0, 1, 1], [], []>} : vector<32x32xf32>, vector<32x1024xf32>, vector<32x1024xf32> -> vector<32x1024xf32>
    %23 = vector.extract_strided_slice %0 {offsets = [0, 1], sizes = [32, 1], strides = [1, 1]} : vector<32x6xf32> to vector<32x1xf32>
    %24 = vector.broadcast %23 : vector<32x1xf32> to vector<32x1024xf32>
    %25 = arith.addf %22, %24 : vector<32x1024xf32>
    %cst_14 = arith.constant 1.000000e+02 : f32
    %26 = vector.broadcast %cst_14 : f32 to vector<32x1024xf32>
    %27 = arith.mulf %25, %26 : vector<32x1024xf32>
    %cst_15 = arith.constant 2.000000e+01 : f32
    %28 = vector.broadcast %cst_15 : f32 to vector<32x1024xf32>
    %29 = arith.minimumf %27, %28 : vector<32x1024xf32>
    %30 = math.exp %29 : vector<32x1024xf32>
    %cst_16 = arith.constant 1.000000e+00 : f32
    %31 = vector.broadcast %cst_16 : f32 to vector<32x1024xf32>
    %32 = arith.addf %31, %30 : vector<32x1024xf32>
    %33 = math.log %32 : vector<32x1024xf32>
    %cst_17 = arith.constant 1.000000e+02 : f32
    %34 = vector.broadcast %cst_17 : f32 to vector<32x1024xf32>
    %35 = arith.divf %33, %34 : vector<32x1024xf32>
    %cst_18 = arith.constant 2.000000e+01 : f32
    %36 = vector.broadcast %cst_18 : f32 to vector<32x1024xf32>
    %37 = arith.cmpf ogt, %27, %36 : vector<32x1024xf32>
    %38 = arith.select %37, %25, %35 : vector<32x1024xi1>, vector<32x1024xf32>
    %c1 = arith.constant 1 : index
    %c0_19 = arith.constant 0 : index
    %c0_20 = arith.constant 0 : index
    %39 = vector.load %arg3[%c1, %c0_19, %c0_20] : memref<5x32x32xf32, #tpu.memory_space<vmem>>, vector<1x32x32xf32>
    %40 = vector.shape_cast %39 : vector<1x32x32xf32> to vector<32x32xf32>
    %cst_21 = arith.constant dense<0.000000e+00> : vector<32x1024xf32>
    %41 = tpu.matmul %40, %38, %cst_21 {dimension_numbers = #tpu.dot_dimension_numbers<[1], [0], [0], [1], [0, 0, 1, 1], [], []>} : vector<32x32xf32>, vector<32x1024xf32>, vector<32x1024xf32> -> vector<32x1024xf32>
    %42 = vector.extract_strided_slice %0 {offsets = [0, 2], sizes = [32, 1], strides = [1, 1]} : vector<32x6xf32> to vector<32x1xf32>
    %43 = vector.broadcast %42 : vector<32x1xf32> to vector<32x1024xf32>
    %44 = arith.addf %41, %43 : vector<32x1024xf32>
    %cst_22 = arith.constant 1.000000e+02 : f32
    %45 = vector.broadcast %cst_22 : f32 to vector<32x1024xf32>
    %46 = arith.mulf %44, %45 : vector<32x1024xf32>
    %cst_23 = arith.constant 2.000000e+01 : f32
    %47 = vector.broadcast %cst_23 : f32 to vector<32x1024xf32>
    %48 = arith.minimumf %46, %47 : vector<32x1024xf32>
    %49 = math.exp %48 : vector<32x1024xf32>
    %cst_24 = arith.constant 1.000000e+00 : f32
    %50 = vector.broadcast %cst_24 : f32 to vector<32x1024xf32>
    %51 = arith.addf %50, %49 : vector<32x1024xf32>
    %52 = math.log %51 : vector<32x1024xf32>
    %cst_25 = arith.constant 1.000000e+02 : f32
    %53 = vector.broadcast %cst_25 : f32 to vector<32x1024xf32>
    %54 = arith.divf %52, %53 : vector<32x1024xf32>
    %cst_26 = arith.constant 2.000000e+01 : f32
    %55 = vector.broadcast %cst_26 : f32 to vector<32x1024xf32>
    %56 = arith.cmpf ogt, %46, %55 : vector<32x1024xf32>
    %57 = arith.select %56, %44, %54 : vector<32x1024xi1>, vector<32x1024xf32>
    %c2 = arith.constant 2 : index
    %c0_27 = arith.constant 0 : index
    %c0_28 = arith.constant 0 : index
    %58 = vector.load %arg3[%c2, %c0_27, %c0_28] : memref<5x32x32xf32, #tpu.memory_space<vmem>>, vector<1x32x32xf32>
    %59 = vector.shape_cast %58 : vector<1x32x32xf32> to vector<32x32xf32>
    %cst_29 = arith.constant dense<0.000000e+00> : vector<32x1024xf32>
    %60 = tpu.matmul %59, %57, %cst_29 {dimension_numbers = #tpu.dot_dimension_numbers<[1], [0], [0], [1], [0, 0, 1, 1], [], []>} : vector<32x32xf32>, vector<32x1024xf32>, vector<32x1024xf32> -> vector<32x1024xf32>
    %61 = vector.extract_strided_slice %0 {offsets = [0, 3], sizes = [32, 1], strides = [1, 1]} : vector<32x6xf32> to vector<32x1xf32>
    %62 = vector.broadcast %61 : vector<32x1xf32> to vector<32x1024xf32>
    %63 = arith.addf %60, %62 : vector<32x1024xf32>
    %cst_30 = arith.constant 1.000000e+02 : f32
    %64 = vector.broadcast %cst_30 : f32 to vector<32x1024xf32>
    %65 = arith.mulf %63, %64 : vector<32x1024xf32>
    %cst_31 = arith.constant 2.000000e+01 : f32
    %66 = vector.broadcast %cst_31 : f32 to vector<32x1024xf32>
    %67 = arith.minimumf %65, %66 : vector<32x1024xf32>
    %68 = math.exp %67 : vector<32x1024xf32>
    %cst_32 = arith.constant 1.000000e+00 : f32
    %69 = vector.broadcast %cst_32 : f32 to vector<32x1024xf32>
    %70 = arith.addf %69, %68 : vector<32x1024xf32>
    %71 = math.log %70 : vector<32x1024xf32>
    %cst_33 = arith.constant 1.000000e+02 : f32
    %72 = vector.broadcast %cst_33 : f32 to vector<32x1024xf32>
    %73 = arith.divf %71, %72 : vector<32x1024xf32>
    %cst_34 = arith.constant 2.000000e+01 : f32
    %74 = vector.broadcast %cst_34 : f32 to vector<32x1024xf32>
    %75 = arith.cmpf ogt, %65, %74 : vector<32x1024xf32>
    %76 = arith.select %75, %63, %73 : vector<32x1024xi1>, vector<32x1024xf32>
    %c0_35 = arith.constant 0 : index
    %c0_36 = arith.constant 0 : index
    %77 = vector.load %arg1[%c0_35, %c0_36] : memref<3x1024xf32, #tpu.memory_space<vmem>>, vector<3x1024xf32>
    %c32 = arith.constant 32 : index
    %c0_37 = arith.constant 0 : index
    %78 = vector.load %arg2[%c32, %c0_37] : memref<64x3xf32, #tpu.memory_space<vmem>>, vector<32x3xf32>
    %cst_38 = arith.constant dense<0.000000e+00> : vector<32x1024xf32>
    %79 = tpu.matmul %78, %77, %cst_38 {dimension_numbers = #tpu.dot_dimension_numbers<[1], [0], [0], [1], [0, 0, 1, 1], [], []>} : vector<32x3xf32>, vector<3x1024xf32>, vector<32x1024xf32> -> vector<32x1024xf32>
    %c3 = arith.constant 3 : index
    %c0_39 = arith.constant 0 : index
    %c0_40 = arith.constant 0 : index
    %80 = vector.load %arg3[%c3, %c0_39, %c0_40] : memref<5x32x32xf32, #tpu.memory_space<vmem>>, vector<1x32x32xf32>
    %81 = vector.shape_cast %80 : vector<1x32x32xf32> to vector<32x32xf32>
    %cst_41 = arith.constant dense<0.000000e+00> : vector<32x1024xf32>
    %82 = tpu.matmul %81, %76, %cst_41 {dimension_numbers = #tpu.dot_dimension_numbers<[1], [0], [0], [1], [0, 0, 1, 1], [], []>} : vector<32x32xf32>, vector<32x1024xf32>, vector<32x1024xf32> -> vector<32x1024xf32>
    %83 = arith.addf %82, %79 : vector<32x1024xf32>
    %84 = vector.extract_strided_slice %0 {offsets = [0, 4], sizes = [32, 1], strides = [1, 1]} : vector<32x6xf32> to vector<32x1xf32>
    %85 = vector.broadcast %84 : vector<32x1xf32> to vector<32x1024xf32>
    %86 = arith.addf %83, %85 : vector<32x1024xf32>
    %cst_42 = arith.constant 1.000000e+02 : f32
    %87 = vector.broadcast %cst_42 : f32 to vector<32x1024xf32>
    %88 = arith.mulf %86, %87 : vector<32x1024xf32>
    %cst_43 = arith.constant 2.000000e+01 : f32
    %89 = vector.broadcast %cst_43 : f32 to vector<32x1024xf32>
    %90 = arith.minimumf %88, %89 : vector<32x1024xf32>
    %91 = math.exp %90 : vector<32x1024xf32>
    %cst_44 = arith.constant 1.000000e+00 : f32
    %92 = vector.broadcast %cst_44 : f32 to vector<32x1024xf32>
    %93 = arith.addf %92, %91 : vector<32x1024xf32>
    %94 = math.log %93 : vector<32x1024xf32>
    %cst_45 = arith.constant 1.000000e+02 : f32
    %95 = vector.broadcast %cst_45 : f32 to vector<32x1024xf32>
    %96 = arith.divf %94, %95 : vector<32x1024xf32>
    %cst_46 = arith.constant 2.000000e+01 : f32
    %97 = vector.broadcast %cst_46 : f32 to vector<32x1024xf32>
    %98 = arith.cmpf ogt, %88, %97 : vector<32x1024xf32>
    %99 = arith.select %98, %86, %96 : vector<32x1024xi1>, vector<32x1024xf32>
    %c4 = arith.constant 4 : index
    %c0_47 = arith.constant 0 : index
    %c0_48 = arith.constant 0 : index
    %100 = vector.load %arg3[%c4, %c0_47, %c0_48] : memref<5x32x32xf32, #tpu.memory_space<vmem>>, vector<1x32x32xf32>
    %101 = vector.shape_cast %100 : vector<1x32x32xf32> to vector<32x32xf32>
    %cst_49 = arith.constant dense<0.000000e+00> : vector<32x1024xf32>
    %102 = tpu.matmul %101, %99, %cst_49 {dimension_numbers = #tpu.dot_dimension_numbers<[1], [0], [0], [1], [0, 0, 1, 1], [], []>} : vector<32x32xf32>, vector<32x1024xf32>, vector<32x1024xf32> -> vector<32x1024xf32>
    %103 = vector.extract_strided_slice %0 {offsets = [0, 5], sizes = [32, 1], strides = [1, 1]} : vector<32x6xf32> to vector<32x1xf32>
    %104 = vector.broadcast %103 : vector<32x1xf32> to vector<32x1024xf32>
    %105 = arith.addf %102, %104 : vector<32x1024xf32>
    %106 = vector.extract_strided_slice %105 {offsets = [0, 0], sizes = [8, 1024], strides = [1, 1]} : vector<32x1024xf32> to vector<8x1024xf32>
    %c0_50 = arith.constant 0 : index
    %c0_51 = arith.constant 0 : index
    %107 = vector.load %arg5[%c0_50, %c0_51] : memref<8x1024xf32, #tpu.memory_space<vmem>>, vector<8x1024xf32>
    tpu.vector_store %arg5[%c0_50, %c0_51], %106 {strides = array<i32>} : memref<8x1024xf32, #tpu.memory_space<vmem>>, vector<8x1024xf32>,
    return
  }
  func.func @transform_0(%arg0: i32) -> (i32, i32) {
    %c0_i32 = arith.constant 0 : i32
    %c0_i32_0 = arith.constant 0 : i32
    return %c0_i32, %arg0 : i32, i32
  }
  func.func @transform_1(%arg0: i32) -> (i32, i32) {
    %c0_i32 = arith.constant 0 : i32
    %c0_i32_0 = arith.constant 0 : i32
    %c0_i32_1 = arith.constant 0 : i32
    return %c0_i32, %c0_i32_0 : i32, i32
  }
  func.func @transform_2(%arg0: i32) -> (i32, i32, i32) {
    %c0_i32 = arith.constant 0 : i32
    %c0_i32_0 = arith.constant 0 : i32
    %c0_i32_1 = arith.constant 0 : i32
    %c0_i32_2 = arith.constant 0 : i32
    return %c0_i32, %c0_i32_0, %c0_i32_1 : i32, i32, i32
  }
  func.func @transform_3(%arg0: i32) -> (i32, i32) {
    %c0_i32 = arith.constant 0 : i32
    %c0_i32_0 = arith.constant 0 : i32
    %c0_i32_1 = arith.constant 0 : i32
    return %c0_i32, %c0_i32_0 : i32, i32
  }
  func.func @transform_4(%arg0: i32) -> (i32, i32) {
    %c0_i32 = arith.constant 0 : i32
    %c0_i32_0 = arith.constant 0 : i32
    return %c0_i32, %arg0 : i32, i32
  }
}

</mosaic_0001>

<llo_original>
// kernel: fwd.1
$region0: #{fwd.1}
  #allocation0 [shape = 'u32[]', space=smem, size = 0x4, offset = 0x4, fixed_abs, tag = 'smem constant byte address 0x4 - core index']
  #allocation1 [shape = 'u32[144,128]{1,0:T(1,128)}', space=vmem, size = 0x12000, scoped, tag = 'internal scratch']
  %s0 = inlined_call_operand.hbm [shape: f32[3,2048], index: 0, kind: input, shape index: {}]
  %s1 = inlined_call_operand.hbm [shape: f32[64,3], index: 1, kind: input, shape index: {}]
  %s2 = inlined_call_operand.hbm [shape: f32[5,32,32], index: 2, kind: input, shape index: {}]
  %s3 = inlined_call_operand.hbm [shape: f32[32,6], index: 3, kind: input, shape index: {}]
  %s4 = inlined_call_operand.hbm [shape: f32[8,2048], index: 4, kind: output, shape index: {}]
  %s5 = sld [smem:[#allocation0]]
  $region65: #{fwd.1} parent=0
    _
  %s7 = ssub.s32 1, %s5
  %s8 = scalar_select 0, %s7, %s5
  $region1: #{fwd.1} parent=0
    #allocation2 [shape = 'u8[32768]{0}', space=vmem, size = 0x8000, scoped, tag = 'input window, operand 0']
    #allocation3 [shape = 's32[2]{0}', space=sflag, size = 0x8, scoped, tag = 'scoped memory for fwd.1']
    #allocation4 [shape = 's32[2]{0}', space=sflag, size = 0x8, scoped, tag = 'scoped memory for fwd.1']
    #allocation5 [shape = 'u8[32768]{0}', space=vmem, size = 0x8000, scoped, tag = 'input window, operand 1, single buffered']
    #allocation6 [shape = 's32[1]{0}', space=sflag, size = 0x4, scoped, tag = 'scoped memory for fwd.1']
    #allocation7 [shape = 'u8[81920]{0}', space=vmem, size = 0x14000, scoped, tag = 'input window, operand 2, single buffered']
    #allocation8 [shape = 'u8[16384]{0}', space=vmem, size = 0x4000, scoped, tag = 'input window, operand 3, single buffered']
    #allocation9 [shape = 's32[1]{0}', space=sflag, size = 0x4, scoped, tag = 'scoped memory for fwd.1']
    #allocation10 [shape = 'u8[65536]{0}', space=vmem, size = 0x10000, scoped, tag = 'output window, operand 0']
    %9 = vsyncpa [#allocation3], 0
    %s10 = scalar_lea.sflag [#allocation3], 1
    %11 = vsyncpa %s10, 0
    %12 = vsyncpa [#allocation6], 0
    %13 = vsyncpa [#allocation9], 0
    %14 = vsyncpa [#allocation4], 0
    %s15 = scalar_lea.sflag [#allocation4], 1
    %16 = vsyncpa %s15, 0
    loop: start=0, step=1, limit=4
    $region2: #{fwd.1} parent=1 // loop_pre_header
      _
    $region3: #{fwd.1} parent=1 // loop_header
      %s18 = sphi 0, %s22
      %p19 = scmp.ge.s32.totalorder %s18, 4
      %s28 = sphi 0, %s30
      %s31 = sphi 0, %s28
      %s32 = sphi 0, %s31
      %s48 = sphi 0, %s32
      %s52 = sphi 0, %s52
      %s54 = sphi 0, %s52
      %s55 = sphi 0, %s54
      %s69 = sphi 0, %s55
      %s73 = sphi 0, %s73
      %s75 = sphi 0, %s73
      %s76 = sphi 0, %s75
      %s90 = sphi 0, %s76
      %s94 = sphi 0, %s94
      %s96 = sphi 0, %s94
      %s97 = sphi 0, %s96
      %s111 = sphi 0, %s97
      %s117 = sphi 0, %s119
      %s120 = sphi 0, %s117
      %s121 = sphi 0, %s120
      %s137 = sphi 0, %s121
    $region4: #{fwd.1} parent=1 // loop_header_branch
      %21 = sbr.rel (%p19) target = $region8
    $region5: #{fwd.1} parent=1 // loop_body
      %s23 = ssub.s32 %s18, 1
      %s24 = ssub.s32 %s18, 2
      %s25 = sadd.s32 %s18, 1
      %s26 = ssub.s32 %s18, %s25
      %p27 = scmp.eq.s32.totalorder %s26, 0
      %s29 = sadd.s32 %s28, 1
      %s30 = scalar_select %p27, %s28, %s29
      %p33 = pneg %p27
      %p34 = scmp.eq.s32.totalorder %s18, 1
      %p35 = por %p33, %p34
      %p36 = scmp.ne.s32.totalorder %s28, %s31
      %p37 = scmp.eq.s32.totalorder %s18, 0
      %p38 = por %p36, %p37
      %p39 = scmp.ne.s32.totalorder %s28, %s31
      %p40 = scmp.eq.s32.totalorder %s23, 1
      %p41 = por %p39, %p40
      %p42 = scmp.ne.s32.totalorder %s31, %s32
      %p43 = scmp.eq.s32.totalorder %s23, 0
      %p44 = por %p42, %p43
      %p45 = scmp.ne.s32.totalorder %s31, %s32
      %p46 = scmp.eq.s32.totalorder %s24, 1
      %p47 = por %p45, %p46
      %p49 = scmp.ne.s32.totalorder %s32, %s48
      %p50 = scmp.eq.s32.totalorder %s24, 0
      %p51 = por %p49, %p50
      %s53 = sadd.s32 %s52, 1
      %p56 = scmp.eq.s32.totalorder %s18, 1
      %p57 = scmp.ne.s32.totalorder %s52, %s54
      %p58 = scmp.eq.s32.totalorder %s18, 0
      %p59 = por %p57, %p58
      %p60 = scmp.ne.s32.totalorder %s52, %s54
      %p61 = scmp.eq.s32.totalorder %s23, 1
      %p62 = por %p60, %p61
      %p63 = scmp.ne.s32.totalorder %s54, %s55
      %p64 = scmp.eq.s32.totalorder %s23, 0
      %p65 = por %p63, %p64
      %p66 = scmp.ne.s32.totalorder %s54, %s55
      %p67 = scmp.eq.s32.totalorder %s24, 1
      %p68 = por %p66, %p67
      %p70 = scmp.ne.s32.totalorder %s55, %s69
      %p71 = scmp.eq.s32.totalorder %s24, 0
      %p72 = por %p70, %p71
      %s74 = sadd.s32 %s73, 1
      %p77 = scmp.eq.s32.totalorder %s18, 1
      %p78 = scmp.ne.s32.totalorder %s73, %s75
      %p79 = scmp.eq.s32.totalorder %s18, 0
      %p80 = por %p78, %p79
      %p81 = scmp.ne.s32.totalorder %s73, %s75
      %p82 = scmp.eq.s32.totalorder %s23, 1
      %p83 = por %p81, %p82
      %p84 = scmp.ne.s32.totalorder %s75, %s76
      %p85 = scmp.eq.s32.totalorder %s23, 0
      %p86 = por %p84, %p85
      %p87 = scmp.ne.s32.totalorder %s75, %s76
      %p88 = scmp.eq.s32.totalorder %s24, 1
      %p89 = por %p87, %p88
      %p91 = scmp.ne.s32.totalorder %s76, %s90
      %p92 = scmp.eq.s32.totalorder %s24, 0
      %p93 = por %p91, %p92
      %s95 = sadd.s32 %s94, 1
      %p98 = scmp.eq.s32.totalorder %s18, 1
      %p99 = scmp.ne.s32.totalorder %s94, %s96
      %p100 = scmp.eq.s32.totalorder %s18, 0
      %p101 = por %p99, %p100
      %p102 = scmp.ne.s32.totalorder %s94, %s96
      %p103 = scmp.eq.s32.totalorder %s23, 1
      %p104 = por %p102, %p103
      %p105 = scmp.ne.s32.totalorder %s96, %s97
      %p106 = scmp.eq.s32.totalorder %s23, 0
      %p107 = por %p105, %p106
      %p108 = scmp.ne.s32.totalorder %s96, %s97
      %p109 = scmp.eq.s32.totalorder %s24, 1
      %p110 = por %p108, %p109
      %p112 = scmp.ne.s32.totalorder %s97, %s111
      %p113 = scmp.eq.s32.totalorder %s24, 0
      %p114 = por %p112, %p113
      %s115 = ssub.s32 %s18, %s25
      %p116 = scmp.eq.s32.totalorder %s115, 0
      %s118 = sadd.s32 %s117, 1
      %s119 = scalar_select %p116, %s117, %s118
      %p122 = pneg %p116
      %p123 = scmp.eq.s32.totalorder %s18, 1
      %p124 = por %p122, %p123
      %p125 = scmp.ne.s32.totalorder %s117, %s120
      %p126 = scmp.eq.s32.totalorder %s18, 0
      %p127 = por %p125, %p126
      %p128 = scmp.ne.s32.totalorder %s117, %s120
      %p129 = scmp.eq.s32.totalorder %s23, 1
      %p130 = por %p128, %p129
      %p131 = scmp.ne.s32.totalorder %s120, %s121
      %p132 = scmp.eq.s32.totalorder %s23, 0
      %p133 = por %p131, %p132
      %p134 = scmp.ne.s32.totalorder %s120, %s121
      %p135 = scmp.eq.s32.totalorder %s24, 1
      %p136 = por %p134, %p135
      %p138 = scmp.ne.s32.totalorder %s121, %s137
      %p139 = scmp.eq.s32.totalorder %s24, 0
      %p140 = por %p138, %p139
      %p141 = scmp.le.s32.totalorder 1, %s18
      %p142 = scmp.lt.s32.totalorder %s18, 3
      %p143 = pnand %p141, %p142
      %p144 = pneg %p143
      // Predicated region
      $region9: #{fwd.1} parent=5 // pred_check
        _
      $region10: #{fwd.1} parent=5 // pred_check_branch
        %146 = sbr.rel (%p143) target = $region12
      $region11: #{fwd.1} parent=5 // pred_region
        %s147 = ssub.s32 %s18, 1
        // Predicated region
        $region13: #{fwd.1} parent=11 // pred_check
          %p148 = pneg %p65
        $region14: #{fwd.1} parent=11 // pred_check_branch
          %150 = sbr.rel (%p148) target = $region16
        $region15: #{fwd.1} parent=11 // pred_region
          %s152 = ssub.s32 1024, 1024
          %153 = vsyncadd [#allocation6], %s152
          %s154 = sshll.u32 [#allocation5], 4
          %s155 = int_to_ptr.vmem [resolvable:$true] %s154
          %160 = dma.hbm_to_vmem [thread:$0]  %s1, 1024, %s155, [#allocation6], 128, 128, 8
        $region16: #{fwd.1} parent=11 // pred_fallthru
          _
        // Predicated region
        $region17: #{fwd.1} parent=11 // pred_check
          %p161 = pneg %p86
        $region18: #{fwd.1} parent=11 // pred_check_branch
          %163 = sbr.rel (%p161) target = $region20
        $region19: #{fwd.1} parent=11 // pred_region
          %s165 = ssub.s32 2560, 2560
          %166 = vsyncadd [#allocation6], %s165
          %s167 = sshll.u32 [#allocation7], 4
          %s168 = int_to_ptr.vmem [resolvable:$true] %s167
          %173 = dma.hbm_to_vmem [thread:$0]  %s2, 2560, %s168, [#allocation6], 128, 128, 8
        $region20: #{fwd.1} parent=11 // pred_fallthru
          _
        // Predicated region
        $region21: #{fwd.1} parent=11 // pred_check
          %p174 = pneg %p107
        $region22: #{fwd.1} parent=11 // pred_check_branch
          %176 = sbr.rel (%p174) target = $region24
        $region23: #{fwd.1} parent=11 // pred_region
          %s178 = ssub.s32 512, 512
          %179 = vsyncadd [#allocation9], %s178
          %s180 = sshll.u32 [#allocation8], 4
          %s181 = int_to_ptr.vmem [resolvable:$true] %s180
          %186 = dma.hbm_to_vmem [thread:$0]  %s3, 512, %s181, [#allocation9], 128, 128, 8
        $region24: #{fwd.1} parent=11 // pred_fallthru
          _
      $region12: #{fwd.1} parent=5 // pred_fallthru
        _
      %p187 = scmp.lt.s32.totalorder %s18, 2
      // Predicated region
      $region25: #{fwd.1} parent=5 // pred_check
        %p188 = pneg %p187
      $region26: #{fwd.1} parent=5 // pred_check_branch
        %190 = sbr.rel (%p188) target = $region28
      $region27: #{fwd.1} parent=5 // pred_region
        // Predicated region
        $region29: #{fwd.1} parent=27 // pred_check
          %p191 = pneg %p38
        $region30: #{fwd.1} parent=27 // pred_check_branch
          %193 = sbr.rel (%p191) target = $region32
        $region31: #{fwd.1} parent=27 // pred_region
          %s194 = sand.u32 %s28, 1
          %s195 = scalar_lea.sflag [#allocation3], %s194
          %s196 = sand.u32 %s28, 1
          %s197 = smul.addr %s196, 32
          %s198 = scalar_lea.vmem [#allocation2], %s197
          %s199 = smul.u32 8, %s18
          %s201 = ssub.s32 512, 512
          %202 = vsyncadd %s195, %s201
          %s203 = smul.addr %s199, 64
          %s204 = scalar_lea.hbm %s0, %s203
          %s206 = sshll.u32 %s198, 4
          %s207 = int_to_ptr.vmem [resolvable:$true] %s206
          %209 = dma.hbm_to_vmem [thread:$0]  %s204, 512, %s207, %s195
        $region32: #{fwd.1} parent=27 // pred_fallthru
          _
      $region28: #{fwd.1} parent=5 // pred_fallthru
        _
      %p210 = scmp.le.s32.totalorder 1, %s18
      %p211 = scmp.lt.s32.totalorder %s18, 3
      %p212 = pnand %p210, %p211
      %p213 = pneg %p212
      // Predicated region
      $region33: #{fwd.1} parent=5 // pred_check
        _
      $region34: #{fwd.1} parent=5 // pred_check_branch
        %215 = sbr.rel (%p212) target = $region36
      $region35: #{fwd.1} parent=5 // pred_region
        %s216 = ssub.s32 %s18, 1
        %s217 = sand.u32 %s31, 1
        %s218 = scalar_lea.sflag [#allocation3], %s217
        %s219 = sand.u32 %s31, 1
        %s220 = smul.addr %s219, 32
        %s221 = scalar_lea.vmem [#allocation2], %s220
        // Predicated region
        $region37: #{fwd.1} parent=35 // pred_check
          %p222 = pneg %p44
        $region38: #{fwd.1} parent=35 // pred_check_branch
          %224 = sbr.rel (%p222) target = $region40
        $region39: #{fwd.1} parent=35 // pred_region
          %225 = dma.done %s218, 512
        $region40: #{fwd.1} parent=35 // pred_fallthru
          _
        // Predicated region
        $region41: #{fwd.1} parent=35 // pred_check
          %p226 = pneg %p65
        $region42: #{fwd.1} parent=35 // pred_check_branch
          %228 = sbr.rel (%p226) target = $region44
        $region43: #{fwd.1} parent=35 // pred_region
          %229 = dma.done [#allocation6], 1024
        $region44: #{fwd.1} parent=35 // pred_fallthru
          _
        // Predicated region
        $region45: #{fwd.1} parent=35 // pred_check
          %p230 = pneg %p86
        $region46: #{fwd.1} parent=35 // pred_check_branch
          %232 = sbr.rel (%p230) target = $region48
        $region47: #{fwd.1} parent=35 // pred_region
          %233 = dma.done [#allocation6], 2560
        $region48: #{fwd.1} parent=35 // pred_fallthru
          _
        // Predicated region
        $region49: #{fwd.1} parent=35 // pred_check
          %p234 = pneg %p107
        $region50: #{fwd.1} parent=35 // pred_check_branch
          %236 = sbr.rel (%p234) target = $region52
        $region51: #{fwd.1} parent=35 // pred_region
          %237 = dma.done [#allocation9], 512
        $region52: #{fwd.1} parent=35 // pred_fallthru
          _
        %s238 = sand.u32 %s31, 1
        %s239 = scalar_lea.sflag [#allocation3], %s238
        %s240 = sand.u32 %s31, 1
        %s241 = smul.addr %s240, 32
        %s242 = scalar_lea.vmem [#allocation2], %s241
        %p243 = pneg %p44
        %p244 = pneg %p41
        %p245 = pneg %p65
        %p246 = pneg %p62
        %p247 = pneg %p86
        %p248 = pneg %p83
        %p249 = pneg %p107
        %p250 = pneg %p104
        %p251 = pneg %p133
        %p252 = pneg %p130
        %s253 = sand.u32 %s120, 1
        %s254 = scalar_lea.sflag [#allocation4], %s253
        %s255 = sand.u32 %s120, 1
        %s256 = smul.addr %s255, 64
        %s257 = scalar_lea.vmem [#allocation10], %s256
        %s258 = smul.u32 8, %s23
        %s259 = smul.u32 8, %s23
        %v260 = vld [vmem:[#allocation8] sm:$0xff]
        %v261 = vld [vmem:[#allocation8 + $0x8] sm:$0xff]
        %v262 = vld [vmem:[#allocation8 + $0x10] sm:$0xff]
        %v263 = vld [vmem:[#allocation8 + $0x18] sm:$0xff]
        %v264 = vld [vmem:[%s221] sm:$0x77]
        %v265 = vld [vmem:[%s221 + $0x8] sm:$0x77]
        %v266 = vld [vmem:[%s221 + $0x10] sm:$0x77]
        %v267 = vld [vmem:[%s221 + $0x18] sm:$0x77]
        %v268 = vld [vmem:[#allocation5] sm:$0xff]
        %v269 = vld [vmem:[#allocation5 + $0x8] sm:$0xff]
        %v270 = vld [vmem:[#allocation5 + $0x10] sm:$0xff]
        %v271 = vld [vmem:[#allocation5 + $0x18] sm:$0xff]
        %273 = vset.pattern.permute.xlu0 0
        %274 = vperm.xlu0 %273, %v260
        %v275 = vpop.permute.xlu0 %274
        %278 = vset.pattern.permute.xlu0 0
        %279 = vperm.xlu0 %278, %v261
        %v280 = vpop.permute.xlu0 %279
        %283 = vset.pattern.permute.xlu0 0
        %284 = vperm.xlu0 %283, %v262
        %v285 = vpop.permute.xlu0 %284
        %288 = vset.pattern.permute.xlu0 0
        %289 = vperm.xlu0 %288, %v263
        %v290 = vpop.permute.xlu0 %289
        %v296 = vcombine.high %v264, %v264
        %v297 = vcombine.high %v265, %v265
        %v298 = vcombine.high %v266, %v266
        %v299 = vcombine.high %v267, %v267
        %vm300 = vcmask 23552
        %v302 = vsel %vm300, %v268, 0
        %v305 = vsel %vm300, %v269, 0
        %v308 = vsel %vm300, %v270, 0
        %v311 = vsel %vm300, %v271, 0
        %vm313 = vcmask 1042432
        %v314 = vsel %vm313, %v264, 0
        %v316 = vsel %vm313, %v296, 0
        %v318 = vsel %vm313, %v265, 0
        %v320 = vsel %vm313, %v297, 0
        %v322 = vsel %vm313, %v266, 0
        %v324 = vsel %vm313, %v298, 0
        %v326 = vsel %vm313, %v267, 0
        %v328 = vsel %vm313, %v299, 0
        %330 = vmatprep.subr.mxu0 %v316
        %331 = vmatpush1.msra.mxu0 %v314
        %332 = vmatprep.subr.mxu0 0.0
        %333 = vmatpush1.msra.mxu0 0.0
        %334 = vmatprep.subr.mxu0 0.0
        %335 = vmatpush1.msra.mxu0 0.0
        %336 = vmatprep.subr.mxu0 0.0
        %337 = vmatpush1.msra.mxu0 0.0
        %338 = vmatprep.subr.mxu0 0.0
        %339 = vmatpush1.msra.mxu0 0.0
        %340 = vmatprep.subr.mxu0 0.0
        %341 = vmatpush1.msra.mxu0 0.0
        %342 = vmatprep.subr.mxu0 0.0
        %343 = vmatpush1.msra.mxu0 0.0
        %344 = vmatprep.subr.mxu0 0.0
        %345 = vmatpush1.msra.mxu0 0.0
        %346 = vmatprep.subr.mxu0 0.0
        %347 = vmatpush1.msra.mxu0 0.0
        %348 = vmatprep.subr.mxu0 0.0
        %349 = vmatpush1.msra.mxu0 0.0
        %350 = vmatprep.subr.mxu0 0.0
        %351 = vmatpush1.msra.mxu0 0.0
        %352 = vmatprep.subr.mxu0 0.0
        %353 = vmatpush1.msra.mxu0 0.0
        %354 = vmatprep.subr.mxu0 0.0
        %355 = vmatpush1.msra.mxu0 0.0
        %356 = vmatprep.subr.mxu0 0.0
        %357 = vmatpush1.msra.mxu0 0.0
        %358 = vmatprep.subr.mxu0 0.0
        %359 = vmatpush1.msra.mxu0 0.0
        %360 = vmatprep.subr.mxu0 0.0
        %361 = vmatpush1.msra.mxu0 0.0
        %362 = vmatprep.subr.mxu0 0.0
        %363 = vmatpush1.msra.mxu0 0.0
        %364 = vmatprep.subr.mxu0 0.0
        %365 = vmatpush1.msra.mxu0 0.0
        %366 = vmatprep.subr.mxu0 0.0
        %367 = vmatpush1.msra.mxu0 0.0
        %368 = vmatprep.subr.mxu0 0.0
        %369 = vmatpush1.msra.mxu0 0.0
        %370 = vmatprep.subr.mxu0 0.0
        %371 = vmatpush1.msra.mxu0 0.0
        %372 = vmatprep.subr.mxu0 0.0
        %373 = vmatpush1.msra.mxu0 0.0
        %374 = vmatprep.subr.mxu0 0.0
        %375 = vmatpush1.msra.mxu0 0.0
        %376 = vmatprep.subr.mxu0 0.0
        %377 = vmatpush1.msra.mxu0 0.0
        %378 = vmatprep.subr.mxu0 0.0
        %379 = vmatpush1.msra.mxu0 0.0
        %380 = vmatprep.subr.mxu0 0.0
        %381 = vmatpush1.msra.mxu0 0.0
        %382 = vmatprep.subr.mxu0 0.0
        %383 = vmatpush1.msra.mxu0 0.0
        %384 = vmatprep.subr.mxu0 0.0
        %385 = vmatpush1.msra.mxu0 0.0
        %386 = vmatprep.subr.mxu0 0.0
        %387 = vmatpush1.msra.mxu0 0.0
        %388 = vmatprep.subr.mxu0 0.0
        %389 = vmatpush1.msra.mxu0 0.0
        %390 = vmatprep.subr.mxu0 0.0
        %391 = vmatpush1.msra.mxu0 0.0
        %392 = vmatprep.subr.mxu0 0.0
        %393 = vmatpush1.msra.mxu0 0.0
        %394 = vmatprep.mubr.f32.mxu0 0.0
        %395 = vmatmul.mubr.f32.gmra.mrb[0].mxu0 %v302
        %v396 = vpop.f32.mrb[0].mxu0
        %v397 = vadd.f32 %v275, %v396
        %v398 = vpop.f32.mrb[0].mxu0
        %v399 = vadd.f32 %v275, %v398
        %400 = vmatprep.mubr.f32.mxu0 0.0
        %401 = vmatmul.mubr.f32.gmra.mrb[0].mxu0 %v305
        %v402 = vpop.f32.mrb[0].mxu0
        %v403 = vadd.f32 %v280, %v402
        %v404 = vpop.f32.mrb[0].mxu0
        %v405 = vadd.f32 %v280, %v404
        %406 = vmatprep.mubr.f32.mxu0 0.0
        %407 = vmatmul.mubr.f32.gmra.mrb[0].mxu0 %v308
        %v408 = vpop.f32.mrb[0].mxu0
        %v409 = vadd.f32 %v285, %v408
        %v410 = vpop.f32.mrb[0].mxu0
        %v411 = vadd.f32 %v285, %v410
        %412 = vmatprep.mubr.f32.mxu0 0.0
        %413 = vmatmul.mubr.f32.gmra.mrb[0].mxu0 %v311
        %v414 = vpop.f32.mrb[0].mxu0
        %v415 = vadd.f32 %v290, %v414
        %v416 = vpop.f32.mrb[0].mxu0
        %v417 = vadd.f32 %v290, %v416
        %418 = vdwg.mxu0
        %419 = vmatprep.subr.mxu0 %v320
        %420 = vmatpush1.msra.mxu0 %v318
        %421 = vmatprep.subr.mxu0 0.0
        %422 = vmatpush1.msra.mxu0 0.0
        %423 = vmatprep.subr.mxu0 0.0
        %424 = vmatpush1.msra.mxu0 0.0
        %425 = vmatprep.subr.mxu0 0.0
        %426 = vmatpush1.msra.mxu0 0.0
        %427 = vmatprep.subr.mxu0 0.0
        %428 = vmatpush1.msra.mxu0 0.0
        %429 = vmatprep.subr.mxu0 0.0
        %430 = vmatpush1.msra.mxu0 0.0
        %431 = vmatprep.subr.mxu0 0.0
        %432 = vmatpush1.msra.mxu0 0.0
        %433 = vmatprep.subr.mxu0 0.0
        %434 = vmatpush1.msra.mxu0 0.0
        %435 = vmatprep.subr.mxu0 0.0
        %436 = vmatpush1.msra.mxu0 0.0
        %437 = vmatprep.subr.mxu0 0.0
        %438 = vmatpush1.msra.mxu0 0.0
        %439 = vmatprep.subr.mxu0 0.0
        %440 = vmatpush1.msra.mxu0 0.0
        %441 = vmatprep.subr.mxu0 0.0
        %442 = vmatpush1.msra.mxu0 0.0
        %443 = vmatprep.subr.mxu0 0.0
        %444 = vmatpush1.msra.mxu0 0.0
        %445 = vmatprep.subr.mxu0 0.0
        %446 = vmatpush1.msra.mxu0 0.0
        %447 = vmatprep.subr.mxu0 0.0
        %448 = vmatpush1.msra.mxu0 0.0
        %449 = vmatprep.subr.mxu0 0.0
        %450 = vmatpush1.msra.mxu0 0.0
        %451 = vmatprep.subr.mxu0 0.0
        %452 = vmatpush1.msra.mxu0 0.0
        %453 = vmatprep.subr.mxu0 0.0
        %454 = vmatpush1.msra.mxu0 0.0
        %455 = vmatprep.subr.mxu0 0.0
        %456 = vmatpush1.msra.mxu0 0.0
        %457 = vmatprep.subr.mxu0 0.0
        %458 = vmatpush1.msra.mxu0 0.0
        %459 = vmatprep.subr.mxu0 0.0
        %460 = vmatpush1.msra.mxu0 0.0
        %461 = vmatprep.subr.mxu0 0.0
        %462 = vmatpush1.msra.mxu0 0.0
        %463 = vmatprep.subr.mxu0 0.0
        %464 = vmatpush1.msra.mxu0 0.0
        %465 = vmatprep.subr.mxu0 0.0
        %466 = vmatpush1.msra.mxu0 0.0
        %467 = vmatprep.subr.mxu0 0.0
        %468 = vmatpush1.msra.mxu0 0.0
        %469 = vmatprep.subr.mxu0 0.0
        %470 = vmatpush1.msra.mxu0 0.0
        %471 = vmatprep.subr.mxu0 0.0
        %472 = vmatpush1.msra.mxu0 0.0
        %473 = vmatprep.subr.mxu0 0.0
        %474 = vmatpush1.msra.mxu0 0.0
        %475 = vmatprep.subr.mxu0 0.0
        %476 = vmatpush1.msra.mxu0 0.0
        %477 = vmatprep.subr.mxu0 0.0
        %478 = vmatpush1.msra.mxu0 0.0
        %479 = vmatprep.subr.mxu0 0.0
        %480 = vmatpush1.msra.mxu0 0.0
        %481 = vmatprep.subr.mxu0 0.0
        %482 = vmatpush1.msra.mxu0 0.0
        %483 = vmatprep.mubr.f32.mxu0 0.0
        %484 = vmatmul.mubr.f32.gmra.mrb[0].mxu0 %v302
        %v485 = vpop.f32.mrb[0].mxu0
        %v486 = vadd.f32 %v275, %v485
        %v487 = vpop.f32.mrb[0].mxu0
        %v488 = vadd.f32 %v275, %v487
        %489 = vmatprep.mubr.f32.mxu0 0.0
        %490 = vmatmul.mubr.f32.gmra.mrb[0].mxu0 %v305
        %v491 = vpop.f32.mrb[0].mxu0
        %v492 = vadd.f32 %v280, %v491
        %v493 = vpop.f32.mrb[0].mxu0
        %v494 = vadd.f32 %v280, %v493
        %495 = vmatprep.mubr.f32.mxu0 0.0
        %496 = vmatmul.mubr.f32.gmra.mrb[0].mxu0 %v308
        %v497 = vpop.f32.mrb[0].mxu0
        %v498 = vadd.f32 %v285, %v497
        %v499 = vpop.f32.mrb[0].mxu0
        %v500 = vadd.f32 %v285, %v499
        %501 = vmatprep.mubr.f32.mxu0 0.0
        %502 = vmatmul.mubr.f32.gmra.mrb[0].mxu0 %v311
        %v503 = vpop.f32.mrb[0].mxu0
        %v504 = vadd.f32 %v290, %v503
        %v505 = vpop.f32.mrb[0].mxu0
        %v506 = vadd.f32 %v290, %v505
        %507 = vdwg.mxu0
        %508 = vmatprep.subr.mxu0 %v324
        %509 = vmatpush1.msra.mxu0 %v322
        %510 = vmatprep.subr.mxu0 0.0
        %511 = vmatpush1.msra.mxu0 0.0
        %512 = vmatprep.subr.mxu0 0.0
        %513 = vmatpush1.msra.mxu0 0.0
        %514 = vmatprep.subr.mxu0 0.0
        %515 = vmatpush1.msra.mxu0 0.0
        %516 = vmatprep.subr.mxu0 0.0
        %517 = vmatpush1.msra.mxu0 0.0
        %518 = vmatprep.subr.mxu0 0.0
        %519 = vmatpush1.msra.mxu0 0.0
        %520 = vmatprep.subr.mxu0 0.0
        %521 = vmatpush1.msra.mxu0 0.0
        %522 = vmatprep.subr.mxu0 0.0
        %523 = vmatpush1.msra.mxu0 0.0
        %524 = vmatprep.subr.mxu0 0.0
        %525 = vmatpush1.msra.mxu0 0.0
        %526 = vmatprep.subr.mxu0 0.0
        %527 = vmatpush1.msra.mxu0 0.0
        %528 = vmatprep.subr.mxu0 0.0
        %529 = vmatpush1.msra.mxu0 0.0
        %530 = vmatprep.subr.mxu0 0.0
        %531 = vmatpush1.msra.mxu0 0.0
        %532 = vmatprep.subr.mxu0 0.0
        %533 = vmatpush1.msra.mxu0 0.0
        %534 = vmatprep.subr.mxu0 0.0
        %535 = vmatpush1.msra.mxu0 0.0
        %536 = vmatprep.subr.mxu0 0.0
        %537 = vmatpush1.msra.mxu0 0.0
        %538 = vmatprep.subr.mxu0 0.0
        %539 = vmatpush1.msra.mxu0 0.0
        %540 = vmatprep.subr.mxu0 0.0
        %541 = vmatpush1.msra.mxu0 0.0
        %542 = vmatprep.subr.mxu0 0.0
        %543 = vmatpush1.msra.mxu0 0.0
        %544 = vmatprep.subr.mxu0 0.0
        %545 = vmatpush1.msra.mxu0 0.0
        %546 = vmatprep.subr.mxu0 0.0
        %547 = vmatpush1.msra.mxu0 0.0
        %548 = vmatprep.subr.mxu0 0.0
        %549 = vmatpush1.msra.mxu0 0.0
        %550 = vmatprep.subr.mxu0 0.0
        %551 = vmatpush1.msra.mxu0 0.0
        %552 = vmatprep.subr.mxu0 0.0
        %553 = vmatpush1.msra.mxu0 0.0
        %554 = vmatprep.subr.mxu0 0.0
        %555 = vmatpush1.msra.mxu0 0.0
        %556 = vmatprep.subr.mxu0 0.0
        %557 = vmatpush1.msra.mxu0 0.0
        %558 = vmatprep.subr.mxu0 0.0
        %559 = vmatpush1.msra.mxu0 0.0
        %560 = vmatprep.subr.mxu0 0.0
        %561 = vmatpush1.msra.mxu0 0.0
        %562 = vmatprep.subr.mxu0 0.0
        %563 = vmatpush1.msra.mxu0 0.0
        %564 = vmatprep.subr.mxu0 0.0
        %565 = vmatpush1.msra.mxu0 0.0
        %566 = vmatprep.subr.mxu0 0.0
        %567 = vmatpush1.msra.mxu0 0.0
        %568 = vmatprep.subr.mxu0 0.0
        %569 = vmatpush1.msra.mxu0 0.0
        %570 = vmatprep.subr.mxu0 0.0
        %571 = vmatpush1.msra.mxu0 0.0
        %572 = vmatprep.mubr.f32.mxu0 0.0
        %573 = vmatmul.mubr.f32.gmra.mrb[0].mxu0 %v302
        %v574 = vpop.f32.mrb[0].mxu0
        %v575 = vadd.f32 %v275, %v574
        %v576 = vpop.f32.mrb[0].mxu0
        %v577 = vadd.f32 %v275, %v576
        %578 = vmatprep.mubr.f32.mxu0 0.0
        %579 = vmatmul.mubr.f32.gmra.mrb[0].mxu0 %v305
        %v580 = vpop.f32.mrb[0].mxu0
        %v581 = vadd.f32 %v280, %v580
        %v582 = vpop.f32.mrb[0].mxu0
        %v583 = vadd.f32 %v280, %v582
        %584 = vmatprep.mubr.f32.mxu0 0.0
        %585 = vmatmul.mubr.f32.gmra.mrb[0].mxu0 %v308
        %v586 = vpop.f32.mrb[0].mxu0
        %v587 = vadd.f32 %v285, %v586
        %v588 = vpop.f32.mrb[0].mxu0
        %v589 = vadd.f32 %v285, %v588
        %590 = vmatprep.mubr.f32.mxu0 0.0
        %591 = vmatmul.mubr.f32.gmra.mrb[0].mxu0 %v311
        %v592 = vpop.f32.mrb[0].mxu0
        %v593 = vadd.f32 %v290, %v592
        %v594 = vpop.f32.mrb[0].mxu0
        %v595 = vadd.f32 %v290, %v594
        %596 = vdwg.mxu0
        %597 = vmatprep.subr.mxu0 %v328
        %598 = vmatpush1.msra.mxu0 %v326
        %599 = vmatprep.subr.mxu0 0.0
        %600 = vmatpush1.msra.mxu0 0.0
        %601 = vmatprep.subr.mxu0 0.0
        %602 = vmatpush1.msra.mxu0 0.0
        %603 = vmatprep.subr.mxu0 0.0
        %604 = vmatpush1.msra.mxu0 0.0
        %605 = vmatprep.subr.mxu0 0.0
        %606 = vmatpush1.msra.mxu0 0.0
        %607 = vmatprep.subr.mxu0 0.0
        %608 = vmatpush1.msra.mxu0 0.0
        %609 = vmatprep.subr.mxu0 0.0
        %610 = vmatpush1.msra.mxu0 0.0
        %611 = vmatprep.subr.mxu0 0.0
        %612 = vmatpush1.msra.mxu0 0.0
        %613 = vmatprep.subr.mxu0 0.0
        %614 = vmatpush1.msra.mxu0 0.0
        %615 = vmatprep.subr.mxu0 0.0
        %616 = vmatpush1.msra.mxu0 0.0
        %617 = vmatprep.subr.mxu0 0.0
        %618 = vmatpush1.msra.mxu0 0.0
        %619 = vmatprep.subr.mxu0 0.0
        %620 = vmatpush1.msra.mxu0 0.0
        %621 = vmatprep.subr.mxu0 0.0
        %622 = vmatpush1.msra.mxu0 0.0
        %623 = vmatprep.subr.mxu0 0.0
        %624 = vmatpush1.msra.mxu0 0.0
        %625 = vmatprep.subr.mxu0 0.0
        %626 = vmatpush1.msra.mxu0 0.0
        %627 = vmatprep.subr.mxu0 0.0
        %628 = vmatpush1.msra.mxu0 0.0
        %629 = vmatprep.subr.mxu0 0.0
        %630 = vmatpush1.msra.mxu0 0.0
        %631 = vmatprep.subr.mxu0 0.0
        %632 = vmatpush1.msra.mxu0 0.0
        %633 = vmatprep.subr.mxu0 0.0
        %634 = vmatpush1.msra.mxu0 0.0
        %635 = vmatprep.subr.mxu0 0.0
        %636 = vmatpush1.msra.mxu0 0.0
        %637 = vmatprep.subr.mxu0 0.0
        %638 = vmatpush1.msra.mxu0 0.0
        %639 = vmatprep.subr.mxu0 0.0
        %640 = vmatpush1.msra.mxu0 0.0
        %641 = vmatprep.subr.mxu0 0.0
        %642 = vmatpush1.msra.mxu0 0.0
        %643 = vmatprep.subr.mxu0 0.0
        %644 = vmatpush1.msra.mxu0 0.0
        %645 = vmatprep.subr.mxu0 0.0
        %646 = vmatpush1.msra.mxu0 0.0
        %647 = vmatprep.subr.mxu0 0.0
        %648 = vmatpush1.msra.mxu0 0.0
        %649 = vmatprep.subr.mxu0 0.0
        %650 = vmatpush1.msra.mxu0 0.0
        %651 = vmatprep.subr.mxu0 0.0
        %652 = vmatpush1.msra.mxu0 0.0
        %653 = vmatprep.subr.mxu0 0.0
        %654 = vmatpush1.msra.mxu0 0.0
        %655 = vmatprep.subr.mxu0 0.0
        %656 = vmatpush1.msra.mxu0 0.0
        %657 = vmatprep.subr.mxu0 0.0
        %658 = vmatpush1.msra.mxu0 0.0
        %659 = vmatprep.subr.mxu0 0.0
        %660 = vmatpush1.msra.mxu0 0.0
        %661 = vmatprep.mubr.f32.mxu0 0.0
        %662 = vmatmul.mubr.f32.gmra.mrb[0].mxu0 %v302
        %v663 = vpop.f32.mrb[0].mxu0
        %v664 = vadd.f32 %v275, %v663
        %v665 = vpop.f32.mrb[0].mxu0
        %v666 = vadd.f32 %v275, %v665
        %667 = vmatprep.mubr.f32.mxu0 0.0
        %668 = vmatmul.mubr.f32.gmra.mrb[0].mxu0 %v305
        %v669 = vpop.f32.mrb[0].mxu0
        %v670 = vadd.f32 %v280, %v669
        %v671 = vpop.f32.mrb[0].mxu0
        %v672 = vadd.f32 %v280, %v671
        %673 = vmatprep.mubr.f32.mxu0 0.0
        %674 = vmatmul.mubr.f32.gmra.mrb[0].mxu0 %v308
        %v675 = vpop.f32.mrb[0].mxu0
        %v676 = vadd.f32 %v285, %v675
        %v677 = vpop.f32.mrb[0].mxu0
        %v678 = vadd.f32 %v285, %v677
        %679 = vmatprep.mubr.f32.mxu0 0.0
        %680 = vmatmul.mubr.f32.gmra.mrb[0].mxu0 %v311
        %v681 = vpop.f32.mrb[0].mxu0
        %v682 = vadd.f32 %v290, %v681
        %v683 = vpop.f32.mrb[0].mxu0
        %v684 = vadd.f32 %v290, %v683
        %685 = vdwg.mxu0
        %v686 = vmul.f32 %v397, 100.0
        %v687 = vmul.f32 %v399, 100.0
        %v688 = vmul.f32 %v486, 100.0
        %v689 = vmul.f32 %v488, 100.0
        %v690 = vmul.f32 %v575, 100.0
        %v691 = vmul.f32 %v577, 100.0
        %v692 = vmul.f32 %v664, 100.0
        %v693 = vmul.f32 %v666, 100.0
        %v694 = vmul.f32 %v403, 100.0
        %v695 = vmul.f32 %v405, 100.0
        %v696 = vmul.f32 %v492, 100.0
        %v697 = vmul.f32 %v494, 100.0
        %v698 = vmul.f32 %v581, 100.0
        %v699 = vmul.f32 %v583, 100.0
        %v700 = vmul.f32 %v670, 100.0
        %v701 = vmul.f32 %v672, 100.0
        %v702 = vmul.f32 %v409, 100.0
        %v703 = vmul.f32 %v411, 100.0
        %v704 = vmul.f32 %v498, 100.0
        %v705 = vmul.f32 %v500, 100.0
        %v706 = vmul.f32 %v587, 100.0
        %v707 = vmul.f32 %v589, 100.0
        %v708 = vmul.f32 %v676, 100.0
        %v709 = vmul.f32 %v678, 100.0
        %v710 = vmul.f32 %v415, 100.0
        %v711 = vmul.f32 %v417, 100.0
        %v712 = vmul.f32 %v504, 100.0
        %v713 = vmul.f32 %v506, 100.0
        %v714 = vmul.f32 %v593, 100.0
        %v715 = vmul.f32 %v595, 100.0
        %v716 = vmul.f32 %v682, 100.0
        %v717 = vmul.f32 %v684, 100.0
        %v718 = vmin.f32 %v686, 20.0
        %v719 = vmin.f32 %v687, 20.0
        %v720 = vmin.f32 %v688, 20.0
        %v721 = vmin.f32 %v689, 20.0
        %v722 = vmin.f32 %v690, 20.0
        %v723 = vmin.f32 %v691, 20.0
        %v724 = vmin.f32 %v692, 20.0
        %v725 = vmin.f32 %v693, 20.0
        %v726 = vmin.f32 %v694, 20.0
        %v727 = vmin.f32 %v695, 20.0
        %v728 = vmin.f32 %v696, 20.0
        %v729 = vmin.f32 %v697, 20.0
        %v730 = vmin.f32 %v698, 20.0
        %v731 = vmin.f32 %v699, 20.0
        %v732 = vmin.f32 %v700, 20.0
        %v733 = vmin.f32 %v701, 20.0
        %v734 = vmin.f32 %v702, 20.0
        %v735 = vmin.f32 %v703, 20.0
        %v736 = vmin.f32 %v704, 20.0
        %v737 = vmin.f32 %v705, 20.0
        %v738 = vmin.f32 %v706, 20.0
        %v739 = vmin.f32 %v707, 20.0
        %v740 = vmin.f32 %v708, 20.0
        %v741 = vmin.f32 %v709, 20.0
        %v742 = vmin.f32 %v710, 20.0
        %v743 = vmin.f32 %v711, 20.0
        %v744 = vmin.f32 %v712, 20.0
        %v745 = vmin.f32 %v713, 20.0
        %v746 = vmin.f32 %v714, 20.0
        %v747 = vmin.f32 %v715, 20.0
        %v748 = vmin.f32 %v716, 20.0
        %v749 = vmin.f32 %v717, 20.0
        %v750 = vmul.f32 %v718, 1.442695
        %v751 = vpow.pop %v750
        %v752 = vmul.f32 %v719, 1.442695
        %v753 = vpow.pop %v752
        %v754 = vmul.f32 %v720, 1.442695
        %v755 = vpow.pop %v754
        %v756 = vmul.f32 %v721, 1.442695
        %v757 = vpow.pop %v756
        %v758 = vmul.f32 %v722, 1.442695
        %v759 = vpow.pop %v758
        %v760 = vmul.f32 %v723, 1.442695
        %v761 = vpow.pop %v760
        %v762 = vmul.f32 %v724, 1.442695
        %v763 = vpow.pop %v762
        %v764 = vmul.f32 %v725, 1.442695
        %v765 = vpow.pop %v764
        %v766 = vmul.f32 %v726, 1.442695
        %v767 = vpow.pop %v766
        %v768 = vmul.f32 %v727, 1.442695
        %v769 = vpow.pop %v768
        %v770 = vmul.f32 %v728, 1.442695
        %v771 = vpow.pop %v770
        %v772 = vmul.f32 %v729, 1.442695
        %v773 = vpow.pop %v772
        %v774 = vmul.f32 %v730, 1.442695
        %v775 = vpow.pop %v774
        %v776 = vmul.f32 %v731, 1.442695
        %v777 = vpow.pop %v776
        %v778 = vmul.f32 %v732, 1.442695
        %v779 = vpow.pop %v778
        %v780 = vmul.f32 %v733, 1.442695
        %v781 = vpow.pop %v780
        %v782 = vmul.f32 %v734, 1.442695
        %v783 = vpow.pop %v782
        %v784 = vmul.f32 %v735, 1.442695
        %v785 = vpow.pop %v784
        %v786 = vmul.f32 %v736, 1.442695
        %v787 = vpow.pop %v786
        %v788 = vmul.f32 %v737, 1.442695
        %v789 = vpow.pop %v788
        %v790 = vmul.f32 %v738, 1.442695
        %v791 = vpow.pop %v790
        %v792 = vmul.f32 %v739, 1.442695
        %v793 = vpow.pop %v792
        %v794 = vmul.f32 %v740, 1.442695
        %v795 = vpow.pop %v794
        %v796 = vmul.f32 %v741, 1.442695
        %v797 = vpow.pop %v796
        %v798 = vmul.f32 %v742, 1.442695
        %v799 = vpow.pop %v798
        %v800 = vmul.f32 %v743, 1.442695
        %v801 = vpow.pop %v800
        %v802 = vmul.f32 %v744, 1.442695
        %v803 = vpow.pop %v802
        %v804 = vmul.f32 %v745, 1.442695
        %v805 = vpow.pop %v804
        %v806 = vmul.f32 %v746, 1.442695
        %v807 = vpow.pop %v806
        %v808 = vmul.f32 %v747, 1.442695
        %v809 = vpow.pop %v808
        %v810 = vmul.f32 %v748, 1.442695
        %v811 = vpow.pop %v810
        %v812 = vmul.f32 %v749, 1.442695
        %v813 = vpow.pop %v812
        %v814 = vadd.f32 %v751, 1.0
        %v815 = vadd.f32 %v753, 1.0
        %v816 = vadd.f32 %v755, 1.0
        %v817 = vadd.f32 %v757, 1.0
        %v818 = vadd.f32 %v759, 1.0
        %v819 = vadd.f32 %v761, 1.0
        %v820 = vadd.f32 %v763, 1.0
        %v821 = vadd.f32 %v765, 1.0
        %v822 = vadd.f32 %v767, 1.0
        %v823 = vadd.f32 %v769, 1.0
        %v824 = vadd.f32 %v771, 1.0
        %v825 = vadd.f32 %v773, 1.0
        %v826 = vadd.f32 %v775, 1.0
        %v827 = vadd.f32 %v777, 1.0
        %v828 = vadd.f32 %v779, 1.0
        %v829 = vadd.f32 %v781, 1.0
        %v830 = vadd.f32 %v783, 1.0
        %v831 = vadd.f32 %v785, 1.0
        %v832 = vadd.f32 %v787, 1.0
        %v833 = vadd.f32 %v789, 1.0
        %v834 = vadd.f32 %v791, 1.0
        %v835 = vadd.f32 %v793, 1.0
        %v836 = vadd.f32 %v795, 1.0
        %v837 = vadd.f32 %v797, 1.0
        %v838 = vadd.f32 %v799, 1.0
        %v839 = vadd.f32 %v801, 1.0
        %v840 = vadd.f32 %v803, 1.0
        %v841 = vadd.f32 %v805, 1.0
        %v842 = vadd.f32 %v807, 1.0
        %v843 = vadd.f32 %v809, 1.0
        %v844 = vadd.f32 %v811, 1.0
        %v845 = vadd.f32 %v813, 1.0
        %v846 = vlog2.pop %v814
        %v847 = vmul.f32 %v846, 0.6931472
        %v848 = vlog2.pop %v815
        %v849 = vmul.f32 %v848, 0.6931472
        %v850 = vlog2.pop %v816
        %v851 = vmul.f32 %v850, 0.6931472
        %v852 = vlog2.pop %v817
        %v853 = vmul.f32 %v852, 0.6931472
        %v854 = vlog2.pop %v818
        %v855 = vmul.f32 %v854, 0.6931472
        %v856 = vlog2.pop %v819
        %v857 = vmul.f32 %v856, 0.6931472
        %v858 = vlog2.pop %v820
        %v859 = vmul.f32 %v858, 0.6931472
        %v860 = vlog2.pop %v821
        %v861 = vmul.f32 %v860, 0.6931472
        %v862 = vlog2.pop %v822
        %v863 = vmul.f32 %v862, 0.6931472
        %v864 = vlog2.pop %v823
        %v865 = vmul.f32 %v864, 0.6931472
        %v866 = vlog2.pop %v824
        %v867 = vmul.f32 %v866, 0.6931472
        %v868 = vlog2.pop %v825
        %v869 = vmul.f32 %v868, 0.6931472
        %v870 = vlog2.pop %v826
        %v871 = vmul.f32 %v870, 0.6931472
        %v872 = vlog2.pop %v827
        %v873 = vmul.f32 %v872, 0.6931472
        %v874 = vlog2.pop %v828
        %v875 = vmul.f32 %v874, 0.6931472
        %v876 = vlog2.pop %v829
        %v877 = vmul.f32 %v876, 0.6931472
        %v878 = vlog2.pop %v830
        %v879 = vmul.f32 %v878, 0.6931472
        %v880 = vlog2.pop %v831
        %v881 = vmul.f32 %v880, 0.6931472
        %v882 = vlog2.pop %v832
        %v883 = vmul.f32 %v882, 0.6931472
        %v884 = vlog2.pop %v833
        %v885 = vmul.f32 %v884, 0.6931472
        %v886 = vlog2.pop %v834
        %v887 = vmul.f32 %v886, 0.6931472
        %v888 = vlog2.pop %v835
        %v889 = vmul.f32 %v888, 0.6931472
        %v890 = vlog2.pop %v836
        %v891 = vmul.f32 %v890, 0.6931472
        %v892 = vlog2.pop %v837
        %v893 = vmul.f32 %v892, 0.6931472
        %v894 = vlog2.pop %v838
        %v895 = vmul.f32 %v894, 0.6931472
        %v896 = vlog2.pop %v839
        %v897 = vmul.f32 %v896, 0.6931472
        %v898 = vlog2.pop %v840
        %v899 = vmul.f32 %v898, 0.6931472
        %v900 = vlog2.pop %v841
        %v901 = vmul.f32 %v900, 0.6931472
        %v902 = vlog2.pop %v842
        %v903 = vmul.f32 %v902, 0.6931472
        %v904 = vlog2.pop %v843
        %v905 = vmul.f32 %v904, 0.6931472
        %v906 = vlog2.pop %v844
        %v907 = vmul.f32 %v906, 0.6931472
        %v908 = vlog2.pop %v845
        %v909 = vmul.f32 %v908, 0.6931472
        %v910 = vrcp.pop 100.0
        %v911 = vmul.f32 %v847, %v910
        %v912 = vmul.f32 %v849, %v910
        %v913 = vmul.f32 %v851, %v910
        %v914 = vmul.f32 %v853, %v910
        %v915 = vmul.f32 %v855, %v910
        %v916 = vmul.f32 %v857, %v910
        %v917 = vmul.f32 %v859, %v910
        %v918 = vmul.f32 %v861, %v910
        %v919 = vmul.f32 %v863, %v910
        %v920 = vmul.f32 %v865, %v910
        %v921 = vmul.f32 %v867, %v910
        %v922 = vmul.f32 %v869, %v910
        %v923 = vmul.f32 %v871, %v910
        %v924 = vmul.f32 %v873, %v910
        %v925 = vmul.f32 %v875, %v910
        %v926 = vmul.f32 %v877, %v910
        %v927 = vmul.f32 %v879, %v910
        %v928 = vmul.f32 %v881, %v910
        %v929 = vmul.f32 %v883, %v910
        %v930 = vmul.f32 %v885, %v910
        %v931 = vmul.f32 %v887, %v910
        %v932 = vmul.f32 %v889, %v910
        %v933 = vmul.f32 %v891, %v910
        %v934 = vmul.f32 %v893, %v910
        %v935 = vmul.f32 %v895, %v910
        %v936 = vmul.f32 %v897, %v910
        %v937 = vmul.f32 %v899, %v910
        %v938 = vmul.f32 %v901, %v910
        %v939 = vmul.f32 %v903, %v910
        %v940 = vmul.f32 %v905, %v910
        %v941 = vmul.f32 %v907, %v910
        %v942 = vmul.f32 %v909, %v910
        %vm943 = vcmp.gt.f32.partialorder %v686, 20.0
        %vm944 = vcmp.gt.f32.partialorder %v687, 20.0
        %vm945 = vcmp.gt.f32.partialorder %v688, 20.0
        %vm946 = vcmp.gt.f32.partialorder %v689, 20.0
        %vm947 = vcmp.gt.f32.partialorder %v690, 20.0
        %vm948 = vcmp.gt.f32.partialorder %v691, 20.0
        %vm949 = vcmp.gt.f32.partialorder %v692, 20.0
        %vm950 = vcmp.gt.f32.partialorder %v693, 20.0
        %vm951 = vcmp.gt.f32.partialorder %v694, 20.0
        %vm952 = vcmp.gt.f32.partialorder %v695, 20.0
        %vm953 = vcmp.gt.f32.partialorder %v696, 20.0
        %vm954 = vcmp.gt.f32.partialorder %v697, 20.0
        %vm955 = vcmp.gt.f32.partialorder %v698, 20.0
        %vm956 = vcmp.gt.f32.partialorder %v699, 20.0
        %vm957 = vcmp.gt.f32.partialorder %v700, 20.0
        %vm958 = vcmp.gt.f32.partialorder %v701, 20.0
        %vm959 = vcmp.gt.f32.partialorder %v702, 20.0
        %vm960 = vcmp.gt.f32.partialorder %v703, 20.0
        %vm961 = vcmp.gt.f32.partialorder %v704, 20.0
        %vm962 = vcmp.gt.f32.partialorder %v705, 20.0
        %vm963 = vcmp.gt.f32.partialorder %v706, 20.0
        %vm964 = vcmp.gt.f32.partialorder %v707, 20.0
        %vm965 = vcmp.gt.f32.partialorder %v708, 20.0
        %vm966 = vcmp.gt.f32.partialorder %v709, 20.0
        %vm967 = vcmp.gt.f32.partialorder %v710, 20.0
        %vm968 = vcmp.gt.f32.partialorder %v711, 20.0
        %vm969 = vcmp.gt.f32.partialorder %v712, 20.0
        %vm970 = vcmp.gt.f32.partialorder %v713, 20.0
        %vm971 = vcmp.gt.f32.partialorder %v714, 20.0
        %vm972 = vcmp.gt.f32.partialorder %v715, 20.0
        %vm973 = vcmp.gt.f32.partialorder %v716, 20.0
        %vm974 = vcmp.gt.f32.partialorder %v717, 20.0
        %v975 = vsel %vm943, %v397, %v911
        %v976 = vsel %vm944, %v399, %v912
        %v977 = vsel %vm945, %v486, %v913
        %v978 = vsel %vm946, %v488, %v914
        %v979 = vsel %vm947, %v575, %v915
        %v980 = vsel %vm948, %v577, %v916
        %v981 = vsel %vm949, %v664, %v917
        %v982 = vsel %vm950, %v666, %v918
        %v983 = vsel %vm951, %v403, %v919
        %v984 = vsel %vm952, %v405, %v920
        %v985 = vsel %vm953, %v492, %v921
        %v986 = vsel %vm954, %v494, %v922
        %v987 = vsel %vm955, %v581, %v923
        %v988 = vsel %vm956, %v583, %v924
        %v989 = vsel %vm957, %v670, %v925
        %v990 = vsel %vm958, %v672, %v926
        %v991 = vsel %vm959, %v409, %v927
        %v992 = vsel %vm960, %v411, %v928
        %v993 = vsel %vm961, %v498, %v929
        %v994 = vsel %vm962, %v500, %v930
        %v995 = vsel %vm963, %v587, %v931
        %v996 = vsel %vm964, %v589, %v932
        %v997 = vsel %vm965, %v676, %v933
        %v998 = vsel %vm966, %v678, %v934
        %v999 = vsel %vm967, %v415, %v935
        %v1000 = vsel %vm968, %v417, %v936
        %v1001 = vsel %vm969, %v504, %v937
        %v1002 = vsel %vm970, %v506, %v938
        %v1003 = vsel %vm971, %v593, %v939
        %v1004 = vsel %vm972, %v595, %v940
        %v1005 = vsel %vm973, %v682, %v941
        %v1006 = vsel %vm974, %v684, %v942
        %v1007 = vld [vmem:[#allocation7] sm:$0xff]
        %v1008 = vld [vmem:[#allocation7 + $0x8] sm:$0xff]
        %v1009 = vld [vmem:[#allocation7 + $0x10] sm:$0xff]
        %v1010 = vld [vmem:[#allocation7 + $0x18] sm:$0xff]
        %1011 = vset.pattern.permute.xlu0 1
        %1012 = vperm.xlu0 %1011, %v260
        %v1013 = vpop.permute.xlu0 %1012
        %1015 = vset.pattern.permute.xlu0 1
        %1016 = vperm.xlu0 %1015, %v261
        %v1017 = vpop.permute.xlu0 %1016
        %1019 = vset.pattern.permute.xlu0 1
        %1020 = vperm.xlu0 %1019, %v262
        %v1021 = vpop.permute.xlu0 %1020
        %1023 = vset.pattern.permute.xlu0 1
        %1024 = vperm.xlu0 %1023, %v263
        %v1025 = vpop.permute.xlu0 %1024
        %vm1027 = vcmask 261120
        %v1029 = vsel %vm1027, %v1007, 0
        %v1032 = vsel %vm1027, %v1008, 0
        %v1035 = vsel %vm1027, %v1009, 0
        %v1038 = vsel %vm1027, %v1010, 0
        %1040 = vmatprep.subr.mxu0 %v976
        %1041 = vmatpush1.msra.mxu0 %v975
        %1042 = vmatprep.subr.mxu0 %v984
        %1043 = vmatpush1.msra.mxu0 %v983
        %1044 = vmatprep.subr.mxu0 %v992
        %1045 = vmatpush1.msra.mxu0 %v991
        %1046 = vmatprep.subr.mxu0 %v1000
        %1047 = vmatpush1.msra.mxu0 %v999
        %1048 = vmatprep.subr.mxu0 0.0
        %1049 = vmatpush1.msra.mxu0 0.0
        %1050 = vmatprep.subr.mxu0 0.0
        %1051 = vmatpush1.msra.mxu0 0.0
        %1052 = vmatprep.subr.mxu0 0.0
        %1053 = vmatpush1.msra.mxu0 0.0
        %1054 = vmatprep.subr.mxu0 0.0
        %1055 = vmatpush1.msra.mxu0 0.0
        %1056 = vmatprep.subr.mxu0 0.0
        %1057 = vmatpush1.msra.mxu0 0.0
        %1058 = vmatprep.subr.mxu0 0.0
        %1059 = vmatpush1.msra.mxu0 0.0
        %1060 = vmatprep.subr.mxu0 0.0
        %1061 = vmatpush1.msra.mxu0 0.0
        %1062 = vmatprep.subr.mxu0 0.0
        %1063 = vmatpush1.msra.mxu0 0.0
        %1064 = vmatprep.subr.mxu0 0.0
        %1065 = vmatpush1.msra.mxu0 0.0
        %1066 = vmatprep.subr.mxu0 0.0
        %1067 = vmatpush1.msra.mxu0 0.0
        %1068 = vmatprep.subr.mxu0 0.0
        %1069 = vmatpush1.msra.mxu0 0.0
        %1070 = vmatprep.subr.mxu0 0.0
        %1071 = vmatpush1.msra.mxu0 0.0
        %1072 = vmatprep.subr.mxu0 0.0
        %1073 = vmatpush1.msra.mxu0 0.0
        %1074 = vmatprep.subr.mxu0 0.0
        %1075 = vmatpush1.msra.mxu0 0.0
        %1076 = vmatprep.subr.mxu0 0.0
        %1077 = vmatpush1.msra.mxu0 0.0
        %1078 = vmatprep.subr.mxu0 0.0
        %1079 = vmatpush1.msra.mxu0 0.0
        %1080 = vmatprep.subr.mxu0 0.0
        %1081 = vmatpush1.msra.mxu0 0.0
        %1082 = vmatprep.subr.mxu0 0.0
        %1083 = vmatpush1.msra.mxu0 0.0
        %1084 = vmatprep.subr.mxu0 0.0
        %1085 = vmatpush1.msra.mxu0 0.0
        %1086 = vmatprep.subr.mxu0 0.0
        %1087 = vmatpush1.msra.mxu0 0.0
        %1088 = vmatprep.subr.mxu0 0.0
        %1089 = vmatpush1.msra.mxu0 0.0
        %1090 = vmatprep.subr.mxu0 0.0
        %1091 = vmatpush1.msra.mxu0 0.0
        %1092 = vmatprep.subr.mxu0 0.0
        %1093 = vmatpush1.msra.mxu0 0.0
        %1094 = vmatprep.subr.mxu0 0.0
        %1095 = vmatpush1.msra.mxu0 0.0
        %1096 = vmatprep.subr.mxu0 0.0
        %1097 = vmatpush1.msra.mxu0 0.0
        %1098 = vmatprep.subr.mxu0 0.0
        %1099 = vmatpush1.msra.mxu0 0.0
        %1100 = vmatprep.subr.mxu0 0.0
        %1101 = vmatpush1.msra.mxu0 0.0
        %1102 = vmatprep.subr.mxu0 0.0
        %1103 = vmatpush1.msra.mxu0 0.0
        %1104 = vmatprep.mubr.f32.mxu0 0.0
        %1105 = vmatmul.mubr.f32.gmra.mrb[0].mxu0 %v1029
        %v1106 = vpop.f32.mrb[0].mxu0
        %v1107 = vadd.f32 %v1013, %v1106
        %v1108 = vpop.f32.mrb[0].mxu0
        %v1109 = vadd.f32 %v1013, %v1108
        %1110 = vmatprep.mubr.f32.mxu0 0.0
        %1111 = vmatmul.mubr.f32.gmra.mrb[0].mxu0 %v1032
        %v1112 = vpop.f32.mrb[0].mxu0
        %v1113 = vadd.f32 %v1017, %v1112
        %v1114 = vpop.f32.mrb[0].mxu0
        %v1115 = vadd.f32 %v1017, %v1114
        %1116 = vmatprep.mubr.f32.mxu0 0.0
        %1117 = vmatmul.mubr.f32.gmra.mrb[0].mxu0 %v1035
        %v1118 = vpop.f32.mrb[0].mxu0
        %v1119 = vadd.f32 %v1021, %v1118
        %v1120 = vpop.f32.mrb[0].mxu0
        %v1121 = vadd.f32 %v1021, %v1120
        %1122 = vmatprep.mubr.f32.mxu0 0.0
        %1123 = vmatmul.mubr.f32.gmra.mrb[0].mxu0 %v1038
        %v1124 = vpop.f32.mrb[0].mxu0
        %v1125 = vadd.f32 %v1025, %v1124
        %v1126 = vpop.f32.mrb[0].mxu0
        %v1127 = vadd.f32 %v1025, %v1126
        %1128 = vdwg.mxu0
        %1129 = vmatprep.subr.mxu0 %v978
        %1130 = vmatpush1.msra.mxu0 %v977
        %1131 = vmatprep.subr.mxu0 %v986
        %1132 = vmatpush1.msra.mxu0 %v985
        %1133 = vmatprep.subr.mxu0 %v994
        %1134 = vmatpush1.msra.mxu0 %v993
        %1135 = vmatprep.subr.mxu0 %v1002
        %1136 = vmatpush1.msra.mxu0 %v1001
        %1137 = vmatprep.subr.mxu0 0.0
        %1138 = vmatpush1.msra.mxu0 0.0
        %1139 = vmatprep.subr.mxu0 0.0
        %1140 = vmatpush1.msra.mxu0 0.0
        %1141 = vmatprep.subr.mxu0 0.0
        %1142 = vmatpush1.msra.mxu0 0.0
        %1143 = vmatprep.subr.mxu0 0.0
        %1144 = vmatpush1.msra.mxu0 0.0
        %1145 = vmatprep.subr.mxu0 0.0
        %1146 = vmatpush1.msra.mxu0 0.0
        %1147 = vmatprep.subr.mxu0 0.0
        %1148 = vmatpush1.msra.mxu0 0.0
        %1149 = vmatprep.subr.mxu0 0.0
        %1150 = vmatpush1.msra.mxu0 0.0
        %1151 = vmatprep.subr.mxu0 0.0
        %1152 = vmatpush1.msra.mxu0 0.0
        %1153 = vmatprep.subr.mxu0 0.0
        %1154 = vmatpush1.msra.mxu0 0.0
        %1155 = vmatprep.subr.mxu0 0.0
        %1156 = vmatpush1.msra.mxu0 0.0
        %1157 = vmatprep.subr.mxu0 0.0
        %1158 = vmatpush1.msra.mxu0 0.0
        %1159 = vmatprep.subr.mxu0 0.0
        %1160 = vmatpush1.msra.mxu0 0.0
        %1161 = vmatprep.subr.mxu0 0.0
        %1162 = vmatpush1.msra.mxu0 0.0
        %1163 = vmatprep.subr.mxu0 0.0
        %1164 = vmatpush1.msra.mxu0 0.0
        %1165 = vmatprep.subr.mxu0 0.0
        %1166 = vmatpush1.msra.mxu0 0.0
        %1167 = vmatprep.subr.mxu0 0.0
        %1168 = vmatpush1.msra.mxu0 0.0
        %1169 = vmatprep.subr.mxu0 0.0
        %1170 = vmatpush1.msra.mxu0 0.0
        %1171 = vmatprep.subr.mxu0 0.0
        %1172 = vmatpush1.msra.mxu0 0.0
        %1173 = vmatprep.subr.mxu0 0.0
        %1174 = vmatpush1.msra.mxu0 0.0
        %1175 = vmatprep.subr.mxu0 0.0
        %1176 = vmatpush1.msra.mxu0 0.0
        %1177 = vmatprep.subr.mxu0 0.0
        %1178 = vmatpush1.msra.mxu0 0.0
        %1179 = vmatprep.subr.mxu0 0.0
        %1180 = vmatpush1.msra.mxu0 0.0
        %1181 = vmatprep.subr.mxu0 0.0
        %1182 = vmatpush1.msra.mxu0 0.0
        %1183 = vmatprep.subr.mxu0 0.0
        %1184 = vmatpush1.msra.mxu0 0.0
        %1185 = vmatprep.subr.mxu0 0.0
        %1186 = vmatpush1.msra.mxu0 0.0
        %1187 = vmatprep.subr.mxu0 0.0
        %1188 = vmatpush1.msra.mxu0 0.0
        %1189 = vmatprep.subr.mxu0 0.0
        %1190 = vmatpush1.msra.mxu0 0.0
        %1191 = vmatprep.subr.mxu0 0.0
        %1192 = vmatpush1.msra.mxu0 0.0
        %1193 = vmatprep.mubr.f32.mxu0 0.0
        %1194 = vmatmul.mubr.f32.gmra.mrb[0].mxu0 %v1029
        %v1195 = vpop.f32.mrb[0].mxu0
        %v1196 = vadd.f32 %v1013, %v1195
        %v1197 = vpop.f32.mrb[0].mxu0
        %v1198 = vadd.f32 %v1013, %v1197
        %1199 = vmatprep.mubr.f32.mxu0 0.0
        %1200 = vmatmul.mubr.f32.gmra.mrb[0].mxu0 %v1032
        %v1201 = vpop.f32.mrb[0].mxu0
        %v1202 = vadd.f32 %v1017, %v1201
        %v1203 = vpop.f32.mrb[0].mxu0
        %v1204 = vadd.f32 %v1017, %v1203
        %1205 = vmatprep.mubr.f32.mxu0 0.0
        %1206 = vmatmul.mubr.f32.gmra.mrb[0].mxu0 %v1035
        %v1207 = vpop.f32.mrb[0].mxu0
        %v1208 = vadd.f32 %v1021, %v1207
        %v1209 = vpop.f32.mrb[0].mxu0
        %v1210 = vadd.f32 %v1021, %v1209
        %1211 = vmatprep.mubr.f32.mxu0 0.0
        %1212 = vmatmul.mubr.f32.gmra.mrb[0].mxu0 %v1038
        %v1213 = vpop.f32.mrb[0].mxu0
        %v1214 = vadd.f32 %v1025, %v1213
        %v1215 = vpop.f32.mrb[0].mxu0
        %v1216 = vadd.f32 %v1025, %v1215
        %1217 = vdwg.mxu0
        %1218 = vmatprep.subr.mxu0 %v980
        %1219 = vmatpush1.msra.mxu0 %v979
        %1220 = vmatprep.subr.mxu0 %v988
        %1221 = vmatpush1.msra.mxu0 %v987
        %1222 = vmatprep.subr.mxu0 %v996
        %1223 = vmatpush1.msra.mxu0 %v995
        %1224 = vmatprep.subr.mxu0 %v1004
        %1225 = vmatpush1.msra.mxu0 %v1003
        %1226 = vmatprep.subr.mxu0 0.0
        %1227 = vmatpush1.msra.mxu0 0.0
        %1228 = vmatprep.subr.mxu0 0.0
        %1229 = vmatpush1.msra.mxu0 0.0
        %1230 = vmatprep.subr.mxu0 0.0
        %1231 = vmatpush1.msra.mxu0 0.0
        %1232 = vmatprep.subr.mxu0 0.0
        %1233 = vmatpush1.msra.mxu0 0.0
        %1234 = vmatprep.subr.mxu0 0.0
        %1235 = vmatpush1.msra.mxu0 0.0
        %1236 = vmatprep.subr.mxu0 0.0
        %1237 = vmatpush1.msra.mxu0 0.0
        %1238 = vmatprep.subr.mxu0 0.0
        %1239 = vmatpush1.msra.mxu0 0.0
        %1240 = vmatprep.subr.mxu0 0.0
        %1241 = vmatpush1.msra.mxu0 0.0
        %1242 = vmatprep.subr.mxu0 0.0
        %1243 = vmatpush1.msra.mxu0 0.0
        %1244 = vmatprep.subr.mxu0 0.0
        %1245 = vmatpush1.msra.mxu0 0.0
        %1246 = vmatprep.subr.mxu0 0.0
        %1247 = vmatpush1.msra.mxu0 0.0
        %1248 = vmatprep.subr.mxu0 0.0
        %1249 = vmatpush1.msra.mxu0 0.0
        %1250 = vmatprep.subr.mxu0 0.0
        %1251 = vmatpush1.msra.mxu0 0.0
        %1252 = vmatprep.subr.mxu0 0.0
        %1253 = vmatpush1.msra.mxu0 0.0
        %1254 = vmatprep.subr.mxu0 0.0
        %1255 = vmatpush1.msra.mxu0 0.0
        %1256 = vmatprep.subr.mxu0 0.0
        %1257 = vmatpush1.msra.mxu0 0.0
        %1258 = vmatprep.subr.mxu0 0.0
        %1259 = vmatpush1.msra.mxu0 0.0
        %1260 = vmatprep.subr.mxu0 0.0
        %1261 = vmatpush1.msra.mxu0 0.0
        %1262 = vmatprep.subr.mxu0 0.0
        %1263 = vmatpush1.msra.mxu0 0.0
        %1264 = vmatprep.subr.mxu0 0.0
        %1265 = vmatpush1.msra.mxu0 0.0
        %1266 = vmatprep.subr.mxu0 0.0
        %1267 = vmatpush1.msra.mxu0 0.0
        %1268 = vmatprep.subr.mxu0 0.0
        %1269 = vmatpush1.msra.mxu0 0.0
        %1270 = vmatprep.subr.mxu0 0.0
        %1271 = vmatpush1.msra.mxu0 0.0
        %1272 = vmatprep.subr.mxu0 0.0
        %1273 = vmatpush1.msra.mxu0 0.0
        %1274 = vmatprep.subr.mxu0 0.0
        %1275 = vmatpush1.msra.mxu0 0.0
        %1276 = vmatprep.subr.mxu0 0.0
        %1277 = vmatpush1.msra.mxu0 0.0
        %1278 = vmatprep.subr.mxu0 0.0
        %1279 = vmatpush1.msra.mxu0 0.0
        %1280 = vmatprep.subr.mxu0 0.0
        %1281 = vmatpush1.msra.mxu0 0.0
        %1282 = vmatprep.mubr.f32.mxu0 0.0
        %1283 = vmatmul.mubr.f32.gmra.mrb[0].mxu0 %v1029
        %v1284 = vpop.f32.mrb[0].mxu0
        %v1285 = vadd.f32 %v1013, %v1284
        %v1286 = vpop.f32.mrb[0].mxu0
        %v1287 = vadd.f32 %v1013, %v1286
        %1288 = vmatprep.mubr.f32.mxu0 0.0
        %1289 = vmatmul.mubr.f32.gmra.mrb[0].mxu0 %v1032
        %v1290 = vpop.f32.mrb[0].mxu0
        %v1291 = vadd.f32 %v1017, %v1290
        %v1292 = vpop.f32.mrb[0].mxu0
        %v1293 = vadd.f32 %v1017, %v1292
        %1294 = vmatprep.mubr.f32.mxu0 0.0
        %1295 = vmatmul.mubr.f32.gmra.mrb[0].mxu0 %v1035
        %v1296 = vpop.f32.mrb[0].mxu0
        %v1297 = vadd.f32 %v1021, %v1296
        %v1298 = vpop.f32.mrb[0].mxu0
        %v1299 = vadd.f32 %v1021, %v1298
        %1300 = vmatprep.mubr.f32.mxu0 0.0
        %1301 = vmatmul.mubr.f32.gmra.mrb[0].mxu0 %v1038
        %v1302 = vpop.f32.mrb[0].mxu0
        %v1303 = vadd.f32 %v1025, %v1302
        %v1304 = vpop.f32.mrb[0].mxu0
        %v1305 = vadd.f32 %v1025, %v1304
        %1306 = vdwg.mxu0
        %1307 = vmatprep.subr.mxu0 %v982
        %1308 = vmatpush1.msra.mxu0 %v981
        %1309 = vmatprep.subr.mxu0 %v990
        %1310 = vmatpush1.msra.mxu0 %v989
        %1311 = vmatprep.subr.mxu0 %v998
        %1312 = vmatpush1.msra.mxu0 %v997
        %1313 = vmatprep.subr.mxu0 %v1006
        %1314 = vmatpush1.msra.mxu0 %v1005
        %1315 = vmatprep.subr.mxu0 0.0
        %1316 = vmatpush1.msra.mxu0 0.0
        %1317 = vmatprep.subr.mxu0 0.0
        %1318 = vmatpush1.msra.mxu0 0.0
        %1319 = vmatprep.subr.mxu0 0.0
        %1320 = vmatpush1.msra.mxu0 0.0
        %1321 = vmatprep.subr.mxu0 0.0
        %1322 = vmatpush1.msra.mxu0 0.0
        %1323 = vmatprep.subr.mxu0 0.0
        %1324 = vmatpush1.msra.mxu0 0.0
        %1325 = vmatprep.subr.mxu0 0.0
        %1326 = vmatpush1.msra.mxu0 0.0
        %1327 = vmatprep.subr.mxu0 0.0
        %1328 = vmatpush1.msra.mxu0 0.0
        %1329 = vmatprep.subr.mxu0 0.0
        %1330 = vmatpush1.msra.mxu0 0.0
        %1331 = vmatprep.subr.mxu0 0.0
        %1332 = vmatpush1.msra.mxu0 0.0
        %1333 = vmatprep.subr.mxu0 0.0
        %1334 = vmatpush1.msra.mxu0 0.0
        %1335 = vmatprep.subr.mxu0 0.0
        %1336 = vmatpush1.msra.mxu0 0.0
        %1337 = vmatprep.subr.mxu0 0.0
        %1338 = vmatpush1.msra.mxu0 0.0
        %1339 = vmatprep.subr.mxu0 0.0
        %1340 = vmatpush1.msra.mxu0 0.0
        %1341 = vmatprep.subr.mxu0 0.0
        %1342 = vmatpush1.msra.mxu0 0.0
        %1343 = vmatprep.subr.mxu0 0.0
        %1344 = vmatpush1.msra.mxu0 0.0
        %1345 = vmatprep.subr.mxu0 0.0
        %1346 = vmatpush1.msra.mxu0 0.0
        %1347 = vmatprep.subr.mxu0 0.0
        %1348 = vmatpush1.msra.mxu0 0.0
        %1349 = vmatprep.subr.mxu0 0.0
        %1350 = vmatpush1.msra.mxu0 0.0
        %1351 = vmatprep.subr.mxu0 0.0
        %1352 = vmatpush1.msra.mxu0 0.0
        %1353 = vmatprep.subr.mxu0 0.0
        %1354 = vmatpush1.msra.mxu0 0.0
        %1355 = vmatprep.subr.mxu0 0.0
        %1356 = vmatpush1.msra.mxu0 0.0
        %1357 = vmatprep.subr.mxu0 0.0
        %1358 = vmatpush1.msra.mxu0 0.0
        %1359 = vmatprep.subr.mxu0 0.0
        %1360 = vmatpush1.msra.mxu0 0.0
        %1361 = vmatprep.subr.mxu0 0.0
        %1362 = vmatpush1.msra.mxu0 0.0
        %1363 = vmatprep.subr.mxu0 0.0
        %1364 = vmatpush1.msra.mxu0 0.0
        %1365 = vmatprep.subr.mxu0 0.0
        %1366 = vmatpush1.msra.mxu0 0.0
        %1367 = vmatprep.subr.mxu0 0.0
        %1368 = vmatpush1.msra.mxu0 0.0
        %1369 = vmatprep.subr.mxu0 0.0
        %1370 = vmatpush1.msra.mxu0 0.0
        %1371 = vmatprep.mubr.f32.mxu0 0.0
        %1372 = vmatmul.mubr.f32.gmra.mrb[0].mxu0 %v1029
        %v1373 = vpop.f32.mrb[0].mxu0
        %v1374 = vadd.f32 %v1013, %v1373
        %v1375 = vpop.f32.mrb[0].mxu0
        %v1376 = vadd.f32 %v1013, %v1375
        %1377 = vmatprep.mubr.f32.mxu0 0.0
        %1378 = vmatmul.mubr.f32.gmra.mrb[0].mxu0 %v1032
        %v1379 = vpop.f32.mrb[0].mxu0
        %v1380 = vadd.f32 %v1017, %v1379
        %v1381 = vpop.f32.mrb[0].mxu0
        %v1382 = vadd.f32 %v1017, %v1381
        %1383 = vmatprep.mubr.f32.mxu0 0.0
        %1384 = vmatmul.mubr.f32.gmra.mrb[0].mxu0 %v1035
        %v1385 = vpop.f32.mrb[0].mxu0
        %v1386 = vadd.f32 %v1021, %v1385
        %v1387 = vpop.f32.mrb[0].mxu0
        %v1388 = vadd.f32 %v1021, %v1387
        %1389 = vmatprep.mubr.f32.mxu0 0.0
        %1390 = vmatmul.mubr.f32.gmra.mrb[0].mxu0 %v1038
        %v1391 = vpop.f32.mrb[0].mxu0
        %v1392 = vadd.f32 %v1025, %v1391
        %v1393 = vpop.f32.mrb[0].mxu0
        %v1394 = vadd.f32 %v1025, %v1393
        %1395 = vdwg.mxu0
        %v1396 = vmul.f32 %v1107, 100.0
        %v1397 = vmul.f32 %v1109, 100.0
        %v1398 = vmul.f32 %v1196, 100.0
        %v1399 = vmul.f32 %v1198, 100.0
        %v1400 = vmul.f32 %v1285, 100.0
        %v1401 = vmul.f32 %v1287, 100.0
        %v1402 = vmul.f32 %v1374, 100.0
        %v1403 = vmul.f32 %v1376, 100.0
        %v1404 = vmul.f32 %v1113, 100.0
        %v1405 = vmul.f32 %v1115, 100.0
        %v1406 = vmul.f32 %v1202, 100.0
        %v1407 = vmul.f32 %v1204, 100.0
        %v1408 = vmul.f32 %v1291, 100.0
        %v1409 = vmul.f32 %v1293, 100.0
        %v1410 = vmul.f32 %v1380, 100.0
        %v1411 = vmul.f32 %v1382, 100.0
        %v1412 = vmul.f32 %v1119, 100.0
        %v1413 = vmul.f32 %v1121, 100.0
        %v1414 = vmul.f32 %v1208, 100.0
        %v1415 = vmul.f32 %v1210, 100.0
        %v1416 = vmul.f32 %v1297, 100.0
        %v1417 = vmul.f32 %v1299, 100.0
        %v1418 = vmul.f32 %v1386, 100.0
        %v1419 = vmul.f32 %v1388, 100.0
        %v1420 = vmul.f32 %v1125, 100.0
        %v1421 = vmul.f32 %v1127, 100.0
        %v1422 = vmul.f32 %v1214, 100.0
        %v1423 = vmul.f32 %v1216, 100.0
        %v1424 = vmul.f32 %v1303, 100.0
        %v1425 = vmul.f32 %v1305, 100.0
        %v1426 = vmul.f32 %v1392, 100.0
        %v1427 = vmul.f32 %v1394, 100.0
        %v1428 = vmin.f32 %v1396, 20.0
        %v1429 = vmin.f32 %v1397, 20.0
        %v1430 = vmin.f32 %v1398, 20.0
        %v1431 = vmin.f32 %v1399, 20.0
        %v1432 = vmin.f32 %v1400, 20.0
        %v1433 = vmin.f32 %v1401, 20.0
        %v1434 = vmin.f32 %v1402, 20.0
        %v1435 = vmin.f32 %v1403, 20.0
        %v1436 = vmin.f32 %v1404, 20.0
        %v1437 = vmin.f32 %v1405, 20.0
        %v1438 = vmin.f32 %v1406, 20.0
        %v1439 = vmin.f32 %v1407, 20.0
        %v1440 = vmin.f32 %v1408, 20.0
        %v1441 = vmin.f32 %v1409, 20.0
        %v1442 = vmin.f32 %v1410, 20.0
        %v1443 = vmin.f32 %v1411, 20.0
        %v1444 = vmin.f32 %v1412, 20.0
        %v1445 = vmin.f32 %v1413, 20.0
        %v1446 = vmin.f32 %v1414, 20.0
        %v1447 = vmin.f32 %v1415, 20.0
        %v1448 = vmin.f32 %v1416, 20.0
        %v1449 = vmin.f32 %v1417, 20.0
        %v1450 = vmin.f32 %v1418, 20.0
        %v1451 = vmin.f32 %v1419, 20.0
        %v1452 = vmin.f32 %v1420, 20.0
        %v1453 = vmin.f32 %v1421, 20.0
        %v1454 = vmin.f32 %v1422, 20.0
        %v1455 = vmin.f32 %v1423, 20.0
        %v1456 = vmin.f32 %v1424, 20.0
        %v1457 = vmin.f32 %v1425, 20.0
        %v1458 = vmin.f32 %v1426, 20.0
        %v1459 = vmin.f32 %v1427, 20.0
        %v1460 = vmul.f32 %v1428, 1.442695
        %v1461 = vpow.pop %v1460
        %v1462 = vmul.f32 %v1429, 1.442695
        %v1463 = vpow.pop %v1462
        %v1464 = vmul.f32 %v1430, 1.442695
        %v1465 = vpow.pop %v1464
        %v1466 = vmul.f32 %v1431, 1.442695
        %v1467 = vpow.pop %v1466
        %v1468 = vmul.f32 %v1432, 1.442695
        %v1469 = vpow.pop %v1468
        %v1470 = vmul.f32 %v1433, 1.442695
        %v1471 = vpow.pop %v1470
        %v1472 = vmul.f32 %v1434, 1.442695
        %v1473 = vpow.pop %v1472
        %v1474 = vmul.f32 %v1435, 1.442695
        %v1475 = vpow.pop %v1474
        %v1476 = vmul.f32 %v1436, 1.442695
        %v1477 = vpow.pop %v1476
        %v1478 = vmul.f32 %v1437, 1.442695
        %v1479 = vpow.pop %v1478
        %v1480 = vmul.f32 %v1438, 1.442695
        %v1481 = vpow.pop %v1480
        %v1482 = vmul.f32 %v1439, 1.442695
        %v1483 = vpow.pop %v1482
        %v1484 = vmul.f32 %v1440, 1.442695
        %v1485 = vpow.pop %v1484
        %v1486 = vmul.f32 %v1441, 1.442695
        %v1487 = vpow.pop %v1486
        %v1488 = vmul.f32 %v1442, 1.442695
        %v1489 = vpow.pop %v1488
        %v1490 = vmul.f32 %v1443, 1.442695
        %v1491 = vpow.pop %v1490
        %v1492 = vmul.f32 %v1444, 1.442695
        %v1493 = vpow.pop %v1492
        %v1494 = vmul.f32 %v1445, 1.442695
        %v1495 = vpow.pop %v1494
        %v1496 = vmul.f32 %v1446, 1.442695
        %v1497 = vpow.pop %v1496
        %v1498 = vmul.f32 %v1447, 1.442695
        %v1499 = vpow.pop %v1498
        %v1500 = vmul.f32 %v1448, 1.442695
        %v1501 = vpow.pop %v1500
        %v1502 = vmul.f32 %v1449, 1.442695
        %v1503 = vpow.pop %v1502
        %v1504 = vmul.f32 %v1450, 1.442695
        %v1505 = vpow.pop %v1504
        %v1506 = vmul.f32 %v1451, 1.442695
        %v1507 = vpow.pop %v1506
        %v1508 = vmul.f32 %v1452, 1.442695
        %v1509 = vpow.pop %v1508
        %v1510 = vmul.f32 %v1453, 1.442695
        %v1511 = vpow.pop %v1510
        %v1512 = vmul.f32 %v1454, 1.442695
        %v1513 = vpow.pop %v1512
        %v1514 = vmul.f32 %v1455, 1.442695
        %v1515 = vpow.pop %v1514
        %v1516 = vmul.f32 %v1456, 1.442695
        %v1517 = vpow.pop %v1516
        %v1518 = vmul.f32 %v1457, 1.442695
        %v1519 = vpow.pop %v1518
        %v1520 = vmul.f32 %v1458, 1.442695
        %v1521 = vpow.pop %v1520
        %v1522 = vmul.f32 %v1459, 1.442695
        %v1523 = vpow.pop %v1522
        %v1524 = vadd.f32 %v1461, 1.0
        %v1525 = vadd.f32 %v1463, 1.0
        %v1526 = vadd.f32 %v1465, 1.0
        %v1527 = vadd.f32 %v1467, 1.0
        %v1528 = vadd.f32 %v1469, 1.0
        %v1529 = vadd.f32 %v1471, 1.0
        %v1530 = vadd.f32 %v1473, 1.0
        %v1531 = vadd.f32 %v1475, 1.0
        %v1532 = vadd.f32 %v1477, 1.0
        %v1533 = vadd.f32 %v1479, 1.0
        %v1534 = vadd.f32 %v1481, 1.0
        %v1535 = vadd.f32 %v1483, 1.0
        %v1536 = vadd.f32 %v1485, 1.0
        %v1537 = vadd.f32 %v1487, 1.0
        %v1538 = vadd.f32 %v1489, 1.0
        %v1539 = vadd.f32 %v1491, 1.0
        %v1540 = vadd.f32 %v1493, 1.0
        %v1541 = vadd.f32 %v1495, 1.0
        %v1542 = vadd.f32 %v1497, 1.0
        %v1543 = vadd.f32 %v1499, 1.0
        %v1544 = vadd.f32 %v1501, 1.0
        %v1545 = vadd.f32 %v1503, 1.0
        %v1546 = vadd.f32 %v1505, 1.0
        %v1547 = vadd.f32 %v1507, 1.0
        %v1548 = vadd.f32 %v1509, 1.0
        %v1549 = vadd.f32 %v1511, 1.0
        %v1550 = vadd.f32 %v1513, 1.0
        %v1551 = vadd.f32 %v1515, 1.0
        %v1552 = vadd.f32 %v1517, 1.0
        %v1553 = vadd.f32 %v1519, 1.0
        %v1554 = vadd.f32 %v1521, 1.0
        %v1555 = vadd.f32 %v1523, 1.0
        %v1556 = vlog2.pop %v1524
        %v1557 = vmul.f32 %v1556, 0.6931472
        %v1558 = vlog2.pop %v1525
        %v1559 = vmul.f32 %v1558, 0.6931472
        %v1560 = vlog2.pop %v1526
        %v1561 = vmul.f32 %v1560, 0.6931472
        %v1562 = vlog2.pop %v1527
        %v1563 = vmul.f32 %v1562, 0.6931472
        %v1564 = vlog2.pop %v1528
        %v1565 = vmul.f32 %v1564, 0.6931472
        %v1566 = vlog2.pop %v1529
        %v1567 = vmul.f32 %v1566, 0.6931472
        %v1568 = vlog2.pop %v1530
        %v1569 = vmul.f32 %v1568, 0.6931472
        %v1570 = vlog2.pop %v1531
        %v1571 = vmul.f32 %v1570, 0.6931472
        %v1572 = vlog2.pop %v1532
        %v1573 = vmul.f32 %v1572, 0.6931472
        %v1574 = vlog2.pop %v1533
        %v1575 = vmul.f32 %v1574, 0.6931472
        %v1576 = vlog2.pop %v1534
        %v1577 = vmul.f32 %v1576, 0.6931472
        %v1578 = vlog2.pop %v1535
        %v1579 = vmul.f32 %v1578, 0.6931472
        %v1580 = vlog2.pop %v1536
        %v1581 = vmul.f32 %v1580, 0.6931472
        %v1582 = vlog2.pop %v1537
        %v1583 = vmul.f32 %v1582, 0.6931472
        %v1584 = vlog2.pop %v1538
        %v1585 = vmul.f32 %v1584, 0.6931472
        %v1586 = vlog2.pop %v1539
        %v1587 = vmul.f32 %v1586, 0.6931472
        %v1588 = vlog2.pop %v1540
        %v1589 = vmul.f32 %v1588, 0.6931472
        %v1590 = vlog2.pop %v1541
        %v1591 = vmul.f32 %v1590, 0.6931472
        %v1592 = vlog2.pop %v1542
        %v1593 = vmul.f32 %v1592, 0.6931472
        %v1594 = vlog2.pop %v1543
        %v1595 = vmul.f32 %v1594, 0.6931472
        %v1596 = vlog2.pop %v1544
        %v1597 = vmul.f32 %v1596, 0.6931472
        %v1598 = vlog2.pop %v1545
        %v1599 = vmul.f32 %v1598, 0.6931472
        %v1600 = vlog2.pop %v1546
        %v1601 = vmul.f32 %v1600, 0.6931472
        %v1602 = vlog2.pop %v1547
        %v1603 = vmul.f32 %v1602, 0.6931472
        %v1604 = vlog2.pop %v1548
        %v1605 = vmul.f32 %v1604, 0.6931472
        %v1606 = vlog2.pop %v1549
        %v1607 = vmul.f32 %v1606, 0.6931472
        %v1608 = vlog2.pop %v1550
        %v1609 = vmul.f32 %v1608, 0.6931472
        %v1610 = vlog2.pop %v1551
        %v1611 = vmul.f32 %v1610, 0.6931472
        %v1612 = vlog2.pop %v1552
        %v1613 = vmul.f32 %v1612, 0.6931472
        %v1614 = vlog2.pop %v1553
        %v1615 = vmul.f32 %v1614, 0.6931472
        %v1616 = vlog2.pop %v1554
        %v1617 = vmul.f32 %v1616, 0.6931472
        %v1618 = vlog2.pop %v1555
        %v1619 = vmul.f32 %v1618, 0.6931472
        %v1620 = vmul.f32 %v1557, %v910
        %v1621 = vmul.f32 %v1559, %v910
        %v1622 = vmul.f32 %v1561, %v910
        %v1623 = vmul.f32 %v1563, %v910
        %v1624 = vmul.f32 %v1565, %v910
        %v1625 = vmul.f32 %v1567, %v910
        %v1626 = vmul.f32 %v1569, %v910
        %v1627 = vmul.f32 %v1571, %v910
        %v1628 = vmul.f32 %v1573, %v910
        %v1629 = vmul.f32 %v1575, %v910
        %v1630 = vmul.f32 %v1577, %v910
        %v1631 = vmul.f32 %v1579, %v910
        %v1632 = vmul.f32 %v1581, %v910
        %v1633 = vmul.f32 %v1583, %v910
        %v1634 = vmul.f32 %v1585, %v910
        %v1635 = vmul.f32 %v1587, %v910
        %v1636 = vmul.f32 %v1589, %v910
        %v1637 = vmul.f32 %v1591, %v910
        %v1638 = vmul.f32 %v1593, %v910
        %v1639 = vmul.f32 %v1595, %v910
        %v1640 = vmul.f32 %v1597, %v910
        %v1641 = vmul.f32 %v1599, %v910
        %v1642 = vmul.f32 %v1601, %v910
        %v1643 = vmul.f32 %v1603, %v910
        %v1644 = vmul.f32 %v1605, %v910
        %v1645 = vmul.f32 %v1607, %v910
        %v1646 = vmul.f32 %v1609, %v910
        %v1647 = vmul.f32 %v1611, %v910
        %v1648 = vmul.f32 %v1613, %v910
        %v1649 = vmul.f32 %v1615, %v910
        %v1650 = vmul.f32 %v1617, %v910
        %v1651 = vmul.f32 %v1619, %v910
        %vm1652 = vcmp.gt.f32.partialorder %v1396, 20.0
        %vm1653 = vcmp.gt.f32.partialorder %v1397, 20.0
        %vm1654 = vcmp.gt.f32.partialorder %v1398, 20.0
        %vm1655 = vcmp.gt.f32.partialorder %v1399, 20.0
        %vm1656 = vcmp.gt.f32.partialorder %v1400, 20.0
        %vm1657 = vcmp.gt.f32.partialorder %v1401, 20.0
        %vm1658 = vcmp.gt.f32.partialorder %v1402, 20.0
        %vm1659 = vcmp.gt.f32.partialorder %v1403, 20.0
        %vm1660 = vcmp.gt.f32.partialorder %v1404, 20.0
        %vm1661 = vcmp.gt.f32.partialorder %v1405, 20.0
        %vm1662 = vcmp.gt.f32.partialorder %v1406, 20.0
        %vm1663 = vcmp.gt.f32.partialorder %v1407, 20.0
        %vm1664 = vcmp.gt.f32.partialorder %v1408, 20.0
        %vm1665 = vcmp.gt.f32.partialorder %v1409, 20.0
        %vm1666 = vcmp.gt.f32.partialorder %v1410, 20.0
        %vm1667 = vcmp.gt.f32.partialorder %v1411, 20.0
        %vm1668 = vcmp.gt.f32.partialorder %v1412, 20.0
        %vm1669 = vcmp.gt.f32.partialorder %v1413, 20.0
        %vm1670 = vcmp.gt.f32.partialorder %v1414, 20.0
        %vm1671 = vcmp.gt.f32.partialorder %v1415, 20.0
        %vm1672 = vcmp.gt.f32.partialorder %v1416, 20.0
        %vm1673 = vcmp.gt.f32.partialorder %v1417, 20.0
        %vm1674 = vcmp.gt.f32.partialorder %v1418, 20.0
        %vm1675 = vcmp.gt.f32.partialorder %v1419, 20.0
        %vm1676 = vcmp.gt.f32.partialorder %v1420, 20.0
        %vm1677 = vcmp.gt.f32.partialorder %v1421, 20.0
        %vm1678 = vcmp.gt.f32.partialorder %v1422, 20.0
        %vm1679 = vcmp.gt.f32.partialorder %v1423, 20.0
        %vm1680 = vcmp.gt.f32.partialorder %v1424, 20.0
        %vm1681 = vcmp.gt.f32.partialorder %v1425, 20.0
        %vm1682 = vcmp.gt.f32.partialorder %v1426, 20.0
        %vm1683 = vcmp.gt.f32.partialorder %v1427, 20.0
        %v1684 = vsel %vm1652, %v1107, %v1620
        %v1685 = vsel %vm1653, %v1109, %v1621
        %v1686 = vsel %vm1654, %v1196, %v1622
        %v1687 = vsel %vm1655, %v1198, %v1623
        %v1688 = vsel %vm1656, %v1285, %v1624
        %v1689 = vsel %vm1657, %v1287, %v1625
        %v1690 = vsel %vm1658, %v1374, %v1626
        %v1691 = vsel %vm1659, %v1376, %v1627
        %v1692 = vsel %vm1660, %v1113, %v1628
        %v1693 = vsel %vm1661, %v1115, %v1629
        %v1694 = vsel %vm1662, %v1202, %v1630
        %v1695 = vsel %vm1663, %v1204, %v1631
        %v1696 = vsel %vm1664, %v1291, %v1632
        %v1697 = vsel %vm1665, %v1293, %v1633
        %v1698 = vsel %vm1666, %v1380, %v1634
        %v1699 = vsel %vm1667, %v1382, %v1635
        %v1700 = vsel %vm1668, %v1119, %v1636
        %v1701 = vsel %vm1669, %v1121, %v1637
        %v1702 = vsel %vm1670, %v1208, %v1638
        %v1703 = vsel %vm1671, %v1210, %v1639
        %v1704 = vsel %vm1672, %v1297, %v1640
        %v1705 = vsel %vm1673, %v1299, %v1641
        %v1706 = vsel %vm1674, %v1386, %v1642
        %v1707 = vsel %vm1675, %v1388, %v1643
        %v1708 = vsel %vm1676, %v1125, %v1644
        %v1709 = vsel %vm1677, %v1127, %v1645
        %v1710 = vsel %vm1678, %v1214, %v1646
        %v1711 = vsel %vm1679, %v1216, %v1647
        %v1712 = vsel %vm1680, %v1303, %v1648
        %v1713 = vsel %vm1681, %v1305, %v1649
        %v1714 = vsel %vm1682, %v1392, %v1650
        %v1715 = vsel %vm1683, %v1394, %v1651
        %s1716 = scalar_lea.vmem [#allocation7], 32
        %v1717 = vld [vmem:[%s1716] sm:$0xff]
        %v1718 = vld [vmem:[%s1716 + $0x8] sm:$0xff]
        %v1719 = vld [vmem:[%s1716 + $0x10] sm:$0xff]
        %v1720 = vld [vmem:[%s1716 + $0x18] sm:$0xff]
        %1721 = vset.pattern.permute.xlu0 2
        %1722 = vperm.xlu0 %1721, %v260
        %v1723 = vpop.permute.xlu0 %1722
        %1725 = vset.pattern.permute.xlu0 2
        %1726 = vperm.xlu0 %1725, %v261
        %v1727 = vpop.permute.xlu0 %1726
        %1729 = vset.pattern.permute.xlu0 2
        %1730 = vperm.xlu0 %1729, %v262
        %v1731 = vpop.permute.xlu0 %1730
        %1733 = vset.pattern.permute.xlu0 2
        %1734 = vperm.xlu0 %1733, %v263
        %v1735 = vpop.permute.xlu0 %1734
        %v1738 = vsel %vm1027, %v1717, 0
        %v1741 = vsel %vm1027, %v1718, 0
        %v1744 = vsel %vm1027, %v1719, 0
        %v1747 = vsel %vm1027, %v1720, 0
        %1749 = vmatprep.subr.mxu0 %v1685
        %1750 = vmatpush1.msra.mxu0 %v1684
        %1751 = vmatprep.subr.mxu0 %v1693
        %1752 = vmatpush1.msra.mxu0 %v1692
        %1753 = vmatprep.subr.mxu0 %v1701
        %1754 = vmatpush1.msra.mxu0 %v1700
        %1755 = vmatprep.subr.mxu0 %v1709
        %1756 = vmatpush1.msra.mxu0 %v1708
        %1757 = vmatprep.subr.mxu0 0.0
        %1758 = vmatpush1.msra.mxu0 0.0
        %1759 = vmatprep.subr.mxu0 0.0
        %1760 = vmatpush1.msra.mxu0 0.0
        %1761 = vmatprep.subr.mxu0 0.0
        %1762 = vmatpush1.msra.mxu0 0.0
        %1763 = vmatprep.subr.mxu0 0.0
        %1764 = vmatpush1.msra.mxu0 0.0
        %1765 = vmatprep.subr.mxu0 0.0
        %1766 = vmatpush1.msra.mxu0 0.0
        %1767 = vmatprep.subr.mxu0 0.0
        %1768 = vmatpush1.msra.mxu0 0.0
        %1769 = vmatprep.subr.mxu0 0.0
        %1770 = vmatpush1.msra.mxu0 0.0
        %1771 = vmatprep.subr.mxu0 0.0
        %1772 = vmatpush1.msra.mxu0 0.0
        %1773 = vmatprep.subr.mxu0 0.0
        %1774 = vmatpush1.msra.mxu0 0.0
        %1775 = vmatprep.subr.mxu0 0.0
        %1776 = vmatpush1.msra.mxu0 0.0
        %1777 = vmatprep.subr.mxu0 0.0
        %1778 = vmatpush1.msra.mxu0 0.0
        %1779 = vmatprep.subr.mxu0 0.0
        %1780 = vmatpush1.msra.mxu0 0.0
        %1781 = vmatprep.subr.mxu0 0.0
        %1782 = vmatpush1.msra.mxu0 0.0
        %1783 = vmatprep.subr.mxu0 0.0
        %1784 = vmatpush1.msra.mxu0 0.0
        %1785 = vmatprep.subr.mxu0 0.0
        %1786 = vmatpush1.msra.mxu0 0.0
        %1787 = vmatprep.subr.mxu0 0.0
        %1788 = vmatpush1.msra.mxu0 0.0
        %1789 = vmatprep.subr.mxu0 0.0
        %1790 = vmatpush1.msra.mxu0 0.0
        %1791 = vmatprep.subr.mxu0 0.0
        %1792 = vmatpush1.msra.mxu0 0.0
        %1793 = vmatprep.subr.mxu0 0.0
        %1794 = vmatpush1.msra.mxu0 0.0
        %1795 = vmatprep.subr.mxu0 0.0
        %1796 = vmatpush1.msra.mxu0 0.0
        %1797 = vmatprep.subr.mxu0 0.0
        %1798 = vmatpush1.msra.mxu0 0.0
        %1799 = vmatprep.subr.mxu0 0.0
        %1800 = vmatpush1.msra.mxu0 0.0
        %1801 = vmatprep.subr.mxu0 0.0
        %1802 = vmatpush1.msra.mxu0 0.0
        %1803 = vmatprep.subr.mxu0 0.0
        %1804 = vmatpush1.msra.mxu0 0.0
        %1805 = vmatprep.subr.mxu0 0.0
        %1806 = vmatpush1.msra.mxu0 0.0
        %1807 = vmatprep.subr.mxu0 0.0
        %1808 = vmatpush1.msra.mxu0 0.0
        %1809 = vmatprep.subr.mxu0 0.0
        %1810 = vmatpush1.msra.mxu0 0.0
        %1811 = vmatprep.subr.mxu0 0.0
        %1812 = vmatpush1.msra.mxu0 0.0
        %1813 = vmatprep.mubr.f32.mxu0 0.0
        %1814 = vmatmul.mubr.f32.gmra.mrb[0].mxu0 %v1738
        %v1815 = vpop.f32.mrb[0].mxu0
        %v1816 = vadd.f32 %v1723, %v1815
        %v1817 = vpop.f32.mrb[0].mxu0
        %v1818 = vadd.f32 %v1723, %v1817
        %1819 = vmatprep.mubr.f32.mxu0 0.0
        %1820 = vmatmul.mubr.f32.gmra.mrb[0].mxu0 %v1741
        %v1821 = vpop.f32.mrb[0].mxu0
        %v1822 = vadd.f32 %v1727, %v1821
        %v1823 = vpop.f32.mrb[0].mxu0
        %v1824 = vadd.f32 %v1727, %v1823
        %1825 = vmatprep.mubr.f32.mxu0 0.0
        %1826 = vmatmul.mubr.f32.gmra.mrb[0].mxu0 %v1744
        %v1827 = vpop.f32.mrb[0].mxu0
        %v1828 = vadd.f32 %v1731, %v1827
        %v1829 = vpop.f32.mrb[0].mxu0
        %v1830 = vadd.f32 %v1731, %v1829
        %1831 = vmatprep.mubr.f32.mxu0 0.0
        %1832 = vmatmul.mubr.f32.gmra.mrb[0].mxu0 %v1747
        %v1833 = vpop.f32.mrb[0].mxu0
        %v1834 = vadd.f32 %v1735, %v1833
        %v1835 = vpop.f32.mrb[0].mxu0
        %v1836 = vadd.f32 %v1735, %v1835
        %1837 = vdwg.mxu0
        %1838 = vmatprep.subr.mxu0 %v1687
        %1839 = vmatpush1.msra.mxu0 %v1686
        %1840 = vmatprep.subr.mxu0 %v1695
        %1841 = vmatpush1.msra.mxu0 %v1694
        %1842 = vmatprep.subr.mxu0 %v1703
        %1843 = vmatpush1.msra.mxu0 %v1702
        %1844 = vmatprep.subr.mxu0 %v1711
        %1845 = vmatpush1.msra.mxu0 %v1710
        %1846 = vmatprep.subr.mxu0 0.0
        %1847 = vmatpush1.msra.mxu0 0.0
        %1848 = vmatprep.subr.mxu0 0.0
        %1849 = vmatpush1.msra.mxu0 0.0
        %1850 = vmatprep.subr.mxu0 0.0
        %1851 = vmatpush1.msra.mxu0 0.0
        %1852 = vmatprep.subr.mxu0 0.0
        %1853 = vmatpush1.msra.mxu0 0.0
        %1854 = vmatprep.subr.mxu0 0.0
        %1855 = vmatpush1.msra.mxu0 0.0
        %1856 = vmatprep.subr.mxu0 0.0
        %1857 = vmatpush1.msra.mxu0 0.0
        %1858 = vmatprep.subr.mxu0 0.0
        %1859 = vmatpush1.msra.mxu0 0.0
        %1860 = vmatprep.subr.mxu0 0.0
        %1861 = vmatpush1.msra.mxu0 0.0
        %1862 = vmatprep.subr.mxu0 0.0
        %1863 = vmatpush1.msra.mxu0 0.0
        %1864 = vmatprep.subr.mxu0 0.0
        %1865 = vmatpush1.msra.mxu0 0.0
        %1866 = vmatprep.subr.mxu0 0.0
        %1867 = vmatpush1.msra.mxu0 0.0
        %1868 = vmatprep.subr.mxu0 0.0
        %1869 = vmatpush1.msra.mxu0 0.0
        %1870 = vmatprep.subr.mxu0 0.0
        %1871 = vmatpush1.msra.mxu0 0.0
        %1872 = vmatprep.subr.mxu0 0.0
        %1873 = vmatpush1.msra.mxu0 0.0
        %1874 = vmatprep.subr.mxu0 0.0
        %1875 = vmatpush1.msra.mxu0 0.0
        %1876 = vmatprep.subr.mxu0 0.0
        %1877 = vmatpush1.msra.mxu0 0.0
        %1878 = vmatprep.subr.mxu0 0.0
        %1879 = vmatpush1.msra.mxu0 0.0
        %1880 = vmatprep.subr.mxu0 0.0
        %1881 = vmatpush1.msra.mxu0 0.0
        %1882 = vmatprep.subr.mxu0 0.0
        %1883 = vmatpush1.msra.mxu0 0.0
        %1884 = vmatprep.subr.mxu0 0.0
        %1885 = vmatpush1.msra.mxu0 0.0
        %1886 = vmatprep.subr.mxu0 0.0
        %1887 = vmatpush1.msra.mxu0 0.0
        %1888 = vmatprep.subr.mxu0 0.0
        %1889 = vmatpush1.msra.mxu0 0.0
        %1890 = vmatprep.subr.mxu0 0.0
        %1891 = vmatpush1.msra.mxu0 0.0
        %1892 = vmatprep.subr.mxu0 0.0
        %1893 = vmatpush1.msra.mxu0 0.0
        %1894 = vmatprep.subr.mxu0 0.0
        %1895 = vmatpush1.msra.mxu0 0.0
        %1896 = vmatprep.subr.mxu0 0.0
        %1897 = vmatpush1.msra.mxu0 0.0
        %1898 = vmatprep.subr.mxu0 0.0
        %1899 = vmatpush1.msra.mxu0 0.0
        %1900 = vmatprep.subr.mxu0 0.0
        %1901 = vmatpush1.msra.mxu0 0.0
        %1902 = vmatprep.mubr.f32.mxu0 0.0
        %1903 = vmatmul.mubr.f32.gmra.mrb[0].mxu0 %v1738
        %v1904 = vpop.f32.mrb[0].mxu0
        %v1905 = vadd.f32 %v1723, %v1904
        %v1906 = vpop.f32.mrb[0].mxu0
        %v1907 = vadd.f32 %v1723, %v1906
        %1908 = vmatprep.mubr.f32.mxu0 0.0
        %1909 = vmatmul.mubr.f32.gmra.mrb[0].mxu0 %v1741
        %v1910 = vpop.f32.mrb[0].mxu0
        %v1911 = vadd.f32 %v1727, %v1910
        %v1912 = vpop.f32.mrb[0].mxu0
        %v1913 = vadd.f32 %v1727, %v1912
        %1914 = vmatprep.mubr.f32.mxu0 0.0
        %1915 = vmatmul.mubr.f32.gmra.mrb[0].mxu0 %v1744
        %v1916 = vpop.f32.mrb[0].mxu0
        %v1917 = vadd.f32 %v1731, %v1916
        %v1918 = vpop.f32.mrb[0].mxu0
        %v1919 = vadd.f32 %v1731, %v1918
        %1920 = vmatprep.mubr.f32.mxu0 0.0
        %1921 = vmatmul.mubr.f32.gmra.mrb[0].mxu0 %v1747
        %v1922 = vpop.f32.mrb[0].mxu0
        %v1923 = vadd.f32 %v1735, %v1922
        %v1924 = vpop.f32.mrb[0].mxu0
        %v1925 = vadd.f32 %v1735, %v1924
        %1926 = vdwg.mxu0
        %1927 = vmatprep.subr.mxu0 %v1689
        %1928 = vmatpush1.msra.mxu0 %v1688
        %1929 = vmatprep.subr.mxu0 %v1697
        %1930 = vmatpush1.msra.mxu0 %v1696
        %1931 = vmatprep.subr.mxu0 %v1705
        %1932 = vmatpush1.msra.mxu0 %v1704
        %1933 = vmatprep.subr.mxu0 %v1713
        %1934 = vmatpush1.msra.mxu0 %v1712
        %1935 = vmatprep.subr.mxu0 0.0
        %1936 = vmatpush1.msra.mxu0 0.0
        %1937 = vmatprep.subr.mxu0 0.0
        %1938 = vmatpush1.msra.mxu0 0.0
        %1939 = vmatprep.subr.mxu0 0.0
        %1940 = vmatpush1.msra.mxu0 0.0
        %1941 = vmatprep.subr.mxu0 0.0
        %1942 = vmatpush1.msra.mxu0 0.0
        %1943 = vmatprep.subr.mxu0 0.0
        %1944 = vmatpush1.msra.mxu0 0.0
        %1945 = vmatprep.subr.mxu0 0.0
        %1946 = vmatpush1.msra.mxu0 0.0
        %1947 = vmatprep.subr.mxu0 0.0
        %1948 = vmatpush1.msra.mxu0 0.0
        %1949 = vmatprep.subr.mxu0 0.0
        %1950 = vmatpush1.msra.mxu0 0.0
        %1951 = vmatprep.subr.mxu0 0.0
        %1952 = vmatpush1.msra.mxu0 0.0
        %1953 = vmatprep.subr.mxu0 0.0
        %1954 = vmatpush1.msra.mxu0 0.0
        %1955 = vmatprep.subr.mxu0 0.0
        %1956 = vmatpush1.msra.mxu0 0.0
        %1957 = vmatprep.subr.mxu0 0.0
        %1958 = vmatpush1.msra.mxu0 0.0
        %1959 = vmatprep.subr.mxu0 0.0
        %1960 = vmatpush1.msra.mxu0 0.0
        %1961 = vmatprep.subr.mxu0 0.0
        %1962 = vmatpush1.msra.mxu0 0.0
        %1963 = vmatprep.subr.mxu0 0.0
        %1964 = vmatpush1.msra.mxu0 0.0
        %1965 = vmatprep.subr.mxu0 0.0
        %1966 = vmatpush1.msra.mxu0 0.0
        %1967 = vmatprep.subr.mxu0 0.0
        %1968 = vmatpush1.msra.mxu0 0.0
        %1969 = vmatprep.subr.mxu0 0.0
        %1970 = vmatpush1.msra.mxu0 0.0
        %1971 = vmatprep.subr.mxu0 0.0
        %1972 = vmatpush1.msra.mxu0 0.0
        %1973 = vmatprep.subr.mxu0 0.0
        %1974 = vmatpush1.msra.mxu0 0.0
        %1975 = vmatprep.subr.mxu0 0.0
        %1976 = vmatpush1.msra.mxu0 0.0
        %1977 = vmatprep.subr.mxu0 0.0
        %1978 = vmatpush1.msra.mxu0 0.0
        %1979 = vmatprep.subr.mxu0 0.0
        %1980 = vmatpush1.msra.mxu0 0.0
        %1981 = vmatprep.subr.mxu0 0.0
        %1982 = vmatpush1.msra.mxu0 0.0
        %1983 = vmatprep.subr.mxu0 0.0
        %1984 = vmatpush1.msra.mxu0 0.0
        %1985 = vmatprep.subr.mxu0 0.0
        %1986 = vmatpush1.msra.mxu0 0.0
        %1987 = vmatprep.subr.mxu0 0.0
        %1988 = vmatpush1.msra.mxu0 0.0
        %1989 = vmatprep.subr.mxu0 0.0
        %1990 = vmatpush1.msra.mxu0 0.0
        %1991 = vmatprep.mubr.f32.mxu0 0.0
        %1992 = vmatmul.mubr.f32.gmra.mrb[0].mxu0 %v1738
        %v1993 = vpop.f32.mrb[0].mxu0
        %v1994 = vadd.f32 %v1723, %v1993
        %v1995 = vpop.f32.mrb[0].mxu0
        %v1996 = vadd.f32 %v1723, %v1995
        %1997 = vmatprep.mubr.f32.mxu0 0.0
        %1998 = vmatmul.mubr.f32.gmra.mrb[0].mxu0 %v1741
        %v1999 = vpop.f32.mrb[0].mxu0
        %v2000 = vadd.f32 %v1727, %v1999
        %v2001 = vpop.f32.mrb[0].mxu0
        %v2002 = vadd.f32 %v1727, %v2001
        %2003 = vmatprep.mubr.f32.mxu0 0.0
        %2004 = vmatmul.mubr.f32.gmra.mrb[0].mxu0 %v1744
        %v2005 = vpop.f32.mrb[0].mxu0
        %v2006 = vadd.f32 %v1731, %v2005
        %v2007 = vpop.f32.mrb[0].mxu0
        %v2008 = vadd.f32 %v1731, %v2007
        %2009 = vmatprep.mubr.f32.mxu0 0.0
        %2010 = vmatmul.mubr.f32.gmra.mrb[0].mxu0 %v1747
        %v2011 = vpop.f32.mrb[0].mxu0
        %v2012 = vadd.f32 %v1735, %v2011
        %v2013 = vpop.f32.mrb[0].mxu0
        %v2014 = vadd.f32 %v1735, %v2013
        %2015 = vdwg.mxu0
        %2016 = vmatprep.subr.mxu0 %v1691
        %2017 = vmatpush1.msra.mxu0 %v1690
        %2018 = vmatprep.subr.mxu0 %v1699
        %2019 = vmatpush1.msra.mxu0 %v1698
        %2020 = vmatprep.subr.mxu0 %v1707
        %2021 = vmatpush1.msra.mxu0 %v1706
        %2022 = vmatprep.subr.mxu0 %v1715
        %2023 = vmatpush1.msra.mxu0 %v1714
        %2024 = vmatprep.subr.mxu0 0.0
        %2025 = vmatpush1.msra.mxu0 0.0
        %2026 = vmatprep.subr.mxu0 0.0
        %2027 = vmatpush1.msra.mxu0 0.0
        %2028 = vmatprep.subr.mxu0 0.0
        %2029 = vmatpush1.msra.mxu0 0.0
        %2030 = vmatprep.subr.mxu0 0.0
        %2031 = vmatpush1.msra.mxu0 0.0
        %2032 = vmatprep.subr.mxu0 0.0
        %2033 = vmatpush1.msra.mxu0 0.0
        %2034 = vmatprep.subr.mxu0 0.0
        %2035 = vmatpush1.msra.mxu0 0.0
        %2036 = vmatprep.subr.mxu0 0.0
        %2037 = vmatpush1.msra.mxu0 0.0
        %2038 = vmatprep.subr.mxu0 0.0
        %2039 = vmatpush1.msra.mxu0 0.0
        %2040 = vmatprep.subr.mxu0 0.0
        %2041 = vmatpush1.msra.mxu0 0.0
        %2042 = vmatprep.subr.mxu0 0.0
        %2043 = vmatpush1.msra.mxu0 0.0
        %2044 = vmatprep.subr.mxu0 0.0
        %2045 = vmatpush1.msra.mxu0 0.0
        %2046 = vmatprep.subr.mxu0 0.0
        %2047 = vmatpush1.msra.mxu0 0.0
        %2048 = vmatprep.subr.mxu0 0.0
        %2049 = vmatpush1.msra.mxu0 0.0
        %2050 = vmatprep.subr.mxu0 0.0
        %2051 = vmatpush1.msra.mxu0 0.0
        %2052 = vmatprep.subr.mxu0 0.0
        %2053 = vmatpush1.msra.mxu0 0.0
        %2054 = vmatprep.subr.mxu0 0.0
        %2055 = vmatpush1.msra.mxu0 0.0
        %2056 = vmatprep.subr.mxu0 0.0
        %2057 = vmatpush1.msra.mxu0 0.0
        %2058 = vmatprep.subr.mxu0 0.0
        %2059 = vmatpush1.msra.mxu0 0.0
        %2060 = vmatprep.subr.mxu0 0.0
        %2061 = vmatpush1.msra.mxu0 0.0
        %2062 = vmatprep.subr.mxu0 0.0
        %2063 = vmatpush1.msra.mxu0 0.0
        %2064 = vmatprep.subr.mxu0 0.0
        %2065 = vmatpush1.msra.mxu0 0.0
        %2066 = vmatprep.subr.mxu0 0.0
        %2067 = vmatpush1.msra.mxu0 0.0
        %2068 = vmatprep.subr.mxu0 0.0
        %2069 = vmatpush1.msra.mxu0 0.0
        %2070 = vmatprep.subr.mxu0 0.0
        %2071 = vmatpush1.msra.mxu0 0.0
        %2072 = vmatprep.subr.mxu0 0.0
        %2073 = vmatpush1.msra.mxu0 0.0
        %2074 = vmatprep.subr.mxu0 0.0
        %2075 = vmatpush1.msra.mxu0 0.0
        %2076 = vmatprep.subr.mxu0 0.0
        %2077 = vmatpush1.msra.mxu0 0.0
        %2078 = vmatprep.subr.mxu0 0.0
        %2079 = vmatpush1.msra.mxu0 0.0
        %2080 = vmatprep.mubr.f32.mxu0 0.0
        %2081 = vmatmul.mubr.f32.gmra.mrb[0].mxu0 %v1738
        %v2082 = vpop.f32.mrb[0].mxu0
        %v2083 = vadd.f32 %v1723, %v2082
        %v2084 = vpop.f32.mrb[0].mxu0
        %v2085 = vadd.f32 %v1723, %v2084
        %2086 = vmatprep.mubr.f32.mxu0 0.0
        %2087 = vmatmul.mubr.f32.gmra.mrb[0].mxu0 %v1741
        %v2088 = vpop.f32.mrb[0].mxu0
        %v2089 = vadd.f32 %v1727, %v2088
        %v2090 = vpop.f32.mrb[0].mxu0
        %v2091 = vadd.f32 %v1727, %v2090
        %2092 = vmatprep.mubr.f32.mxu0 0.0
        %2093 = vmatmul.mubr.f32.gmra.mrb[0].mxu0 %v1744
        %v2094 = vpop.f32.mrb[0].mxu0
        %v2095 = vadd.f32 %v1731, %v2094
        %v2096 = vpop.f32.mrb[0].mxu0
        %v2097 = vadd.f32 %v1731, %v2096
        %2098 = vmatprep.mubr.f32.mxu0 0.0
        %2099 = vmatmul.mubr.f32.gmra.mrb[0].mxu0 %v1747
        %v2100 = vpop.f32.mrb[0].mxu0
        %v2101 = vadd.f32 %v1735, %v2100
        %v2102 = vpop.f32.mrb[0].mxu0
        %v2103 = vadd.f32 %v1735, %v2102
        %2104 = vdwg.mxu0
        %v2105 = vmul.f32 %v1816, 100.0
        %v2106 = vmul.f32 %v1818, 100.0
        %v2107 = vmul.f32 %v1905, 100.0
        %v2108 = vmul.f32 %v1907, 100.0
        %v2109 = vmul.f32 %v1994, 100.0
        %v2110 = vmul.f32 %v1996, 100.0
        %v2111 = vmul.f32 %v2083, 100.0
        %v2112 = vmul.f32 %v2085, 100.0
        %v2113 = vmul.f32 %v1822, 100.0
        %v2114 = vmul.f32 %v1824, 100.0
        %v2115 = vmul.f32 %v1911, 100.0
        %v2116 = vmul.f32 %v1913, 100.0
        %v2117 = vmul.f32 %v2000, 100.0
        %v2118 = vmul.f32 %v2002, 100.0
        %v2119 = vmul.f32 %v2089, 100.0
        %v2120 = vmul.f32 %v2091, 100.0
        %v2121 = vmul.f32 %v1828, 100.0
        %v2122 = vmul.f32 %v1830, 100.0
        %v2123 = vmul.f32 %v1917, 100.0
        %v2124 = vmul.f32 %v1919, 100.0
        %v2125 = vmul.f32 %v2006, 100.0
        %v2126 = vmul.f32 %v2008, 100.0
        %v2127 = vmul.f32 %v2095, 100.0
        %v2128 = vmul.f32 %v2097, 100.0
        %v2129 = vmul.f32 %v1834, 100.0
        %v2130 = vmul.f32 %v1836, 100.0
        %v2131 = vmul.f32 %v1923, 100.0
        %v2132 = vmul.f32 %v1925, 100.0
        %v2133 = vmul.f32 %v2012, 100.0
        %v2134 = vmul.f32 %v2014, 100.0
        %v2135 = vmul.f32 %v2101, 100.0
        %v2136 = vmul.f32 %v2103, 100.0
        %v2137 = vmin.f32 %v2105, 20.0
        %v2138 = vmin.f32 %v2106, 20.0
        %v2139 = vmin.f32 %v2107, 20.0
        %v2140 = vmin.f32 %v2108, 20.0
        %v2141 = vmin.f32 %v2109, 20.0
        %v2142 = vmin.f32 %v2110, 20.0
        %v2143 = vmin.f32 %v2111, 20.0
        %v2144 = vmin.f32 %v2112, 20.0
        %v2145 = vmin.f32 %v2113, 20.0
        %v2146 = vmin.f32 %v2114, 20.0
        %v2147 = vmin.f32 %v2115, 20.0
        %v2148 = vmin.f32 %v2116, 20.0
        %v2149 = vmin.f32 %v2117, 20.0
        %v2150 = vmin.f32 %v2118, 20.0
        %v2151 = vmin.f32 %v2119, 20.0
        %v2152 = vmin.f32 %v2120, 20.0
        %v2153 = vmin.f32 %v2121, 20.0
        %v2154 = vmin.f32 %v2122, 20.0
        %v2155 = vmin.f32 %v2123, 20.0
        %v2156 = vmin.f32 %v2124, 20.0
        %v2157 = vmin.f32 %v2125, 20.0
        %v2158 = vmin.f32 %v2126, 20.0
        %v2159 = vmin.f32 %v2127, 20.0
        %v2160 = vmin.f32 %v2128, 20.0
        %v2161 = vmin.f32 %v2129, 20.0
        %v2162 = vmin.f32 %v2130, 20.0
        %v2163 = vmin.f32 %v2131, 20.0
        %v2164 = vmin.f32 %v2132, 20.0
        %v2165 = vmin.f32 %v2133, 20.0
        %v2166 = vmin.f32 %v2134, 20.0
        %v2167 = vmin.f32 %v2135, 20.0
        %v2168 = vmin.f32 %v2136, 20.0
        %v2169 = vmul.f32 %v2137, 1.442695
        %v2170 = vpow.pop %v2169
        %v2171 = vmul.f32 %v2138, 1.442695
        %v2172 = vpow.pop %v2171
        %v2173 = vmul.f32 %v2139, 1.442695
        %v2174 = vpow.pop %v2173
        %v2175 = vmul.f32 %v2140, 1.442695
        %v2176 = vpow.pop %v2175
        %v2177 = vmul.f32 %v2141, 1.442695
        %v2178 = vpow.pop %v2177
        %v2179 = vmul.f32 %v2142, 1.442695
        %v2180 = vpow.pop %v2179
        %v2181 = vmul.f32 %v2143, 1.442695
        %v2182 = vpow.pop %v2181
        %v2183 = vmul.f32 %v2144, 1.442695
        %v2184 = vpow.pop %v2183
        %v2185 = vmul.f32 %v2145, 1.442695
        %v2186 = vpow.pop %v2185
        %v2187 = vmul.f32 %v2146, 1.442695
        %v2188 = vpow.pop %v2187
        %v2189 = vmul.f32 %v2147, 1.442695
        %v2190 = vpow.pop %v2189
        %v2191 = vmul.f32 %v2148, 1.442695
        %v2192 = vpow.pop %v2191
        %v2193 = vmul.f32 %v2149, 1.442695
        %v2194 = vpow.pop %v2193
        %v2195 = vmul.f32 %v2150, 1.442695
        %v2196 = vpow.pop %v2195
        %v2197 = vmul.f32 %v2151, 1.442695
        %v2198 = vpow.pop %v2197
        %v2199 = vmul.f32 %v2152, 1.442695
        %v2200 = vpow.pop %v2199
        %v2201 = vmul.f32 %v2153, 1.442695
        %v2202 = vpow.pop %v2201
        %v2203 = vmul.f32 %v2154, 1.442695
        %v2204 = vpow.pop %v2203
        %v2205 = vmul.f32 %v2155, 1.442695
        %v2206 = vpow.pop %v2205
        %v2207 = vmul.f32 %v2156, 1.442695
        %v2208 = vpow.pop %v2207
        %v2209 = vmul.f32 %v2157, 1.442695
        %v2210 = vpow.pop %v2209
        %v2211 = vmul.f32 %v2158, 1.442695
        %v2212 = vpow.pop %v2211
        %v2213 = vmul.f32 %v2159, 1.442695
        %v2214 = vpow.pop %v2213
        %v2215 = vmul.f32 %v2160, 1.442695
        %v2216 = vpow.pop %v2215
        %v2217 = vmul.f32 %v2161, 1.442695
        %v2218 = vpow.pop %v2217
        %v2219 = vmul.f32 %v2162, 1.442695
        %v2220 = vpow.pop %v2219
        %v2221 = vmul.f32 %v2163, 1.442695
        %v2222 = vpow.pop %v2221
        %v2223 = vmul.f32 %v2164, 1.442695
        %v2224 = vpow.pop %v2223
        %v2225 = vmul.f32 %v2165, 1.442695
        %v2226 = vpow.pop %v2225
        %v2227 = vmul.f32 %v2166, 1.442695
        %v2228 = vpow.pop %v2227
        %v2229 = vmul.f32 %v2167, 1.442695
        %v2230 = vpow.pop %v2229
        %v2231 = vmul.f32 %v2168, 1.442695
        %v2232 = vpow.pop %v2231
        %v2233 = vadd.f32 %v2170, 1.0
        %v2234 = vadd.f32 %v2172, 1.0
        %v2235 = vadd.f32 %v2174, 1.0
        %v2236 = vadd.f32 %v2176, 1.0
        %v2237 = vadd.f32 %v2178, 1.0
        %v2238 = vadd.f32 %v2180, 1.0
        %v2239 = vadd.f32 %v2182, 1.0
        %v2240 = vadd.f32 %v2184, 1.0
        %v2241 = vadd.f32 %v2186, 1.0
        %v2242 = vadd.f32 %v2188, 1.0
        %v2243 = vadd.f32 %v2190, 1.0
        %v2244 = vadd.f32 %v2192, 1.0
        %v2245 = vadd.f32 %v2194, 1.0
        %v2246 = vadd.f32 %v2196, 1.0
        %v2247 = vadd.f32 %v2198, 1.0
        %v2248 = vadd.f32 %v2200, 1.0
        %v2249 = vadd.f32 %v2202, 1.0
        %v2250 = vadd.f32 %v2204, 1.0
        %v2251 = vadd.f32 %v2206, 1.0
        %v2252 = vadd.f32 %v2208, 1.0
        %v2253 = vadd.f32 %v2210, 1.0
        %v2254 = vadd.f32 %v2212, 1.0
        %v2255 = vadd.f32 %v2214, 1.0
        %v2256 = vadd.f32 %v2216, 1.0
        %v2257 = vadd.f32 %v2218, 1.0
        %v2258 = vadd.f32 %v2220, 1.0
        %v2259 = vadd.f32 %v2222, 1.0
        %v2260 = vadd.f32 %v2224, 1.0
        %v2261 = vadd.f32 %v2226, 1.0
        %v2262 = vadd.f32 %v2228, 1.0
        %v2263 = vadd.f32 %v2230, 1.0
        %v2264 = vadd.f32 %v2232, 1.0
        %v2265 = vlog2.pop %v2233
        %v2266 = vmul.f32 %v2265, 0.6931472
        %v2267 = vlog2.pop %v2234
        %v2268 = vmul.f32 %v2267, 0.6931472
        %v2269 = vlog2.pop %v2235
        %v2270 = vmul.f32 %v2269, 0.6931472
        %v2271 = vlog2.pop %v2236
        %v2272 = vmul.f32 %v2271, 0.6931472
        %v2273 = vlog2.pop %v2237
        %v2274 = vmul.f32 %v2273, 0.6931472
        %v2275 = vlog2.pop %v2238
        %v2276 = vmul.f32 %v2275, 0.6931472
        %v2277 = vlog2.pop %v2239
        %v2278 = vmul.f32 %v2277, 0.6931472
        %v2279 = vlog2.pop %v2240
        %v2280 = vmul.f32 %v2279, 0.6931472
        %v2281 = vlog2.pop %v2241
        %v2282 = vmul.f32 %v2281, 0.6931472
        %v2283 = vlog2.pop %v2242
        %v2284 = vmul.f32 %v2283, 0.6931472
        %v2285 = vlog2.pop %v2243
        %v2286 = vmul.f32 %v2285, 0.6931472
        %v2287 = vlog2.pop %v2244
        %v2288 = vmul.f32 %v2287, 0.6931472
        %v2289 = vlog2.pop %v2245
        %v2290 = vmul.f32 %v2289, 0.6931472
        %v2291 = vlog2.pop %v2246
        %v2292 = vmul.f32 %v2291, 0.6931472
        %v2293 = vlog2.pop %v2247
        %v2294 = vmul.f32 %v2293, 0.6931472
        %v2295 = vlog2.pop %v2248
        %v2296 = vmul.f32 %v2295, 0.6931472
        %v2297 = vlog2.pop %v2249
        %v2298 = vmul.f32 %v2297, 0.6931472
        %v2299 = vlog2.pop %v2250
        %v2300 = vmul.f32 %v2299, 0.6931472
        %v2301 = vlog2.pop %v2251
        %v2302 = vmul.f32 %v2301, 0.6931472
        %v2303 = vlog2.pop %v2252
        %v2304 = vmul.f32 %v2303, 0.6931472
        %v2305 = vlog2.pop %v2253
        %v2306 = vmul.f32 %v2305, 0.6931472
        %v2307 = vlog2.pop %v2254
        %v2308 = vmul.f32 %v2307, 0.6931472
        %v2309 = vlog2.pop %v2255
        %v2310 = vmul.f32 %v2309, 0.6931472
        %v2311 = vlog2.pop %v2256
        %v2312 = vmul.f32 %v2311, 0.6931472
        %v2313 = vlog2.pop %v2257
        %v2314 = vmul.f32 %v2313, 0.6931472
        %v2315 = vlog2.pop %v2258
        %v2316 = vmul.f32 %v2315, 0.6931472
        %v2317 = vlog2.pop %v2259
        %v2318 = vmul.f32 %v2317, 0.6931472
        %v2319 = vlog2.pop %v2260
        %v2320 = vmul.f32 %v2319, 0.6931472
        %v2321 = vlog2.pop %v2261
        %v2322 = vmul.f32 %v2321, 0.6931472
        %v2323 = vlog2.pop %v2262
        %v2324 = vmul.f32 %v2323, 0.6931472
        %v2325 = vlog2.pop %v2263
        %v2326 = vmul.f32 %v2325, 0.6931472
        %v2327 = vlog2.pop %v2264
        %v2328 = vmul.f32 %v2327, 0.6931472
        %v2329 = vmul.f32 %v2266, %v910
        %v2330 = vmul.f32 %v2268, %v910
        %v2331 = vmul.f32 %v2270, %v910
        %v2332 = vmul.f32 %v2272, %v910
        %v2333 = vmul.f32 %v2274, %v910
        %v2334 = vmul.f32 %v2276, %v910
        %v2335 = vmul.f32 %v2278, %v910
        %v2336 = vmul.f32 %v2280, %v910
        %v2337 = vmul.f32 %v2282, %v910
        %v2338 = vmul.f32 %v2284, %v910
        %v2339 = vmul.f32 %v2286, %v910
        %v2340 = vmul.f32 %v2288, %v910
        %v2341 = vmul.f32 %v2290, %v910
        %v2342 = vmul.f32 %v2292, %v910
        %v2343 = vmul.f32 %v2294, %v910
        %v2344 = vmul.f32 %v2296, %v910
        %v2345 = vmul.f32 %v2298, %v910
        %v2346 = vmul.f32 %v2300, %v910
        %v2347 = vmul.f32 %v2302, %v910
        %v2348 = vmul.f32 %v2304, %v910
        %v2349 = vmul.f32 %v2306, %v910
        %v2350 = vmul.f32 %v2308, %v910
        %v2351 = vmul.f32 %v2310, %v910
        %v2352 = vmul.f32 %v2312, %v910
        %v2353 = vmul.f32 %v2314, %v910
        %v2354 = vmul.f32 %v2316, %v910
        %v2355 = vmul.f32 %v2318, %v910
        %v2356 = vmul.f32 %v2320, %v910
        %v2357 = vmul.f32 %v2322, %v910
        %v2358 = vmul.f32 %v2324, %v910
        %v2359 = vmul.f32 %v2326, %v910
        %v2360 = vmul.f32 %v2328, %v910
        %vm2361 = vcmp.gt.f32.partialorder %v2105, 20.0
        %vm2362 = vcmp.gt.f32.partialorder %v2106, 20.0
        %vm2363 = vcmp.gt.f32.partialorder %v2107, 20.0
        %vm2364 = vcmp.gt.f32.partialorder %v2108, 20.0
        %vm2365 = vcmp.gt.f32.partialorder %v2109, 20.0
        %vm2366 = vcmp.gt.f32.partialorder %v2110, 20.0
        %vm2367 = vcmp.gt.f32.partialorder %v2111, 20.0
        %vm2368 = vcmp.gt.f32.partialorder %v2112, 20.0
        %vm2369 = vcmp.gt.f32.partialorder %v2113, 20.0
        %vm2370 = vcmp.gt.f32.partialorder %v2114, 20.0
        %vm2371 = vcmp.gt.f32.partialorder %v2115, 20.0
        %vm2372 = vcmp.gt.f32.partialorder %v2116, 20.0
        %vm2373 = vcmp.gt.f32.partialorder %v2117, 20.0
        %vm2374 = vcmp.gt.f32.partialorder %v2118, 20.0
        %vm2375 = vcmp.gt.f32.partialorder %v2119, 20.0
        %vm2376 = vcmp.gt.f32.partialorder %v2120, 20.0
        %vm2377 = vcmp.gt.f32.partialorder %v2121, 20.0
        %vm2378 = vcmp.gt.f32.partialorder %v2122, 20.0
        %vm2379 = vcmp.gt.f32.partialorder %v2123, 20.0
        %vm2380 = vcmp.gt.f32.partialorder %v2124, 20.0
        %vm2381 = vcmp.gt.f32.partialorder %v2125, 20.0
        %vm2382 = vcmp.gt.f32.partialorder %v2126, 20.0
        %vm2383 = vcmp.gt.f32.partialorder %v2127, 20.0
        %vm2384 = vcmp.gt.f32.partialorder %v2128, 20.0
        %vm2385 = vcmp.gt.f32.partialorder %v2129, 20.0
        %vm2386 = vcmp.gt.f32.partialorder %v2130, 20.0
        %vm2387 = vcmp.gt.f32.partialorder %v2131, 20.0
        %vm2388 = vcmp.gt.f32.partialorder %v2132, 20.0
        %vm2389 = vcmp.gt.f32.partialorder %v2133, 20.0
        %vm2390 = vcmp.gt.f32.partialorder %v2134, 20.0
        %vm2391 = vcmp.gt.f32.partialorder %v2135, 20.0
        %vm2392 = vcmp.gt.f32.partialorder %v2136, 20.0
        %v2393 = vsel %vm2361, %v1816, %v2329
        %v2394 = vsel %vm2362, %v1818, %v2330
        %v2395 = vsel %vm2363, %v1905, %v2331
        %v2396 = vsel %vm2364, %v1907, %v2332
        %v2397 = vsel %vm2365, %v1994, %v2333
        %v2398 = vsel %vm2366, %v1996, %v2334
        %v2399 = vsel %vm2367, %v2083, %v2335
        %v2400 = vsel %vm2368, %v2085, %v2336
        %v2401 = vsel %vm2369, %v1822, %v2337
        %v2402 = vsel %vm2370, %v1824, %v2338
        %v2403 = vsel %vm2371, %v1911, %v2339
        %v2404 = vsel %vm2372, %v1913, %v2340
        %v2405 = vsel %vm2373, %v2000, %v2341
        %v2406 = vsel %vm2374, %v2002, %v2342
        %v2407 = vsel %vm2375, %v2089, %v2343
        %v2408 = vsel %vm2376, %v2091, %v2344
        %v2409 = vsel %vm2377, %v1828, %v2345
        %v2410 = vsel %vm2378, %v1830, %v2346
        %v2411 = vsel %vm2379, %v1917, %v2347
        %v2412 = vsel %vm2380, %v1919, %v2348
        %v2413 = vsel %vm2381, %v2006, %v2349
        %v2414 = vsel %vm2382, %v2008, %v2350
        %v2415 = vsel %vm2383, %v2095, %v2351
        %v2416 = vsel %vm2384, %v2097, %v2352
        %v2417 = vsel %vm2385, %v1834, %v2353
        %v2418 = vsel %vm2386, %v1836, %v2354
        %v2419 = vsel %vm2387, %v1923, %v2355
        %v2420 = vsel %vm2388, %v1925, %v2356
        %v2421 = vsel %vm2389, %v2012, %v2357
        %v2422 = vsel %vm2390, %v2014, %v2358
        %v2423 = vsel %vm2391, %v2101, %v2359
        %v2424 = vsel %vm2392, %v2103, %v2360
        %s2425 = scalar_lea.vmem [#allocation7], 64
        %v2426 = vld [vmem:[%s2425] sm:$0xff]
        %v2427 = vld [vmem:[%s2425 + $0x8] sm:$0xff]
        %v2428 = vld [vmem:[%s2425 + $0x10] sm:$0xff]
        %v2429 = vld [vmem:[%s2425 + $0x18] sm:$0xff]
        %2430 = vset.pattern.permute.xlu0 3
        %2431 = vperm.xlu0 %2430, %v260
        %v2432 = vpop.permute.xlu0 %2431
        %2434 = vset.pattern.permute.xlu0 3
        %2435 = vperm.xlu0 %2434, %v261
        %v2436 = vpop.permute.xlu0 %2435
        %2438 = vset.pattern.permute.xlu0 3
        %2439 = vperm.xlu0 %2438, %v262
        %v2440 = vpop.permute.xlu0 %2439
        %2442 = vset.pattern.permute.xlu0 3
        %2443 = vperm.xlu0 %2442, %v263
        %v2444 = vpop.permute.xlu0 %2443
        %v2447 = vsel %vm1027, %v2426, 0
        %v2450 = vsel %vm1027, %v2427, 0
        %v2453 = vsel %vm1027, %v2428, 0
        %v2456 = vsel %vm1027, %v2429, 0
        %2458 = vmatprep.subr.mxu0 %v2394
        %2459 = vmatpush1.msra.mxu0 %v2393
        %2460 = vmatprep.subr.mxu0 %v2402
        %2461 = vmatpush1.msra.mxu0 %v2401
        %2462 = vmatprep.subr.mxu0 %v2410
        %2463 = vmatpush1.msra.mxu0 %v2409
        %2464 = vmatprep.subr.mxu0 %v2418
        %2465 = vmatpush1.msra.mxu0 %v2417
        %2466 = vmatprep.subr.mxu0 0.0
        %2467 = vmatpush1.msra.mxu0 0.0
        %2468 = vmatprep.subr.mxu0 0.0
        %2469 = vmatpush1.msra.mxu0 0.0
        %2470 = vmatprep.subr.mxu0 0.0
        %2471 = vmatpush1.msra.mxu0 0.0
        %2472 = vmatprep.subr.mxu0 0.0
        %2473 = vmatpush1.msra.mxu0 0.0
        %2474 = vmatprep.subr.mxu0 0.0
        %2475 = vmatpush1.msra.mxu0 0.0
        %2476 = vmatprep.subr.mxu0 0.0
        %2477 = vmatpush1.msra.mxu0 0.0
        %2478 = vmatprep.subr.mxu0 0.0
        %2479 = vmatpush1.msra.mxu0 0.0
        %2480 = vmatprep.subr.mxu0 0.0
        %2481 = vmatpush1.msra.mxu0 0.0
        %2482 = vmatprep.subr.mxu0 0.0
        %2483 = vmatpush1.msra.mxu0 0.0
        %2484 = vmatprep.subr.mxu0 0.0
        %2485 = vmatpush1.msra.mxu0 0.0
        %2486 = vmatprep.subr.mxu0 0.0
        %2487 = vmatpush1.msra.mxu0 0.0
        %2488 = vmatprep.subr.mxu0 0.0
        %2489 = vmatpush1.msra.mxu0 0.0
        %2490 = vmatprep.subr.mxu0 0.0
        %2491 = vmatpush1.msra.mxu0 0.0
        %2492 = vmatprep.subr.mxu0 0.0
        %2493 = vmatpush1.msra.mxu0 0.0
        %2494 = vmatprep.subr.mxu0 0.0
        %2495 = vmatpush1.msra.mxu0 0.0
        %2496 = vmatprep.subr.mxu0 0.0
        %2497 = vmatpush1.msra.mxu0 0.0
        %2498 = vmatprep.subr.mxu0 0.0
        %2499 = vmatpush1.msra.mxu0 0.0
        %2500 = vmatprep.subr.mxu0 0.0
        %2501 = vmatpush1.msra.mxu0 0.0
        %2502 = vmatprep.subr.mxu0 0.0
        %2503 = vmatpush1.msra.mxu0 0.0
        %2504 = vmatprep.subr.mxu0 0.0
        %2505 = vmatpush1.msra.mxu0 0.0
        %2506 = vmatprep.subr.mxu0 0.0
        %2507 = vmatpush1.msra.mxu0 0.0
        %2508 = vmatprep.subr.mxu0 0.0
        %2509 = vmatpush1.msra.mxu0 0.0
        %2510 = vmatprep.subr.mxu0 0.0
        %2511 = vmatpush1.msra.mxu0 0.0
        %2512 = vmatprep.subr.mxu0 0.0
        %2513 = vmatpush1.msra.mxu0 0.0
        %2514 = vmatprep.subr.mxu0 0.0
        %2515 = vmatpush1.msra.mxu0 0.0
        %2516 = vmatprep.subr.mxu0 0.0
        %2517 = vmatpush1.msra.mxu0 0.0
        %2518 = vmatprep.subr.mxu0 0.0
        %2519 = vmatpush1.msra.mxu0 0.0
        %2520 = vmatprep.subr.mxu0 0.0
        %2521 = vmatpush1.msra.mxu0 0.0
        %2522 = vmatprep.mubr.f32.mxu0 0.0
        %2523 = vmatmul.mubr.f32.gmra.mrb[0].mxu0 %v2447
        %v2524 = vpop.f32.mrb[0].mxu0
        %v2525 = vadd.f32 %v2432, %v2524
        %v2526 = vpop.f32.mrb[0].mxu0
        %v2527 = vadd.f32 %v2432, %v2526
        %2528 = vmatprep.mubr.f32.mxu0 0.0
        %2529 = vmatmul.mubr.f32.gmra.mrb[0].mxu0 %v2450
        %v2530 = vpop.f32.mrb[0].mxu0
        %v2531 = vadd.f32 %v2436, %v2530
        %v2532 = vpop.f32.mrb[0].mxu0
        %v2533 = vadd.f32 %v2436, %v2532
        %2534 = vmatprep.mubr.f32.mxu0 0.0
        %2535 = vmatmul.mubr.f32.gmra.mrb[0].mxu0 %v2453
        %v2536 = vpop.f32.mrb[0].mxu0
        %v2537 = vadd.f32 %v2440, %v2536
        %v2538 = vpop.f32.mrb[0].mxu0
        %v2539 = vadd.f32 %v2440, %v2538
        %2540 = vmatprep.mubr.f32.mxu0 0.0
        %2541 = vmatmul.mubr.f32.gmra.mrb[0].mxu0 %v2456
        %v2542 = vpop.f32.mrb[0].mxu0
        %v2543 = vadd.f32 %v2444, %v2542
        %v2544 = vpop.f32.mrb[0].mxu0
        %v2545 = vadd.f32 %v2444, %v2544
        %2546 = vdwg.mxu0
        %2547 = vmatprep.subr.mxu0 %v2396
        %2548 = vmatpush1.msra.mxu0 %v2395
        %2549 = vmatprep.subr.mxu0 %v2404
        %2550 = vmatpush1.msra.mxu0 %v2403
        %2551 = vmatprep.subr.mxu0 %v2412
        %2552 = vmatpush1.msra.mxu0 %v2411
        %2553 = vmatprep.subr.mxu0 %v2420
        %2554 = vmatpush1.msra.mxu0 %v2419
        %2555 = vmatprep.subr.mxu0 0.0
        %2556 = vmatpush1.msra.mxu0 0.0
        %2557 = vmatprep.subr.mxu0 0.0
        %2558 = vmatpush1.msra.mxu0 0.0
        %2559 = vmatprep.subr.mxu0 0.0
        %2560 = vmatpush1.msra.mxu0 0.0
        %2561 = vmatprep.subr.mxu0 0.0
        %2562 = vmatpush1.msra.mxu0 0.0
        %2563 = vmatprep.subr.mxu0 0.0
        %2564 = vmatpush1.msra.mxu0 0.0
        %2565 = vmatprep.subr.mxu0 0.0
        %2566 = vmatpush1.msra.mxu0 0.0
        %2567 = vmatprep.subr.mxu0 0.0
        %2568 = vmatpush1.msra.mxu0 0.0
        %2569 = vmatprep.subr.mxu0 0.0
        %2570 = vmatpush1.msra.mxu0 0.0
        %2571 = vmatprep.subr.mxu0 0.0
        %2572 = vmatpush1.msra.mxu0 0.0
        %2573 = vmatprep.subr.mxu0 0.0
        %2574 = vmatpush1.msra.mxu0 0.0
        %2575 = vmatprep.subr.mxu0 0.0
        %2576 = vmatpush1.msra.mxu0 0.0
        %2577 = vmatprep.subr.mxu0 0.0
        %2578 = vmatpush1.msra.mxu0 0.0
        %2579 = vmatprep.subr.mxu0 0.0
        %2580 = vmatpush1.msra.mxu0 0.0
        %2581 = vmatprep.subr.mxu0 0.0
        %2582 = vmatpush1.msra.mxu0 0.0
        %2583 = vmatprep.subr.mxu0 0.0
        %2584 = vmatpush1.msra.mxu0 0.0
        %2585 = vmatprep.subr.mxu0 0.0
        %2586 = vmatpush1.msra.mxu0 0.0
        %2587 = vmatprep.subr.mxu0 0.0
        %2588 = vmatpush1.msra.mxu0 0.0
        %2589 = vmatprep.subr.mxu0 0.0
        %2590 = vmatpush1.msra.mxu0 0.0
        %2591 = vmatprep.subr.mxu0 0.0
        %2592 = vmatpush1.msra.mxu0 0.0
        %2593 = vmatprep.subr.mxu0 0.0
        %2594 = vmatpush1.msra.mxu0 0.0
        %2595 = vmatprep.subr.mxu0 0.0
        %2596 = vmatpush1.msra.mxu0 0.0
        %2597 = vmatprep.subr.mxu0 0.0
        %2598 = vmatpush1.msra.mxu0 0.0
        %2599 = vmatprep.subr.mxu0 0.0
        %2600 = vmatpush1.msra.mxu0 0.0
        %2601 = vmatprep.subr.mxu0 0.0
        %2602 = vmatpush1.msra.mxu0 0.0
        %2603 = vmatprep.subr.mxu0 0.0
        %2604 = vmatpush1.msra.mxu0 0.0
        %2605 = vmatprep.subr.mxu0 0.0
        %2606 = vmatpush1.msra.mxu0 0.0
        %2607 = vmatprep.subr.mxu0 0.0
        %2608 = vmatpush1.msra.mxu0 0.0
        %2609 = vmatprep.subr.mxu0 0.0
        %2610 = vmatpush1.msra.mxu0 0.0
        %2611 = vmatprep.mubr.f32.mxu0 0.0
        %2612 = vmatmul.mubr.f32.gmra.mrb[0].mxu0 %v2447
        %v2613 = vpop.f32.mrb[0].mxu0
        %v2614 = vadd.f32 %v2432, %v2613
        %v2615 = vpop.f32.mrb[0].mxu0
        %v2616 = vadd.f32 %v2432, %v2615
        %2617 = vmatprep.mubr.f32.mxu0 0.0
        %2618 = vmatmul.mubr.f32.gmra.mrb[0].mxu0 %v2450
        %v2619 = vpop.f32.mrb[0].mxu0
        %v2620 = vadd.f32 %v2436, %v2619
        %v2621 = vpop.f32.mrb[0].mxu0
        %v2622 = vadd.f32 %v2436, %v2621
        %2623 = vmatprep.mubr.f32.mxu0 0.0
        %2624 = vmatmul.mubr.f32.gmra.mrb[0].mxu0 %v2453
        %v2625 = vpop.f32.mrb[0].mxu0
        %v2626 = vadd.f32 %v2440, %v2625
        %v2627 = vpop.f32.mrb[0].mxu0
        %v2628 = vadd.f32 %v2440, %v2627
        %2629 = vmatprep.mubr.f32.mxu0 0.0
        %2630 = vmatmul.mubr.f32.gmra.mrb[0].mxu0 %v2456
        %v2631 = vpop.f32.mrb[0].mxu0
        %v2632 = vadd.f32 %v2444, %v2631
        %v2633 = vpop.f32.mrb[0].mxu0
        %v2634 = vadd.f32 %v2444, %v2633
        %2635 = vdwg.mxu0
        %2636 = vmatprep.subr.mxu0 %v2398
        %2637 = vmatpush1.msra.mxu0 %v2397
        %2638 = vmatprep.subr.mxu0 %v2406
        %2639 = vmatpush1.msra.mxu0 %v2405
        %2640 = vmatprep.subr.mxu0 %v2414
        %2641 = vmatpush1.msra.mxu0 %v2413
        %2642 = vmatprep.subr.mxu0 %v2422
        %2643 = vmatpush1.msra.mxu0 %v2421
        %2644 = vmatprep.subr.mxu0 0.0
        %2645 = vmatpush1.msra.mxu0 0.0
        %2646 = vmatprep.subr.mxu0 0.0
        %2647 = vmatpush1.msra.mxu0 0.0
        %2648 = vmatprep.subr.mxu0 0.0
        %2649 = vmatpush1.msra.mxu0 0.0
        %2650 = vmatprep.subr.mxu0 0.0
        %2651 = vmatpush1.msra.mxu0 0.0
        %2652 = vmatprep.subr.mxu0 0.0
        %2653 = vmatpush1.msra.mxu0 0.0
        %2654 = vmatprep.subr.mxu0 0.0
        %2655 = vmatpush1.msra.mxu0 0.0
        %2656 = vmatprep.subr.mxu0 0.0
        %2657 = vmatpush1.msra.mxu0 0.0
        %2658 = vmatprep.subr.mxu0 0.0
        %2659 = vmatpush1.msra.mxu0 0.0
        %2660 = vmatprep.subr.mxu0 0.0
        %2661 = vmatpush1.msra.mxu0 0.0
        %2662 = vmatprep.subr.mxu0 0.0
        %2663 = vmatpush1.msra.mxu0 0.0
        %2664 = vmatprep.subr.mxu0 0.0
        %2665 = vmatpush1.msra.mxu0 0.0
        %2666 = vmatprep.subr.mxu0 0.0
        %2667 = vmatpush1.msra.mxu0 0.0
        %2668 = vmatprep.subr.mxu0 0.0
        %2669 = vmatpush1.msra.mxu0 0.0
        %2670 = vmatprep.subr.mxu0 0.0
        %2671 = vmatpush1.msra.mxu0 0.0
        %2672 = vmatprep.subr.mxu0 0.0
        %2673 = vmatpush1.msra.mxu0 0.0
        %2674 = vmatprep.subr.mxu0 0.0
        %2675 = vmatpush1.msra.mxu0 0.0
        %2676 = vmatprep.subr.mxu0 0.0
        %2677 = vmatpush1.msra.mxu0 0.0
        %2678 = vmatprep.subr.mxu0 0.0
        %2679 = vmatpush1.msra.mxu0 0.0
        %2680 = vmatprep.subr.mxu0 0.0
        %2681 = vmatpush1.msra.mxu0 0.0
        %2682 = vmatprep.subr.mxu0 0.0
        %2683 = vmatpush1.msra.mxu0 0.0
        %2684 = vmatprep.subr.mxu0 0.0
        %2685 = vmatpush1.msra.mxu0 0.0
        %2686 = vmatprep.subr.mxu0 0.0
        %2687 = vmatpush1.msra.mxu0 0.0
        %2688 = vmatprep.subr.mxu0 0.0
        %2689 = vmatpush1.msra.mxu0 0.0
        %2690 = vmatprep.subr.mxu0 0.0
        %2691 = vmatpush1.msra.mxu0 0.0
        %2692 = vmatprep.subr.mxu0 0.0
        %2693 = vmatpush1.msra.mxu0 0.0
        %2694 = vmatprep.subr.mxu0 0.0
        %2695 = vmatpush1.msra.mxu0 0.0
        %2696 = vmatprep.subr.mxu0 0.0
        %2697 = vmatpush1.msra.mxu0 0.0
        %2698 = vmatprep.subr.mxu0 0.0
        %2699 = vmatpush1.msra.mxu0 0.0
        %2700 = vmatprep.mubr.f32.mxu0 0.0
        %2701 = vmatmul.mubr.f32.gmra.mrb[0].mxu0 %v2447
        %v2702 = vpop.f32.mrb[0].mxu0
        %v2703 = vadd.f32 %v2432, %v2702
        %v2704 = vpop.f32.mrb[0].mxu0
        %v2705 = vadd.f32 %v2432, %v2704
        %2706 = vmatprep.mubr.f32.mxu0 0.0
        %2707 = vmatmul.mubr.f32.gmra.mrb[0].mxu0 %v2450
        %v2708 = vpop.f32.mrb[0].mxu0
        %v2709 = vadd.f32 %v2436, %v2708
        %v2710 = vpop.f32.mrb[0].mxu0
        %v2711 = vadd.f32 %v2436, %v2710
        %2712 = vmatprep.mubr.f32.mxu0 0.0
        %2713 = vmatmul.mubr.f32.gmra.mrb[0].mxu0 %v2453
        %v2714 = vpop.f32.mrb[0].mxu0
        %v2715 = vadd.f32 %v2440, %v2714
        %v2716 = vpop.f32.mrb[0].mxu0
        %v2717 = vadd.f32 %v2440, %v2716
        %2718 = vmatprep.mubr.f32.mxu0 0.0
        %2719 = vmatmul.mubr.f32.gmra.mrb[0].mxu0 %v2456
        %v2720 = vpop.f32.mrb[0].mxu0
        %v2721 = vadd.f32 %v2444, %v2720
        %v2722 = vpop.f32.mrb[0].mxu0
        %v2723 = vadd.f32 %v2444, %v2722
        %2724 = vdwg.mxu0
        %2725 = vmatprep.subr.mxu0 %v2400
        %2726 = vmatpush1.msra.mxu0 %v2399
        %2727 = vmatprep.subr.mxu0 %v2408
        %2728 = vmatpush1.msra.mxu0 %v2407
        %2729 = vmatprep.subr.mxu0 %v2416
        %2730 = vmatpush1.msra.mxu0 %v2415
        %2731 = vmatprep.subr.mxu0 %v2424
        %2732 = vmatpush1.msra.mxu0 %v2423
        %2733 = vmatprep.subr.mxu0 0.0
        %2734 = vmatpush1.msra.mxu0 0.0
        %2735 = vmatprep.subr.mxu0 0.0
        %2736 = vmatpush1.msra.mxu0 0.0
        %2737 = vmatprep.subr.mxu0 0.0
        %2738 = vmatpush1.msra.mxu0 0.0
        %2739 = vmatprep.subr.mxu0 0.0
        %2740 = vmatpush1.msra.mxu0 0.0
        %2741 = vmatprep.subr.mxu0 0.0
        %2742 = vmatpush1.msra.mxu0 0.0
        %2743 = vmatprep.subr.mxu0 0.0
        %2744 = vmatpush1.msra.mxu0 0.0
        %2745 = vmatprep.subr.mxu0 0.0
        %2746 = vmatpush1.msra.mxu0 0.0
        %2747 = vmatprep.subr.mxu0 0.0
        %2748 = vmatpush1.msra.mxu0 0.0
        %2749 = vmatprep.subr.mxu0 0.0
        %2750 = vmatpush1.msra.mxu0 0.0
        %2751 = vmatprep.subr.mxu0 0.0
        %2752 = vmatpush1.msra.mxu0 0.0
        %2753 = vmatprep.subr.mxu0 0.0
        %2754 = vmatpush1.msra.mxu0 0.0
        %2755 = vmatprep.subr.mxu0 0.0
        %2756 = vmatpush1.msra.mxu0 0.0
        %2757 = vmatprep.subr.mxu0 0.0
        %2758 = vmatpush1.msra.mxu0 0.0
        %2759 = vmatprep.subr.mxu0 0.0
        %2760 = vmatpush1.msra.mxu0 0.0
        %2761 = vmatprep.subr.mxu0 0.0
        %2762 = vmatpush1.msra.mxu0 0.0
        %2763 = vmatprep.subr.mxu0 0.0
        %2764 = vmatpush1.msra.mxu0 0.0
        %2765 = vmatprep.subr.mxu0 0.0
        %2766 = vmatpush1.msra.mxu0 0.0
        %2767 = vmatprep.subr.mxu0 0.0
        %2768 = vmatpush1.msra.mxu0 0.0
        %2769 = vmatprep.subr.mxu0 0.0
        %2770 = vmatpush1.msra.mxu0 0.0
        %2771 = vmatprep.subr.mxu0 0.0
        %2772 = vmatpush1.msra.mxu0 0.0
        %2773 = vmatprep.subr.mxu0 0.0
        %2774 = vmatpush1.msra.mxu0 0.0
        %2775 = vmatprep.subr.mxu0 0.0
        %2776 = vmatpush1.msra.mxu0 0.0
        %2777 = vmatprep.subr.mxu0 0.0
        %2778 = vmatpush1.msra.mxu0 0.0
        %2779 = vmatprep.subr.mxu0 0.0
        %2780 = vmatpush1.msra.mxu0 0.0
        %2781 = vmatprep.subr.mxu0 0.0
        %2782 = vmatpush1.msra.mxu0 0.0
        %2783 = vmatprep.subr.mxu0 0.0
        %2784 = vmatpush1.msra.mxu0 0.0
        %2785 = vmatprep.subr.mxu0 0.0
        %2786 = vmatpush1.msra.mxu0 0.0
        %2787 = vmatprep.subr.mxu0 0.0
        %2788 = vmatpush1.msra.mxu0 0.0
        %2789 = vmatprep.mubr.f32.mxu0 0.0
        %2790 = vmatmul.mubr.f32.gmra.mrb[0].mxu0 %v2447
        %v2791 = vpop.f32.mrb[0].mxu0
        %v2792 = vadd.f32 %v2432, %v2791
        %v2793 = vpop.f32.mrb[0].mxu0
        %v2794 = vadd.f32 %v2432, %v2793
        %2795 = vmatprep.mubr.f32.mxu0 0.0
        %2796 = vmatmul.mubr.f32.gmra.mrb[0].mxu0 %v2450
        %v2797 = vpop.f32.mrb[0].mxu0
        %v2798 = vadd.f32 %v2436, %v2797
        %v2799 = vpop.f32.mrb[0].mxu0
        %v2800 = vadd.f32 %v2436, %v2799
        %2801 = vmatprep.mubr.f32.mxu0 0.0
        %2802 = vmatmul.mubr.f32.gmra.mrb[0].mxu0 %v2453
        %v2803 = vpop.f32.mrb[0].mxu0
        %v2804 = vadd.f32 %v2440, %v2803
        %v2805 = vpop.f32.mrb[0].mxu0
        %v2806 = vadd.f32 %v2440, %v2805
        %2807 = vmatprep.mubr.f32.mxu0 0.0
        %2808 = vmatmul.mubr.f32.gmra.mrb[0].mxu0 %v2456
        %v2809 = vpop.f32.mrb[0].mxu0
        %v2810 = vadd.f32 %v2444, %v2809
        %v2811 = vpop.f32.mrb[0].mxu0
        %v2812 = vadd.f32 %v2444, %v2811
        %2813 = vdwg.mxu0
        %v2814 = vmul.f32 %v2525, 100.0
        %v2815 = vmul.f32 %v2527, 100.0
        %v2816 = vmul.f32 %v2614, 100.0
        %v2817 = vmul.f32 %v2616, 100.0
        %v2818 = vmul.f32 %v2703, 100.0
        %v2819 = vmul.f32 %v2705, 100.0
        %v2820 = vmul.f32 %v2792, 100.0
        %v2821 = vmul.f32 %v2794, 100.0
        %v2822 = vmul.f32 %v2531, 100.0
        %v2823 = vmul.f32 %v2533, 100.0
        %v2824 = vmul.f32 %v2620, 100.0
        %v2825 = vmul.f32 %v2622, 100.0
        %v2826 = vmul.f32 %v2709, 100.0
        %v2827 = vmul.f32 %v2711, 100.0
        %v2828 = vmul.f32 %v2798, 100.0
        %v2829 = vmul.f32 %v2800, 100.0
        %v2830 = vmul.f32 %v2537, 100.0
        %v2831 = vmul.f32 %v2539, 100.0
        %v2832 = vmul.f32 %v2626, 100.0
        %v2833 = vmul.f32 %v2628, 100.0
        %v2834 = vmul.f32 %v2715, 100.0
        %v2835 = vmul.f32 %v2717, 100.0
        %v2836 = vmul.f32 %v2804, 100.0
        %v2837 = vmul.f32 %v2806, 100.0
        %v2838 = vmul.f32 %v2543, 100.0
        %v2839 = vmul.f32 %v2545, 100.0
        %v2840 = vmul.f32 %v2632, 100.0
        %v2841 = vmul.f32 %v2634, 100.0
        %v2842 = vmul.f32 %v2721, 100.0
        %v2843 = vmul.f32 %v2723, 100.0
        %v2844 = vmul.f32 %v2810, 100.0
        %v2845 = vmul.f32 %v2812, 100.0
        %v2846 = vmin.f32 %v2814, 20.0
        %v2847 = vmin.f32 %v2815, 20.0
        %v2848 = vmin.f32 %v2816, 20.0
        %v2849 = vmin.f32 %v2817, 20.0
        %v2850 = vmin.f32 %v2818, 20.0
        %v2851 = vmin.f32 %v2819, 20.0
        %v2852 = vmin.f32 %v2820, 20.0
        %v2853 = vmin.f32 %v2821, 20.0
        %v2854 = vmin.f32 %v2822, 20.0
        %v2855 = vmin.f32 %v2823, 20.0
        %v2856 = vmin.f32 %v2824, 20.0
        %v2857 = vmin.f32 %v2825, 20.0
        %v2858 = vmin.f32 %v2826, 20.0
        %v2859 = vmin.f32 %v2827, 20.0
        %v2860 = vmin.f32 %v2828, 20.0
        %v2861 = vmin.f32 %v2829, 20.0
        %v2862 = vmin.f32 %v2830, 20.0
        %v2863 = vmin.f32 %v2831, 20.0
        %v2864 = vmin.f32 %v2832, 20.0
        %v2865 = vmin.f32 %v2833, 20.0
        %v2866 = vmin.f32 %v2834, 20.0
        %v2867 = vmin.f32 %v2835, 20.0
        %v2868 = vmin.f32 %v2836, 20.0
        %v2869 = vmin.f32 %v2837, 20.0
        %v2870 = vmin.f32 %v2838, 20.0
        %v2871 = vmin.f32 %v2839, 20.0
        %v2872 = vmin.f32 %v2840, 20.0
        %v2873 = vmin.f32 %v2841, 20.0
        %v2874 = vmin.f32 %v2842, 20.0
        %v2875 = vmin.f32 %v2843, 20.0
        %v2876 = vmin.f32 %v2844, 20.0
        %v2877 = vmin.f32 %v2845, 20.0
        %v2878 = vmul.f32 %v2846, 1.442695
        %v2879 = vpow.pop %v2878
        %v2880 = vmul.f32 %v2847, 1.442695
        %v2881 = vpow.pop %v2880
        %v2882 = vmul.f32 %v2848, 1.442695
        %v2883 = vpow.pop %v2882
        %v2884 = vmul.f32 %v2849, 1.442695
        %v2885 = vpow.pop %v2884
        %v2886 = vmul.f32 %v2850, 1.442695
        %v2887 = vpow.pop %v2886
        %v2888 = vmul.f32 %v2851, 1.442695
        %v2889 = vpow.pop %v2888
        %v2890 = vmul.f32 %v2852, 1.442695
        %v2891 = vpow.pop %v2890
        %v2892 = vmul.f32 %v2853, 1.442695
        %v2893 = vpow.pop %v2892
        %v2894 = vmul.f32 %v2854, 1.442695
        %v2895 = vpow.pop %v2894
        %v2896 = vmul.f32 %v2855, 1.442695
        %v2897 = vpow.pop %v2896
        %v2898 = vmul.f32 %v2856, 1.442695
        %v2899 = vpow.pop %v2898
        %v2900 = vmul.f32 %v2857, 1.442695
        %v2901 = vpow.pop %v2900
        %v2902 = vmul.f32 %v2858, 1.442695
        %v2903 = vpow.pop %v2902
        %v2904 = vmul.f32 %v2859, 1.442695
        %v2905 = vpow.pop %v2904
        %v2906 = vmul.f32 %v2860, 1.442695
        %v2907 = vpow.pop %v2906
        %v2908 = vmul.f32 %v2861, 1.442695
        %v2909 = vpow.pop %v2908
        %v2910 = vmul.f32 %v2862, 1.442695
        %v2911 = vpow.pop %v2910
        %v2912 = vmul.f32 %v2863, 1.442695
        %v2913 = vpow.pop %v2912
        %v2914 = vmul.f32 %v2864, 1.442695
        %v2915 = vpow.pop %v2914
        %v2916 = vmul.f32 %v2865, 1.442695
        %v2917 = vpow.pop %v2916
        %v2918 = vmul.f32 %v2866, 1.442695
        %v2919 = vpow.pop %v2918
        %v2920 = vmul.f32 %v2867, 1.442695
        %v2921 = vpow.pop %v2920
        %v2922 = vmul.f32 %v2868, 1.442695
        %v2923 = vpow.pop %v2922
        %v2924 = vmul.f32 %v2869, 1.442695
        %v2925 = vpow.pop %v2924
        %v2926 = vmul.f32 %v2870, 1.442695
        %v2927 = vpow.pop %v2926
        %v2928 = vmul.f32 %v2871, 1.442695
        %v2929 = vpow.pop %v2928
        %v2930 = vmul.f32 %v2872, 1.442695
        %v2931 = vpow.pop %v2930
        %v2932 = vmul.f32 %v2873, 1.442695
        %v2933 = vpow.pop %v2932
        %v2934 = vmul.f32 %v2874, 1.442695
        %v2935 = vpow.pop %v2934
        %v2936 = vmul.f32 %v2875, 1.442695
        %v2937 = vpow.pop %v2936
        %v2938 = vmul.f32 %v2876, 1.442695
        %v2939 = vpow.pop %v2938
        %v2940 = vmul.f32 %v2877, 1.442695
        %v2941 = vpow.pop %v2940
        %v2942 = vadd.f32 %v2879, 1.0
        %v2943 = vadd.f32 %v2881, 1.0
        %v2944 = vadd.f32 %v2883, 1.0
        %v2945 = vadd.f32 %v2885, 1.0
        %v2946 = vadd.f32 %v2887, 1.0
        %v2947 = vadd.f32 %v2889, 1.0
        %v2948 = vadd.f32 %v2891, 1.0
        %v2949 = vadd.f32 %v2893, 1.0
        %v2950 = vadd.f32 %v2895, 1.0
        %v2951 = vadd.f32 %v2897, 1.0
        %v2952 = vadd.f32 %v2899, 1.0
        %v2953 = vadd.f32 %v2901, 1.0
        %v2954 = vadd.f32 %v2903, 1.0
        %v2955 = vadd.f32 %v2905, 1.0
        %v2956 = vadd.f32 %v2907, 1.0
        %v2957 = vadd.f32 %v2909, 1.0
        %v2958 = vadd.f32 %v2911, 1.0
        %v2959 = vadd.f32 %v2913, 1.0
        %v2960 = vadd.f32 %v2915, 1.0
        %v2961 = vadd.f32 %v2917, 1.0
        %v2962 = vadd.f32 %v2919, 1.0
        %v2963 = vadd.f32 %v2921, 1.0
        %v2964 = vadd.f32 %v2923, 1.0
        %v2965 = vadd.f32 %v2925, 1.0
        %v2966 = vadd.f32 %v2927, 1.0
        %v2967 = vadd.f32 %v2929, 1.0
        %v2968 = vadd.f32 %v2931, 1.0
        %v2969 = vadd.f32 %v2933, 1.0
        %v2970 = vadd.f32 %v2935, 1.0
        %v2971 = vadd.f32 %v2937, 1.0
        %v2972 = vadd.f32 %v2939, 1.0
        %v2973 = vadd.f32 %v2941, 1.0
        %v2974 = vlog2.pop %v2942
        %v2975 = vmul.f32 %v2974, 0.6931472
        %v2976 = vlog2.pop %v2943
        %v2977 = vmul.f32 %v2976, 0.6931472
        %v2978 = vlog2.pop %v2944
        %v2979 = vmul.f32 %v2978, 0.6931472
        %v2980 = vlog2.pop %v2945
        %v2981 = vmul.f32 %v2980, 0.6931472
        %v2982 = vlog2.pop %v2946
        %v2983 = vmul.f32 %v2982, 0.6931472
        %v2984 = vlog2.pop %v2947
        %v2985 = vmul.f32 %v2984, 0.6931472
        %v2986 = vlog2.pop %v2948
        %v2987 = vmul.f32 %v2986, 0.6931472
        %v2988 = vlog2.pop %v2949
        %v2989 = vmul.f32 %v2988, 0.6931472
        %v2990 = vlog2.pop %v2950
        %v2991 = vmul.f32 %v2990, 0.6931472
        %v2992 = vlog2.pop %v2951
        %v2993 = vmul.f32 %v2992, 0.6931472
        %v2994 = vlog2.pop %v2952
        %v2995 = vmul.f32 %v2994, 0.6931472
        %v2996 = vlog2.pop %v2953
        %v2997 = vmul.f32 %v2996, 0.6931472
        %v2998 = vlog2.pop %v2954
        %v2999 = vmul.f32 %v2998, 0.6931472
        %v3000 = vlog2.pop %v2955
        %v3001 = vmul.f32 %v3000, 0.6931472
        %v3002 = vlog2.pop %v2956
        %v3003 = vmul.f32 %v3002, 0.6931472
        %v3004 = vlog2.pop %v2957
        %v3005 = vmul.f32 %v3004, 0.6931472
        %v3006 = vlog2.pop %v2958
        %v3007 = vmul.f32 %v3006, 0.6931472
        %v3008 = vlog2.pop %v2959
        %v3009 = vmul.f32 %v3008, 0.6931472
        %v3010 = vlog2.pop %v2960
        %v3011 = vmul.f32 %v3010, 0.6931472
        %v3012 = vlog2.pop %v2961
        %v3013 = vmul.f32 %v3012, 0.6931472
        %v3014 = vlog2.pop %v2962
        %v3015 = vmul.f32 %v3014, 0.6931472
        %v3016 = vlog2.pop %v2963
        %v3017 = vmul.f32 %v3016, 0.6931472
        %v3018 = vlog2.pop %v2964
        %v3019 = vmul.f32 %v3018, 0.6931472
        %v3020 = vlog2.pop %v2965
        %v3021 = vmul.f32 %v3020, 0.6931472
        %v3022 = vlog2.pop %v2966
        %v3023 = vmul.f32 %v3022, 0.6931472
        %v3024 = vlog2.pop %v2967
        %v3025 = vmul.f32 %v3024, 0.6931472
        %v3026 = vlog2.pop %v2968
        %v3027 = vmul.f32 %v3026, 0.6931472
        %v3028 = vlog2.pop %v2969
        %v3029 = vmul.f32 %v3028, 0.6931472
        %v3030 = vlog2.pop %v2970
        %v3031 = vmul.f32 %v3030, 0.6931472
        %v3032 = vlog2.pop %v2971
        %v3033 = vmul.f32 %v3032, 0.6931472
        %v3034 = vlog2.pop %v2972
        %v3035 = vmul.f32 %v3034, 0.6931472
        %v3036 = vlog2.pop %v2973
        %v3037 = vmul.f32 %v3036, 0.6931472
        %v3038 = vmul.f32 %v2975, %v910
        %v3039 = vmul.f32 %v2977, %v910
        %v3040 = vmul.f32 %v2979, %v910
        %v3041 = vmul.f32 %v2981, %v910
        %v3042 = vmul.f32 %v2983, %v910
        %v3043 = vmul.f32 %v2985, %v910
        %v3044 = vmul.f32 %v2987, %v910
        %v3045 = vmul.f32 %v2989, %v910
        %v3046 = vmul.f32 %v2991, %v910
        %v3047 = vmul.f32 %v2993, %v910
        %v3048 = vmul.f32 %v2995, %v910
        %v3049 = vmul.f32 %v2997, %v910
        %v3050 = vmul.f32 %v2999, %v910
        %v3051 = vmul.f32 %v3001, %v910
        %v3052 = vmul.f32 %v3003, %v910
        %v3053 = vmul.f32 %v3005, %v910
        %v3054 = vmul.f32 %v3007, %v910
        %v3055 = vmul.f32 %v3009, %v910
        %v3056 = vmul.f32 %v3011, %v910
        %v3057 = vmul.f32 %v3013, %v910
        %v3058 = vmul.f32 %v3015, %v910
        %v3059 = vmul.f32 %v3017, %v910
        %v3060 = vmul.f32 %v3019, %v910
        %v3061 = vmul.f32 %v3021, %v910
        %v3062 = vmul.f32 %v3023, %v910
        %v3063 = vmul.f32 %v3025, %v910
        %v3064 = vmul.f32 %v3027, %v910
        %v3065 = vmul.f32 %v3029, %v910
        %v3066 = vmul.f32 %v3031, %v910
        %v3067 = vmul.f32 %v3033, %v910
        %v3068 = vmul.f32 %v3035, %v910
        %v3069 = vmul.f32 %v3037, %v910
        %vm3070 = vcmp.gt.f32.partialorder %v2814, 20.0
        %vm3071 = vcmp.gt.f32.partialorder %v2815, 20.0
        %vm3072 = vcmp.gt.f32.partialorder %v2816, 20.0
        %vm3073 = vcmp.gt.f32.partialorder %v2817, 20.0
        %vm3074 = vcmp.gt.f32.partialorder %v2818, 20.0
        %vm3075 = vcmp.gt.f32.partialorder %v2819, 20.0
        %vm3076 = vcmp.gt.f32.partialorder %v2820, 20.0
        %vm3077 = vcmp.gt.f32.partialorder %v2821, 20.0
        %vm3078 = vcmp.gt.f32.partialorder %v2822, 20.0
        %vm3079 = vcmp.gt.f32.partialorder %v2823, 20.0
        %vm3080 = vcmp.gt.f32.partialorder %v2824, 20.0
        %vm3081 = vcmp.gt.f32.partialorder %v2825, 20.0
        %vm3082 = vcmp.gt.f32.partialorder %v2826, 20.0
        %vm3083 = vcmp.gt.f32.partialorder %v2827, 20.0
        %vm3084 = vcmp.gt.f32.partialorder %v2828, 20.0
        %vm3085 = vcmp.gt.f32.partialorder %v2829, 20.0
        %vm3086 = vcmp.gt.f32.partialorder %v2830, 20.0
        %vm3087 = vcmp.gt.f32.partialorder %v2831, 20.0
        %vm3088 = vcmp.gt.f32.partialorder %v2832, 20.0
        %vm3089 = vcmp.gt.f32.partialorder %v2833, 20.0
        %vm3090 = vcmp.gt.f32.partialorder %v2834, 20.0
        %vm3091 = vcmp.gt.f32.partialorder %v2835, 20.0
        %vm3092 = vcmp.gt.f32.partialorder %v2836, 20.0
        %vm3093 = vcmp.gt.f32.partialorder %v2837, 20.0
        %vm3094 = vcmp.gt.f32.partialorder %v2838, 20.0
        %vm3095 = vcmp.gt.f32.partialorder %v2839, 20.0
        %vm3096 = vcmp.gt.f32.partialorder %v2840, 20.0
        %vm3097 = vcmp.gt.f32.partialorder %v2841, 20.0
        %vm3098 = vcmp.gt.f32.partialorder %v2842, 20.0
        %vm3099 = vcmp.gt.f32.partialorder %v2843, 20.0
        %vm3100 = vcmp.gt.f32.partialorder %v2844, 20.0
        %vm3101 = vcmp.gt.f32.partialorder %v2845, 20.0
        %v3102 = vsel %vm3070, %v2525, %v3038
        %v3103 = vsel %vm3071, %v2527, %v3039
        %v3104 = vsel %vm3072, %v2614, %v3040
        %v3105 = vsel %vm3073, %v2616, %v3041
        %v3106 = vsel %vm3074, %v2703, %v3042
        %v3107 = vsel %vm3075, %v2705, %v3043
        %v3108 = vsel %vm3076, %v2792, %v3044
        %v3109 = vsel %vm3077, %v2794, %v3045
        %v3110 = vsel %vm3078, %v2531, %v3046
        %v3111 = vsel %vm3079, %v2533, %v3047
        %v3112 = vsel %vm3080, %v2620, %v3048
        %v3113 = vsel %vm3081, %v2622, %v3049
        %v3114 = vsel %vm3082, %v2709, %v3050
        %v3115 = vsel %vm3083, %v2711, %v3051
        %v3116 = vsel %vm3084, %v2798, %v3052
        %v3117 = vsel %vm3085, %v2800, %v3053
        %v3118 = vsel %vm3086, %v2537, %v3054
        %v3119 = vsel %vm3087, %v2539, %v3055
        %v3120 = vsel %vm3088, %v2626, %v3056
        %v3121 = vsel %vm3089, %v2628, %v3057
        %v3122 = vsel %vm3090, %v2715, %v3058
        %v3123 = vsel %vm3091, %v2717, %v3059
        %v3124 = vsel %vm3092, %v2804, %v3060
        %v3125 = vsel %vm3093, %v2806, %v3061
        %v3126 = vsel %vm3094, %v2543, %v3062
        %v3127 = vsel %vm3095, %v2545, %v3063
        %v3128 = vsel %vm3096, %v2632, %v3064
        %v3129 = vsel %vm3097, %v2634, %v3065
        %v3130 = vsel %vm3098, %v2721, %v3066
        %v3131 = vsel %vm3099, %v2723, %v3067
        %v3132 = vsel %vm3100, %v2810, %v3068
        %v3133 = vsel %vm3101, %v2812, %v3069
        %v3134 = vld [vmem:[#allocation5 + $0x20] sm:$0xff]
        %v3135 = vld [vmem:[#allocation5 + $0x28] sm:$0xff]
        %v3136 = vld [vmem:[#allocation5 + $0x30] sm:$0xff]
        %v3137 = vld [vmem:[#allocation5 + $0x38] sm:$0xff]
        %v3139 = vsel %vm300, %v3134, 0
        %v3142 = vsel %vm300, %v3135, 0
        %v3145 = vsel %vm300, %v3136, 0
        %v3148 = vsel %vm300, %v3137, 0
        %3150 = vmatprep.subr.mxu0 %v316
        %3151 = vmatpush1.msra.mxu0 %v314
        %3152 = vmatprep.subr.mxu0 0.0
        %3153 = vmatpush1.msra.mxu0 0.0
        %3154 = vmatprep.subr.mxu0 0.0
        %3155 = vmatpush1.msra.mxu0 0.0
        %3156 = vmatprep.subr.mxu0 0.0
        %3157 = vmatpush1.msra.mxu0 0.0
        %3158 = vmatprep.subr.mxu0 0.0
        %3159 = vmatpush1.msra.mxu0 0.0
        %3160 = vmatprep.subr.mxu0 0.0
        %3161 = vmatpush1.msra.mxu0 0.0
        %3162 = vmatprep.subr.mxu0 0.0
        %3163 = vmatpush1.msra.mxu0 0.0
        %3164 = vmatprep.subr.mxu0 0.0
        %3165 = vmatpush1.msra.mxu0 0.0
        %3166 = vmatprep.subr.mxu0 0.0
        %3167 = vmatpush1.msra.mxu0 0.0
        %3168 = vmatprep.subr.mxu0 0.0
        %3169 = vmatpush1.msra.mxu0 0.0
        %3170 = vmatprep.subr.mxu0 0.0
        %3171 = vmatpush1.msra.mxu0 0.0
        %3172 = vmatprep.subr.mxu0 0.0
        %3173 = vmatpush1.msra.mxu0 0.0
        %3174 = vmatprep.subr.mxu0 0.0
        %3175 = vmatpush1.msra.mxu0 0.0
        %3176 = vmatprep.subr.mxu0 0.0
        %3177 = vmatpush1.msra.mxu0 0.0
        %3178 = vmatprep.subr.mxu0 0.0
        %3179 = vmatpush1.msra.mxu0 0.0
        %3180 = vmatprep.subr.mxu0 0.0
        %3181 = vmatpush1.msra.mxu0 0.0
        %3182 = vmatprep.subr.mxu0 0.0
        %3183 = vmatpush1.msra.mxu0 0.0
        %3184 = vmatprep.subr.mxu0 0.0
        %3185 = vmatpush1.msra.mxu0 0.0
        %3186 = vmatprep.subr.mxu0 0.0
        %3187 = vmatpush1.msra.mxu0 0.0
        %3188 = vmatprep.subr.mxu0 0.0
        %3189 = vmatpush1.msra.mxu0 0.0
        %3190 = vmatprep.subr.mxu0 0.0
        %3191 = vmatpush1.msra.mxu0 0.0
        %3192 = vmatprep.subr.mxu0 0.0
        %3193 = vmatpush1.msra.mxu0 0.0
        %3194 = vmatprep.subr.mxu0 0.0
        %3195 = vmatpush1.msra.mxu0 0.0
        %3196 = vmatprep.subr.mxu0 0.0
        %3197 = vmatpush1.msra.mxu0 0.0
        %3198 = vmatprep.subr.mxu0 0.0
        %3199 = vmatpush1.msra.mxu0 0.0
        %3200 = vmatprep.subr.mxu0 0.0
        %3201 = vmatpush1.msra.mxu0 0.0
        %3202 = vmatprep.subr.mxu0 0.0
        %3203 = vmatpush1.msra.mxu0 0.0
        %3204 = vmatprep.subr.mxu0 0.0
        %3205 = vmatpush1.msra.mxu0 0.0
        %3206 = vmatprep.subr.mxu0 0.0
        %3207 = vmatpush1.msra.mxu0 0.0
        %3208 = vmatprep.subr.mxu0 0.0
        %3209 = vmatpush1.msra.mxu0 0.0
        %3210 = vmatprep.subr.mxu0 0.0
        %3211 = vmatpush1.msra.mxu0 0.0
        %3212 = vmatprep.subr.mxu0 0.0
        %3213 = vmatpush1.msra.mxu0 0.0
        %3214 = vmatprep.mubr.f32.mxu0 0.0
        %3215 = vmatmul.mubr.f32.gmra.mrb[0].mxu0 %v3139
        %v3216 = vpop.f32.mrb[0].mxu0
        %v3217 = vadd.f32 0.0, %v3216
        %v3218 = vpop.f32.mrb[0].mxu0
        %v3219 = vadd.f32 0.0, %v3218
        %3220 = vmatprep.mubr.f32.mxu0 0.0
        %3221 = vmatmul.mubr.f32.gmra.mrb[0].mxu0 %v3142
        %v3222 = vpop.f32.mrb[0].mxu0
        %v3223 = vadd.f32 0.0, %v3222
        %v3224 = vpop.f32.mrb[0].mxu0
        %v3225 = vadd.f32 0.0, %v3224
        %3226 = vmatprep.mubr.f32.mxu0 0.0
        %3227 = vmatmul.mubr.f32.gmra.mrb[0].mxu0 %v3145
        %v3228 = vpop.f32.mrb[0].mxu0
        %v3229 = vadd.f32 0.0, %v3228
        %v3230 = vpop.f32.mrb[0].mxu0
        %v3231 = vadd.f32 0.0, %v3230
        %3232 = vmatprep.mubr.f32.mxu0 0.0
        %3233 = vmatmul.mubr.f32.gmra.mrb[0].mxu0 %v3148
        %v3234 = vpop.f32.mrb[0].mxu0
        %v3235 = vadd.f32 0.0, %v3234
        %v3236 = vpop.f32.mrb[0].mxu0
        %v3237 = vadd.f32 0.0, %v3236
        %3238 = vdwg.mxu0
        %3239 = vmatprep.subr.mxu0 %v320
        %3240 = vmatpush1.msra.mxu0 %v318
        %3241 = vmatprep.subr.mxu0 0.0
        %3242 = vmatpush1.msra.mxu0 0.0
        %3243 = vmatprep.subr.mxu0 0.0
        %3244 = vmatpush1.msra.mxu0 0.0
        %3245 = vmatprep.subr.mxu0 0.0
        %3246 = vmatpush1.msra.mxu0 0.0
        %3247 = vmatprep.subr.mxu0 0.0
        %3248 = vmatpush1.msra.mxu0 0.0
        %3249 = vmatprep.subr.mxu0 0.0
        %3250 = vmatpush1.msra.mxu0 0.0
        %3251 = vmatprep.subr.mxu0 0.0
        %3252 = vmatpush1.msra.mxu0 0.0
        %3253 = vmatprep.subr.mxu0 0.0
        %3254 = vmatpush1.msra.mxu0 0.0
        %3255 = vmatprep.subr.mxu0 0.0
        %3256 = vmatpush1.msra.mxu0 0.0
        %3257 = vmatprep.subr.mxu0 0.0
        %3258 = vmatpush1.msra.mxu0 0.0
        %3259 = vmatprep.subr.mxu0 0.0
        %3260 = vmatpush1.msra.mxu0 0.0
        %3261 = vmatprep.subr.mxu0 0.0
        %3262 = vmatpush1.msra.mxu0 0.0
        %3263 = vmatprep.subr.mxu0 0.0
        %3264 = vmatpush1.msra.mxu0 0.0
        %3265 = vmatprep.subr.mxu0 0.0
        %3266 = vmatpush1.msra.mxu0 0.0
        %3267 = vmatprep.subr.mxu0 0.0
        %3268 = vmatpush1.msra.mxu0 0.0
        %3269 = vmatprep.subr.mxu0 0.0
        %3270 = vmatpush1.msra.mxu0 0.0
        %3271 = vmatprep.subr.mxu0 0.0
        %3272 = vmatpush1.msra.mxu0 0.0
        %3273 = vmatprep.subr.mxu0 0.0
        %3274 = vmatpush1.msra.mxu0 0.0
        %3275 = vmatprep.subr.mxu0 0.0
        %3276 = vmatpush1.msra.mxu0 0.0
        %3277 = vmatprep.subr.mxu0 0.0
        %3278 = vmatpush1.msra.mxu0 0.0
        %3279 = vmatprep.subr.mxu0 0.0
        %3280 = vmatpush1.msra.mxu0 0.0
        %3281 = vmatprep.subr.mxu0 0.0
        %3282 = vmatpush1.msra.mxu0 0.0
        %3283 = vmatprep.subr.mxu0 0.0
        %3284 = vmatpush1.msra.mxu0 0.0
        %3285 = vmatprep.subr.mxu0 0.0
        %3286 = vmatpush1.msra.mxu0 0.0
        %3287 = vmatprep.subr.mxu0 0.0
        %3288 = vmatpush1.msra.mxu0 0.0
        %3289 = vmatprep.subr.mxu0 0.0
        %3290 = vmatpush1.msra.mxu0 0.0
        %3291 = vmatprep.subr.mxu0 0.0
        %3292 = vmatpush1.msra.mxu0 0.0
        %3293 = vmatprep.subr.mxu0 0.0
        %3294 = vmatpush1.msra.mxu0 0.0
        %3295 = vmatprep.subr.mxu0 0.0
        %3296 = vmatpush1.msra.mxu0 0.0
        %3297 = vmatprep.subr.mxu0 0.0
        %3298 = vmatpush1.msra.mxu0 0.0
        %3299 = vmatprep.subr.mxu0 0.0
        %3300 = vmatpush1.msra.mxu0 0.0
        %3301 = vmatprep.subr.mxu0 0.0
        %3302 = vmatpush1.msra.mxu0 0.0
        %3303 = vmatprep.mubr.f32.mxu0 0.0
        %3304 = vmatmul.mubr.f32.gmra.mrb[0].mxu0 %v3139
        %v3305 = vpop.f32.mrb[0].mxu0
        %v3306 = vadd.f32 0.0, %v3305
        %v3307 = vpop.f32.mrb[0].mxu0
        %v3308 = vadd.f32 0.0, %v3307
        %3309 = vmatprep.mubr.f32.mxu0 0.0
        %3310 = vmatmul.mubr.f32.gmra.mrb[0].mxu0 %v3142
        %v3311 = vpop.f32.mrb[0].mxu0
        %v3312 = vadd.f32 0.0, %v3311
        %v3313 = vpop.f32.mrb[0].mxu0
        %v3314 = vadd.f32 0.0, %v3313
        %3315 = vmatprep.mubr.f32.mxu0 0.0
        %3316 = vmatmul.mubr.f32.gmra.mrb[0].mxu0 %v3145
        %v3317 = vpop.f32.mrb[0].mxu0
        %v3318 = vadd.f32 0.0, %v3317
        %v3319 = vpop.f32.mrb[0].mxu0
        %v3320 = vadd.f32 0.0, %v3319
        %3321 = vmatprep.mubr.f32.mxu0 0.0
        %3322 = vmatmul.mubr.f32.gmra.mrb[0].mxu0 %v3148
        %v3323 = vpop.f32.mrb[0].mxu0
        %v3324 = vadd.f32 0.0, %v3323
        %v3325 = vpop.f32.mrb[0].mxu0
        %v3326 = vadd.f32 0.0, %v3325
        %3327 = vdwg.mxu0
        %3328 = vmatprep.subr.mxu0 %v324
        %3329 = vmatpush1.msra.mxu0 %v322
        %3330 = vmatprep.subr.mxu0 0.0
        %3331 = vmatpush1.msra.mxu0 0.0
        %3332 = vmatprep.subr.mxu0 0.0
        %3333 = vmatpush1.msra.mxu0 0.0
        %3334 = vmatprep.subr.mxu0 0.0
        %3335 = vmatpush1.msra.mxu0 0.0
        %3336 = vmatprep.subr.mxu0 0.0
        %3337 = vmatpush1.msra.mxu0 0.0
        %3338 = vmatprep.subr.mxu0 0.0
        %3339 = vmatpush1.msra.mxu0 0.0
        %3340 = vmatprep.subr.mxu0 0.0
        %3341 = vmatpush1.msra.mxu0 0.0
        %3342 = vmatprep.subr.mxu0 0.0
        %3343 = vmatpush1.msra.mxu0 0.0
        %3344 = vmatprep.subr.mxu0 0.0
        %3345 = vmatpush1.msra.mxu0 0.0
        %3346 = vmatprep.subr.mxu0 0.0
        %3347 = vmatpush1.msra.mxu0 0.0
        %3348 = vmatprep.subr.mxu0 0.0
        %3349 = vmatpush1.msra.mxu0 0.0
        %3350 = vmatprep.subr.mxu0 0.0
        %3351 = vmatpush1.msra.mxu0 0.0
        %3352 = vmatprep.subr.mxu0 0.0
        %3353 = vmatpush1.msra.mxu0 0.0
        %3354 = vmatprep.subr.mxu0 0.0
        %3355 = vmatpush1.msra.mxu0 0.0
        %3356 = vmatprep.subr.mxu0 0.0
        %3357 = vmatpush1.msra.mxu0 0.0
        %3358 = vmatprep.subr.mxu0 0.0
        %3359 = vmatpush1.msra.mxu0 0.0
        %3360 = vmatprep.subr.mxu0 0.0
        %3361 = vmatpush1.msra.mxu0 0.0
        %3362 = vmatprep.subr.mxu0 0.0
        %3363 = vmatpush1.msra.mxu0 0.0
        %3364 = vmatprep.subr.mxu0 0.0
        %3365 = vmatpush1.msra.mxu0 0.0
        %3366 = vmatprep.subr.mxu0 0.0
        %3367 = vmatpush1.msra.mxu0 0.0
        %3368 = vmatprep.subr.mxu0 0.0
        %3369 = vmatpush1.msra.mxu0 0.0
        %3370 = vmatprep.subr.mxu0 0.0
        %3371 = vmatpush1.msra.mxu0 0.0
        %3372 = vmatprep.subr.mxu0 0.0
        %3373 = vmatpush1.msra.mxu0 0.0
        %3374 = vmatprep.subr.mxu0 0.0
        %3375 = vmatpush1.msra.mxu0 0.0
        %3376 = vmatprep.subr.mxu0 0.0
        %3377 = vmatpush1.msra.mxu0 0.0
        %3378 = vmatprep.subr.mxu0 0.0
        %3379 = vmatpush1.msra.mxu0 0.0
        %3380 = vmatprep.subr.mxu0 0.0
        %3381 = vmatpush1.msra.mxu0 0.0
        %3382 = vmatprep.subr.mxu0 0.0
        %3383 = vmatpush1.msra.mxu0 0.0
        %3384 = vmatprep.subr.mxu0 0.0
        %3385 = vmatpush1.msra.mxu0 0.0
        %3386 = vmatprep.subr.mxu0 0.0
        %3387 = vmatpush1.msra.mxu0 0.0
        %3388 = vmatprep.subr.mxu0 0.0
        %3389 = vmatpush1.msra.mxu0 0.0
        %3390 = vmatprep.subr.mxu0 0.0
        %3391 = vmatpush1.msra.mxu0 0.0
        %3392 = vmatprep.mubr.f32.mxu0 0.0
        %3393 = vmatmul.mubr.f32.gmra.mrb[0].mxu0 %v3139
        %v3394 = vpop.f32.mrb[0].mxu0
        %v3395 = vadd.f32 0.0, %v3394
        %v3396 = vpop.f32.mrb[0].mxu0
        %v3397 = vadd.f32 0.0, %v3396
        %3398 = vmatprep.mubr.f32.mxu0 0.0
        %3399 = vmatmul.mubr.f32.gmra.mrb[0].mxu0 %v3142
        %v3400 = vpop.f32.mrb[0].mxu0
        %v3401 = vadd.f32 0.0, %v3400
        %v3402 = vpop.f32.mrb[0].mxu0
        %v3403 = vadd.f32 0.0, %v3402
        %3404 = vmatprep.mubr.f32.mxu0 0.0
        %3405 = vmatmul.mubr.f32.gmra.mrb[0].mxu0 %v3145
        %v3406 = vpop.f32.mrb[0].mxu0
        %v3407 = vadd.f32 0.0, %v3406
        %v3408 = vpop.f32.mrb[0].mxu0
        %v3409 = vadd.f32 0.0, %v3408
        %3410 = vmatprep.mubr.f32.mxu0 0.0
        %3411 = vmatmul.mubr.f32.gmra.mrb[0].mxu0 %v3148
        %v3412 = vpop.f32.mrb[0].mxu0
        %v3413 = vadd.f32 0.0, %v3412
        %v3414 = vpop.f32.mrb[0].mxu0
        %v3415 = vadd.f32 0.0, %v3414
        %3416 = vdwg.mxu0
        %3417 = vmatprep.subr.mxu0 %v328
        %3418 = vmatpush1.msra.mxu0 %v326
        %3419 = vmatprep.subr.mxu0 0.0
        %3420 = vmatpush1.msra.mxu0 0.0
        %3421 = vmatprep.subr.mxu0 0.0
        %3422 = vmatpush1.msra.mxu0 0.0
        %3423 = vmatprep.subr.mxu0 0.0
        %3424 = vmatpush1.msra.mxu0 0.0
        %3425 = vmatprep.subr.mxu0 0.0
        %3426 = vmatpush1.msra.mxu0 0.0
        %3427 = vmatprep.subr.mxu0 0.0
        %3428 = vmatpush1.msra.mxu0 0.0
        %3429 = vmatprep.subr.mxu0 0.0
        %3430 = vmatpush1.msra.mxu0 0.0
        %3431 = vmatprep.subr.mxu0 0.0
        %3432 = vmatpush1.msra.mxu0 0.0
        %3433 = vmatprep.subr.mxu0 0.0
        %3434 = vmatpush1.msra.mxu0 0.0
        %3435 = vmatprep.subr.mxu0 0.0
        %3436 = vmatpush1.msra.mxu0 0.0
        %3437 = vmatprep.subr.mxu0 0.0
        %3438 = vmatpush1.msra.mxu0 0.0
        %3439 = vmatprep.subr.mxu0 0.0
        %3440 = vmatpush1.msra.mxu0 0.0
        %3441 = vmatprep.subr.mxu0 0.0
        %3442 = vmatpush1.msra.mxu0 0.0
        %3443 = vmatprep.subr.mxu0 0.0
        %3444 = vmatpush1.msra.mxu0 0.0
        %3445 = vmatprep.subr.mxu0 0.0
        %3446 = vmatpush1.msra.mxu0 0.0
        %3447 = vmatprep.subr.mxu0 0.0
        %3448 = vmatpush1.msra.mxu0 0.0
        %3449 = vmatprep.subr.mxu0 0.0
        %3450 = vmatpush1.msra.mxu0 0.0
        %3451 = vmatprep.subr.mxu0 0.0
        %3452 = vmatpush1.msra.mxu0 0.0
        %3453 = vmatprep.subr.mxu0 0.0
        %3454 = vmatpush1.msra.mxu0 0.0
        %3455 = vmatprep.subr.mxu0 0.0
        %3456 = vmatpush1.msra.mxu0 0.0
        %3457 = vmatprep.subr.mxu0 0.0
        %3458 = vmatpush1.msra.mxu0 0.0
        %3459 = vmatprep.subr.mxu0 0.0
        %3460 = vmatpush1.msra.mxu0 0.0
        %3461 = vmatprep.subr.mxu0 0.0
        %3462 = vmatpush1.msra.mxu0 0.0
        %3463 = vmatprep.subr.mxu0 0.0
        %3464 = vmatpush1.msra.mxu0 0.0
        %3465 = vmatprep.subr.mxu0 0.0
        %3466 = vmatpush1.msra.mxu0 0.0
        %3467 = vmatprep.subr.mxu0 0.0
        %3468 = vmatpush1.msra.mxu0 0.0
        %3469 = vmatprep.subr.mxu0 0.0
        %3470 = vmatpush1.msra.mxu0 0.0
        %3471 = vmatprep.subr.mxu0 0.0
        %3472 = vmatpush1.msra.mxu0 0.0
        %3473 = vmatprep.subr.mxu0 0.0
        %3474 = vmatpush1.msra.mxu0 0.0
        %3475 = vmatprep.subr.mxu0 0.0
        %3476 = vmatpush1.msra.mxu0 0.0
        %3477 = vmatprep.subr.mxu0 0.0
        %3478 = vmatpush1.msra.mxu0 0.0
        %3479 = vmatprep.subr.mxu0 0.0
        %3480 = vmatpush1.msra.mxu0 0.0
        %3481 = vmatprep.mubr.f32.mxu0 0.0
        %3482 = vmatmul.mubr.f32.gmra.mrb[0].mxu0 %v3139
        %v3483 = vpop.f32.mrb[0].mxu0
        %v3484 = vadd.f32 0.0, %v3483
        %v3485 = vpop.f32.mrb[0].mxu0
        %v3486 = vadd.f32 0.0, %v3485
        %3487 = vmatprep.mubr.f32.mxu0 0.0
        %3488 = vmatmul.mubr.f32.gmra.mrb[0].mxu0 %v3142
        %v3489 = vpop.f32.mrb[0].mxu0
        %v3490 = vadd.f32 0.0, %v3489
        %v3491 = vpop.f32.mrb[0].mxu0
        %v3492 = vadd.f32 0.0, %v3491
        %3493 = vmatprep.mubr.f32.mxu0 0.0
        %3494 = vmatmul.mubr.f32.gmra.mrb[0].mxu0 %v3145
        %v3495 = vpop.f32.mrb[0].mxu0
        %v3496 = vadd.f32 0.0, %v3495
        %v3497 = vpop.f32.mrb[0].mxu0
        %v3498 = vadd.f32 0.0, %v3497
        %3499 = vmatprep.mubr.f32.mxu0 0.0
        %3500 = vmatmul.mubr.f32.gmra.mrb[0].mxu0 %v3148
        %v3501 = vpop.f32.mrb[0].mxu0
        %v3502 = vadd.f32 0.0, %v3501
        %v3503 = vpop.f32.mrb[0].mxu0
        %v3504 = vadd.f32 0.0, %v3503
        %3505 = vdwg.mxu0
        %s3506 = scalar_lea.vmem [#allocation7], 96
        %v3507 = vld [vmem:[%s3506] sm:$0xff]
        %v3508 = vld [vmem:[%s3506 + $0x8] sm:$0xff]
        %v3509 = vld [vmem:[%s3506 + $0x10] sm:$0xff]
        %v3510 = vld [vmem:[%s3506 + $0x18] sm:$0xff]
        %v3512 = vsel %vm1027, %v3507, 0
        %v3515 = vsel %vm1027, %v3508, 0
        %v3518 = vsel %vm1027, %v3509, 0
        %v3521 = vsel %vm1027, %v3510, 0
        %3523 = vmatprep.subr.mxu0 %v3103
        %3524 = vmatpush1.msra.mxu0 %v3102
        %3525 = vmatprep.subr.mxu0 %v3111
        %3526 = vmatpush1.msra.mxu0 %v3110
        %3527 = vmatprep.subr.mxu0 %v3119
        %3528 = vmatpush1.msra.mxu0 %v3118
        %3529 = vmatprep.subr.mxu0 %v3127
        %3530 = vmatpush1.msra.mxu0 %v3126
        %3531 = vmatprep.subr.mxu0 0.0
        %3532 = vmatpush1.msra.mxu0 0.0
        %3533 = vmatprep.subr.mxu0 0.0
        %3534 = vmatpush1.msra.mxu0 0.0
        %3535 = vmatprep.subr.mxu0 0.0
        %3536 = vmatpush1.msra.mxu0 0.0
        %3537 = vmatprep.subr.mxu0 0.0
        %3538 = vmatpush1.msra.mxu0 0.0
        %3539 = vmatprep.subr.mxu0 0.0
        %3540 = vmatpush1.msra.mxu0 0.0
        %3541 = vmatprep.subr.mxu0 0.0
        %3542 = vmatpush1.msra.mxu0 0.0
        %3543 = vmatprep.subr.mxu0 0.0
        %3544 = vmatpush1.msra.mxu0 0.0
        %3545 = vmatprep.subr.mxu0 0.0
        %3546 = vmatpush1.msra.mxu0 0.0
        %3547 = vmatprep.subr.mxu0 0.0
        %3548 = vmatpush1.msra.mxu0 0.0
        %3549 = vmatprep.subr.mxu0 0.0
        %3550 = vmatpush1.msra.mxu0 0.0
        %3551 = vmatprep.subr.mxu0 0.0
        %3552 = vmatpush1.msra.mxu0 0.0
        %3553 = vmatprep.subr.mxu0 0.0
        %3554 = vmatpush1.msra.mxu0 0.0
        %3555 = vmatprep.subr.mxu0 0.0
        %3556 = vmatpush1.msra.mxu0 0.0
        %3557 = vmatprep.subr.mxu0 0.0
        %3558 = vmatpush1.msra.mxu0 0.0
        %3559 = vmatprep.subr.mxu0 0.0
        %3560 = vmatpush1.msra.mxu0 0.0
        %3561 = vmatprep.subr.mxu0 0.0
        %3562 = vmatpush1.msra.mxu0 0.0
        %3563 = vmatprep.subr.mxu0 0.0
        %3564 = vmatpush1.msra.mxu0 0.0
        %3565 = vmatprep.subr.mxu0 0.0
        %3566 = vmatpush1.msra.mxu0 0.0
        %3567 = vmatprep.subr.mxu0 0.0
        %3568 = vmatpush1.msra.mxu0 0.0
        %3569 = vmatprep.subr.mxu0 0.0
        %3570 = vmatpush1.msra.mxu0 0.0
        %3571 = vmatprep.subr.mxu0 0.0
        %3572 = vmatpush1.msra.mxu0 0.0
        %3573 = vmatprep.subr.mxu0 0.0
        %3574 = vmatpush1.msra.mxu0 0.0
        %3575 = vmatprep.subr.mxu0 0.0
        %3576 = vmatpush1.msra.mxu0 0.0
        %3577 = vmatprep.subr.mxu0 0.0
        %3578 = vmatpush1.msra.mxu0 0.0
        %3579 = vmatprep.subr.mxu0 0.0
        %3580 = vmatpush1.msra.mxu0 0.0
        %3581 = vmatprep.subr.mxu0 0.0
        %3582 = vmatpush1.msra.mxu0 0.0
        %3583 = vmatprep.subr.mxu0 0.0
        %3584 = vmatpush1.msra.mxu0 0.0
        %3585 = vmatprep.subr.mxu0 0.0
        %3586 = vmatpush1.msra.mxu0 0.0
        %3587 = vmatprep.mubr.f32.mxu0 0.0
        %3588 = vmatmul.mubr.f32.gmra.mrb[0].mxu0 %v3512
        %v3589 = vpop.f32.mrb[0].mxu0
        %v3590 = vadd.f32 %v3217, %v3589
        %v3591 = vpop.f32.mrb[0].mxu0
        %v3592 = vadd.f32 %v3219, %v3591
        %3593 = vmatprep.mubr.f32.mxu0 0.0
        %3594 = vmatmul.mubr.f32.gmra.mrb[0].mxu0 %v3515
        %v3595 = vpop.f32.mrb[0].mxu0
        %v3596 = vadd.f32 %v3223, %v3595
        %v3597 = vpop.f32.mrb[0].mxu0
        %v3598 = vadd.f32 %v3225, %v3597
        %3599 = vmatprep.mubr.f32.mxu0 0.0
        %3600 = vmatmul.mubr.f32.gmra.mrb[0].mxu0 %v3518
        %v3601 = vpop.f32.mrb[0].mxu0
        %v3602 = vadd.f32 %v3229, %v3601
        %v3603 = vpop.f32.mrb[0].mxu0
        %v3604 = vadd.f32 %v3231, %v3603
        %3605 = vmatprep.mubr.f32.mxu0 0.0
        %3606 = vmatmul.mubr.f32.gmra.mrb[0].mxu0 %v3521
        %v3607 = vpop.f32.mrb[0].mxu0
        %v3608 = vadd.f32 %v3235, %v3607
        %v3609 = vpop.f32.mrb[0].mxu0
        %v3610 = vadd.f32 %v3237, %v3609
        %3611 = vdwg.mxu0
        %3612 = vmatprep.subr.mxu0 %v3105
        %3613 = vmatpush1.msra.mxu0 %v3104
        %3614 = vmatprep.subr.mxu0 %v3113
        %3615 = vmatpush1.msra.mxu0 %v3112
        %3616 = vmatprep.subr.mxu0 %v3121
        %3617 = vmatpush1.msra.mxu0 %v3120
        %3618 = vmatprep.subr.mxu0 %v3129
        %3619 = vmatpush1.msra.mxu0 %v3128
        %3620 = vmatprep.subr.mxu0 0.0
        %3621 = vmatpush1.msra.mxu0 0.0
        %3622 = vmatprep.subr.mxu0 0.0
        %3623 = vmatpush1.msra.mxu0 0.0
        %3624 = vmatprep.subr.mxu0 0.0
        %3625 = vmatpush1.msra.mxu0 0.0
        %3626 = vmatprep.subr.mxu0 0.0
        %3627 = vmatpush1.msra.mxu0 0.0
        %3628 = vmatprep.subr.mxu0 0.0
        %3629 = vmatpush1.msra.mxu0 0.0
        %3630 = vmatprep.subr.mxu0 0.0
        %3631 = vmatpush1.msra.mxu0 0.0
        %3632 = vmatprep.subr.mxu0 0.0
        %3633 = vmatpush1.msra.mxu0 0.0
        %3634 = vmatprep.subr.mxu0 0.0
        %3635 = vmatpush1.msra.mxu0 0.0
        %3636 = vmatprep.subr.mxu0 0.0
        %3637 = vmatpush1.msra.mxu0 0.0
        %3638 = vmatprep.subr.mxu0 0.0
        %3639 = vmatpush1.msra.mxu0 0.0
        %3640 = vmatprep.subr.mxu0 0.0
        %3641 = vmatpush1.msra.mxu0 0.0
        %3642 = vmatprep.subr.mxu0 0.0
        %3643 = vmatpush1.msra.mxu0 0.0
        %3644 = vmatprep.subr.mxu0 0.0
        %3645 = vmatpush1.msra.mxu0 0.0
        %3646 = vmatprep.subr.mxu0 0.0
        %3647 = vmatpush1.msra.mxu0 0.0
        %3648 = vmatprep.subr.mxu0 0.0
        %3649 = vmatpush1.msra.mxu0 0.0
        %3650 = vmatprep.subr.mxu0 0.0
        %3651 = vmatpush1.msra.mxu0 0.0
        %3652 = vmatprep.subr.mxu0 0.0
        %3653 = vmatpush1.msra.mxu0 0.0
        %3654 = vmatprep.subr.mxu0 0.0
        %3655 = vmatpush1.msra.mxu0 0.0
        %3656 = vmatprep.subr.mxu0 0.0
        %3657 = vmatpush1.msra.mxu0 0.0
        %3658 = vmatprep.subr.mxu0 0.0
        %3659 = vmatpush1.msra.mxu0 0.0
        %3660 = vmatprep.subr.mxu0 0.0
        %3661 = vmatpush1.msra.mxu0 0.0
        %3662 = vmatprep.subr.mxu0 0.0
        %3663 = vmatpush1.msra.mxu0 0.0
        %3664 = vmatprep.subr.mxu0 0.0
        %3665 = vmatpush1.msra.mxu0 0.0
        %3666 = vmatprep.subr.mxu0 0.0
        %3667 = vmatpush1.msra.mxu0 0.0
        %3668 = vmatprep.subr.mxu0 0.0
        %3669 = vmatpush1.msra.mxu0 0.0
        %3670 = vmatprep.subr.mxu0 0.0
        %3671 = vmatpush1.msra.mxu0 0.0
        %3672 = vmatprep.subr.mxu0 0.0
        %3673 = vmatpush1.msra.mxu0 0.0
        %3674 = vmatprep.subr.mxu0 0.0
        %3675 = vmatpush1.msra.mxu0 0.0
        %3676 = vmatprep.mubr.f32.mxu0 0.0
        %3677 = vmatmul.mubr.f32.gmra.mrb[0].mxu0 %v3512
        %v3678 = vpop.f32.mrb[0].mxu0
        %v3679 = vadd.f32 %v3306, %v3678
        %v3680 = vpop.f32.mrb[0].mxu0
        %v3681 = vadd.f32 %v3308, %v3680
        %3682 = vmatprep.mubr.f32.mxu0 0.0
        %3683 = vmatmul.mubr.f32.gmra.mrb[0].mxu0 %v3515
        %v3684 = vpop.f32.mrb[0].mxu0
        %v3685 = vadd.f32 %v3312, %v3684
        %v3686 = vpop.f32.mrb[0].mxu0
        %v3687 = vadd.f32 %v3314, %v3686
        %3688 = vmatprep.mubr.f32.mxu0 0.0
        %3689 = vmatmul.mubr.f32.gmra.mrb[0].mxu0 %v3518
        %v3690 = vpop.f32.mrb[0].mxu0
        %v3691 = vadd.f32 %v3318, %v3690
        %v3692 = vpop.f32.mrb[0].mxu0
        %v3693 = vadd.f32 %v3320, %v3692
        %3694 = vmatprep.mubr.f32.mxu0 0.0
        %3695 = vmatmul.mubr.f32.gmra.mrb[0].mxu0 %v3521
        %v3696 = vpop.f32.mrb[0].mxu0
        %v3697 = vadd.f32 %v3324, %v3696
        %v3698 = vpop.f32.mrb[0].mxu0
        %v3699 = vadd.f32 %v3326, %v3698
        %3700 = vdwg.mxu0
        %3701 = vmatprep.subr.mxu0 %v3107
        %3702 = vmatpush1.msra.mxu0 %v3106
        %3703 = vmatprep.subr.mxu0 %v3115
        %3704 = vmatpush1.msra.mxu0 %v3114
        %3705 = vmatprep.subr.mxu0 %v3123
        %3706 = vmatpush1.msra.mxu0 %v3122
        %3707 = vmatprep.subr.mxu0 %v3131
        %3708 = vmatpush1.msra.mxu0 %v3130
        %3709 = vmatprep.subr.mxu0 0.0
        %3710 = vmatpush1.msra.mxu0 0.0
        %3711 = vmatprep.subr.mxu0 0.0
        %3712 = vmatpush1.msra.mxu0 0.0
        %3713 = vmatprep.subr.mxu0 0.0
        %3714 = vmatpush1.msra.mxu0 0.0
        %3715 = vmatprep.subr.mxu0 0.0
        %3716 = vmatpush1.msra.mxu0 0.0
        %3717 = vmatprep.subr.mxu0 0.0
        %3718 = vmatpush1.msra.mxu0 0.0
        %3719 = vmatprep.subr.mxu0 0.0
        %3720 = vmatpush1.msra.mxu0 0.0
        %3721 = vmatprep.subr.mxu0 0.0
        %3722 = vmatpush1.msra.mxu0 0.0
        %3723 = vmatprep.subr.mxu0 0.0
        %3724 = vmatpush1.msra.mxu0 0.0
        %3725 = vmatprep.subr.mxu0 0.0
        %3726 = vmatpush1.msra.mxu0 0.0
        %3727 = vmatprep.subr.mxu0 0.0
        %3728 = vmatpush1.msra.mxu0 0.0
        %3729 = vmatprep.subr.mxu0 0.0
        %3730 = vmatpush1.msra.mxu0 0.0
        %3731 = vmatprep.subr.mxu0 0.0
        %3732 = vmatpush1.msra.mxu0 0.0
        %3733 = vmatprep.subr.mxu0 0.0
        %3734 = vmatpush1.msra.mxu0 0.0
        %3735 = vmatprep.subr.mxu0 0.0
        %3736 = vmatpush1.msra.mxu0 0.0
        %3737 = vmatprep.subr.mxu0 0.0
        %3738 = vmatpush1.msra.mxu0 0.0
        %3739 = vmatprep.subr.mxu0 0.0
        %3740 = vmatpush1.msra.mxu0 0.0
        %3741 = vmatprep.subr.mxu0 0.0
        %3742 = vmatpush1.msra.mxu0 0.0
        %3743 = vmatprep.subr.mxu0 0.0
        %3744 = vmatpush1.msra.mxu0 0.0
        %3745 = vmatprep.subr.mxu0 0.0
        %3746 = vmatpush1.msra.mxu0 0.0
        %3747 = vmatprep.subr.mxu0 0.0
        %3748 = vmatpush1.msra.mxu0 0.0
        %3749 = vmatprep.subr.mxu0 0.0
        %3750 = vmatpush1.msra.mxu0 0.0
        %3751 = vmatprep.subr.mxu0 0.0
        %3752 = vmatpush1.msra.mxu0 0.0
        %3753 = vmatprep.subr.mxu0 0.0
        %3754 = vmatpush1.msra.mxu0 0.0
        %3755 = vmatprep.subr.mxu0 0.0
        %3756 = vmatpush1.msra.mxu0 0.0
        %3757 = vmatprep.subr.mxu0 0.0
        %3758 = vmatpush1.msra.mxu0 0.0
        %3759 = vmatprep.subr.mxu0 0.0
        %3760 = vmatpush1.msra.mxu0 0.0
        %3761 = vmatprep.subr.mxu0 0.0
        %3762 = vmatpush1.msra.mxu0 0.0
        %3763 = vmatprep.subr.mxu0 0.0
        %3764 = vmatpush1.msra.mxu0 0.0
        %3765 = vmatprep.mubr.f32.mxu0 0.0
        %3766 = vmatmul.mubr.f32.gmra.mrb[0].mxu0 %v3512
        %v3767 = vpop.f32.mrb[0].mxu0
        %v3768 = vadd.f32 %v3395, %v3767
        %v3769 = vpop.f32.mrb[0].mxu0
        %v3770 = vadd.f32 %v3397, %v3769
        %3771 = vmatprep.mubr.f32.mxu0 0.0
        %3772 = vmatmul.mubr.f32.gmra.mrb[0].mxu0 %v3515
        %v3773 = vpop.f32.mrb[0].mxu0
        %v3774 = vadd.f32 %v3401, %v3773
        %v3775 = vpop.f32.mrb[0].mxu0
        %v3776 = vadd.f32 %v3403, %v3775
        %3777 = vmatprep.mubr.f32.mxu0 0.0
        %3778 = vmatmul.mubr.f32.gmra.mrb[0].mxu0 %v3518
        %v3779 = vpop.f32.mrb[0].mxu0
        %v3780 = vadd.f32 %v3407, %v3779
        %v3781 = vpop.f32.mrb[0].mxu0
        %v3782 = vadd.f32 %v3409, %v3781
        %3783 = vmatprep.mubr.f32.mxu0 0.0
        %3784 = vmatmul.mubr.f32.gmra.mrb[0].mxu0 %v3521
        %v3785 = vpop.f32.mrb[0].mxu0
        %v3786 = vadd.f32 %v3413, %v3785
        %v3787 = vpop.f32.mrb[0].mxu0
        %v3788 = vadd.f32 %v3415, %v3787
        %3789 = vdwg.mxu0
        %3790 = vmatprep.subr.mxu0 %v3109
        %3791 = vmatpush1.msra.mxu0 %v3108
        %3792 = vmatprep.subr.mxu0 %v3117
        %3793 = vmatpush1.msra.mxu0 %v3116
        %3794 = vmatprep.subr.mxu0 %v3125
        %3795 = vmatpush1.msra.mxu0 %v3124
        %3796 = vmatprep.subr.mxu0 %v3133
        %3797 = vmatpush1.msra.mxu0 %v3132
        %3798 = vmatprep.subr.mxu0 0.0
        %3799 = vmatpush1.msra.mxu0 0.0
        %3800 = vmatprep.subr.mxu0 0.0
        %3801 = vmatpush1.msra.mxu0 0.0
        %3802 = vmatprep.subr.mxu0 0.0
        %3803 = vmatpush1.msra.mxu0 0.0
        %3804 = vmatprep.subr.mxu0 0.0
        %3805 = vmatpush1.msra.mxu0 0.0
        %3806 = vmatprep.subr.mxu0 0.0
        %3807 = vmatpush1.msra.mxu0 0.0
        %3808 = vmatprep.subr.mxu0 0.0
        %3809 = vmatpush1.msra.mxu0 0.0
        %3810 = vmatprep.subr.mxu0 0.0
        %3811 = vmatpush1.msra.mxu0 0.0
        %3812 = vmatprep.subr.mxu0 0.0
        %3813 = vmatpush1.msra.mxu0 0.0
        %3814 = vmatprep.subr.mxu0 0.0
        %3815 = vmatpush1.msra.mxu0 0.0
        %3816 = vmatprep.subr.mxu0 0.0
        %3817 = vmatpush1.msra.mxu0 0.0
        %3818 = vmatprep.subr.mxu0 0.0
        %3819 = vmatpush1.msra.mxu0 0.0
        %3820 = vmatprep.subr.mxu0 0.0
        %3821 = vmatpush1.msra.mxu0 0.0
        %3822 = vmatprep.subr.mxu0 0.0
        %3823 = vmatpush1.msra.mxu0 0.0
        %3824 = vmatprep.subr.mxu0 0.0
        %3825 = vmatpush1.msra.mxu0 0.0
        %3826 = vmatprep.subr.mxu0 0.0
        %3827 = vmatpush1.msra.mxu0 0.0
        %3828 = vmatprep.subr.mxu0 0.0
        %3829 = vmatpush1.msra.mxu0 0.0
        %3830 = vmatprep.subr.mxu0 0.0
        %3831 = vmatpush1.msra.mxu0 0.0
        %3832 = vmatprep.subr.mxu0 0.0
        %3833 = vmatpush1.msra.mxu0 0.0
        %3834 = vmatprep.subr.mxu0 0.0
        %3835 = vmatpush1.msra.mxu0 0.0
        %3836 = vmatprep.subr.mxu0 0.0
        %3837 = vmatpush1.msra.mxu0 0.0
        %3838 = vmatprep.subr.mxu0 0.0
        %3839 = vmatpush1.msra.mxu0 0.0
        %3840 = vmatprep.subr.mxu0 0.0
        %3841 = vmatpush1.msra.mxu0 0.0
        %3842 = vmatprep.subr.mxu0 0.0
        %3843 = vmatpush1.msra.mxu0 0.0
        %3844 = vmatprep.subr.mxu0 0.0
        %3845 = vmatpush1.msra.mxu0 0.0
        %3846 = vmatprep.subr.mxu0 0.0
        %3847 = vmatpush1.msra.mxu0 0.0
        %3848 = vmatprep.subr.mxu0 0.0
        %3849 = vmatpush1.msra.mxu0 0.0
        %3850 = vmatprep.subr.mxu0 0.0
        %3851 = vmatpush1.msra.mxu0 0.0
        %3852 = vmatprep.subr.mxu0 0.0
        %3853 = vmatpush1.msra.mxu0 0.0
        %3854 = vmatprep.mubr.f32.mxu0 0.0
        %3855 = vmatmul.mubr.f32.gmra.mrb[0].mxu0 %v3512
        %v3856 = vpop.f32.mrb[0].mxu0
        %v3857 = vadd.f32 %v3484, %v3856
        %v3858 = vpop.f32.mrb[0].mxu0
        %v3859 = vadd.f32 %v3486, %v3858
        %3860 = vmatprep.mubr.f32.mxu0 0.0
        %3861 = vmatmul.mubr.f32.gmra.mrb[0].mxu0 %v3515
        %v3862 = vpop.f32.mrb[0].mxu0
        %v3863 = vadd.f32 %v3490, %v3862
        %v3864 = vpop.f32.mrb[0].mxu0
        %v3865 = vadd.f32 %v3492, %v3864
        %3866 = vmatprep.mubr.f32.mxu0 0.0
        %3867 = vmatmul.mubr.f32.gmra.mrb[0].mxu0 %v3518
        %v3868 = vpop.f32.mrb[0].mxu0
        %v3869 = vadd.f32 %v3496, %v3868
        %v3870 = vpop.f32.mrb[0].mxu0
        %v3871 = vadd.f32 %v3498, %v3870
        %3872 = vmatprep.mubr.f32.mxu0 0.0
        %3873 = vmatmul.mubr.f32.gmra.mrb[0].mxu0 %v3521
        %v3874 = vpop.f32.mrb[0].mxu0
        %v3875 = vadd.f32 %v3502, %v3874
        %v3876 = vpop.f32.mrb[0].mxu0
        %v3877 = vadd.f32 %v3504, %v3876
        %3878 = vdwg.mxu0
        %3879 = vset.pattern.permute.xlu0 4
        %3880 = vperm.xlu0 %3879, %v260
        %v3881 = vpop.permute.xlu0 %3880
        %3883 = vset.pattern.permute.xlu0 4
        %3884 = vperm.xlu0 %3883, %v261
        %v3885 = vpop.permute.xlu0 %3884
        %3887 = vset.pattern.permute.xlu0 4
        %3888 = vperm.xlu0 %3887, %v262
        %v3889 = vpop.permute.xlu0 %3888
        %3891 = vset.pattern.permute.xlu0 4
        %3892 = vperm.xlu0 %3891, %v263
        %v3893 = vpop.permute.xlu0 %3892
        %v3895 = vadd.f32 %v3590, %v3881
        %v3896 = vadd.f32 %v3592, %v3881
        %v3897 = vadd.f32 %v3679, %v3881
        %v3898 = vadd.f32 %v3681, %v3881
        %v3899 = vadd.f32 %v3768, %v3881
        %v3900 = vadd.f32 %v3770, %v3881
        %v3901 = vadd.f32 %v3857, %v3881
        %v3902 = vadd.f32 %v3859, %v3881
        %v3903 = vadd.f32 %v3596, %v3885
        %v3904 = vadd.f32 %v3598, %v3885
        %v3905 = vadd.f32 %v3685, %v3885
        %v3906 = vadd.f32 %v3687, %v3885
        %v3907 = vadd.f32 %v3774, %v3885
        %v3908 = vadd.f32 %v3776, %v3885
        %v3909 = vadd.f32 %v3863, %v3885
        %v3910 = vadd.f32 %v3865, %v3885
        %v3911 = vadd.f32 %v3602, %v3889
        %v3912 = vadd.f32 %v3604, %v3889
        %v3913 = vadd.f32 %v3691, %v3889
        %v3914 = vadd.f32 %v3693, %v3889
        %v3915 = vadd.f32 %v3780, %v3889
        %v3916 = vadd.f32 %v3782, %v3889
        %v3917 = vadd.f32 %v3869, %v3889
        %v3918 = vadd.f32 %v3871, %v3889
        %v3919 = vadd.f32 %v3608, %v3893
        %v3920 = vadd.f32 %v3610, %v3893
        %v3921 = vadd.f32 %v3697, %v3893
        %v3922 = vadd.f32 %v3699, %v3893
        %v3923 = vadd.f32 %v3786, %v3893
        %v3924 = vadd.f32 %v3788, %v3893
        %v3925 = vadd.f32 %v3875, %v3893
        %v3926 = vadd.f32 %v3877, %v3893
        %v3927 = vmul.f32 %v3895, 100.0
        %v3928 = vmul.f32 %v3896, 100.0
        %v3929 = vmul.f32 %v3897, 100.0
        %v3930 = vmul.f32 %v3898, 100.0
        %v3931 = vmul.f32 %v3899, 100.0
        %v3932 = vmul.f32 %v3900, 100.0
        %v3933 = vmul.f32 %v3901, 100.0
        %v3934 = vmul.f32 %v3902, 100.0
        %v3935 = vmul.f32 %v3903, 100.0
        %v3936 = vmul.f32 %v3904, 100.0
        %v3937 = vmul.f32 %v3905, 100.0
        %v3938 = vmul.f32 %v3906, 100.0
        %v3939 = vmul.f32 %v3907, 100.0
        %v3940 = vmul.f32 %v3908, 100.0
        %v3941 = vmul.f32 %v3909, 100.0
        %v3942 = vmul.f32 %v3910, 100.0
        %v3943 = vmul.f32 %v3911, 100.0
        %v3944 = vmul.f32 %v3912, 100.0
        %v3945 = vmul.f32 %v3913, 100.0
        %v3946 = vmul.f32 %v3914, 100.0
        %v3947 = vmul.f32 %v3915, 100.0
        %v3948 = vmul.f32 %v3916, 100.0
        %v3949 = vmul.f32 %v3917, 100.0
        %v3950 = vmul.f32 %v3918, 100.0
        %v3951 = vmul.f32 %v3919, 100.0
        %v3952 = vmul.f32 %v3920, 100.0
        %v3953 = vmul.f32 %v3921, 100.0
        %v3954 = vmul.f32 %v3922, 100.0
        %v3955 = vmul.f32 %v3923, 100.0
        %v3956 = vmul.f32 %v3924, 100.0
        %v3957 = vmul.f32 %v3925, 100.0
        %v3958 = vmul.f32 %v3926, 100.0
        %v3959 = vmin.f32 %v3927, 20.0
        %v3960 = vmin.f32 %v3928, 20.0
        %v3961 = vmin.f32 %v3929, 20.0
        %v3962 = vmin.f32 %v3930, 20.0
        %v3963 = vmin.f32 %v3931, 20.0
        %v3964 = vmin.f32 %v3932, 20.0
        %v3965 = vmin.f32 %v3933, 20.0
        %v3966 = vmin.f32 %v3934, 20.0
        %v3967 = vmin.f32 %v3935, 20.0
        %v3968 = vmin.f32 %v3936, 20.0
        %v3969 = vmin.f32 %v3937, 20.0
        %v3970 = vmin.f32 %v3938, 20.0
        %v3971 = vmin.f32 %v3939, 20.0
        %v3972 = vmin.f32 %v3940, 20.0
        %v3973 = vmin.f32 %v3941, 20.0
        %v3974 = vmin.f32 %v3942, 20.0
        %v3975 = vmin.f32 %v3943, 20.0
        %v3976 = vmin.f32 %v3944, 20.0
        %v3977 = vmin.f32 %v3945, 20.0
        %v3978 = vmin.f32 %v3946, 20.0
        %v3979 = vmin.f32 %v3947, 20.0
        %v3980 = vmin.f32 %v3948, 20.0
        %v3981 = vmin.f32 %v3949, 20.0
        %v3982 = vmin.f32 %v3950, 20.0
        %v3983 = vmin.f32 %v3951, 20.0
        %v3984 = vmin.f32 %v3952, 20.0
        %v3985 = vmin.f32 %v3953, 20.0
        %v3986 = vmin.f32 %v3954, 20.0
        %v3987 = vmin.f32 %v3955, 20.0
        %v3988 = vmin.f32 %v3956, 20.0
        %v3989 = vmin.f32 %v3957, 20.0
        %v3990 = vmin.f32 %v3958, 20.0
        %v3991 = vmul.f32 %v3959, 1.442695
        %v3992 = vpow.pop %v3991
        %v3993 = vmul.f32 %v3960, 1.442695
        %v3994 = vpow.pop %v3993
        %v3995 = vmul.f32 %v3961, 1.442695
        %v3996 = vpow.pop %v3995
        %v3997 = vmul.f32 %v3962, 1.442695
        %v3998 = vpow.pop %v3997
        %v3999 = vmul.f32 %v3963, 1.442695
        %v4000 = vpow.pop %v3999
        %v4001 = vmul.f32 %v3964, 1.442695
        %v4002 = vpow.pop %v4001
        %v4003 = vmul.f32 %v3965, 1.442695
        %v4004 = vpow.pop %v4003
        %v4005 = vmul.f32 %v3966, 1.442695
        %v4006 = vpow.pop %v4005
        %v4007 = vmul.f32 %v3967, 1.442695
        %v4008 = vpow.pop %v4007
        %v4009 = vmul.f32 %v3968, 1.442695
        %v4010 = vpow.pop %v4009
        %v4011 = vmul.f32 %v3969, 1.442695
        %v4012 = vpow.pop %v4011
        %v4013 = vmul.f32 %v3970, 1.442695
        %v4014 = vpow.pop %v4013
        %v4015 = vmul.f32 %v3971, 1.442695
        %v4016 = vpow.pop %v4015
        %v4017 = vmul.f32 %v3972, 1.442695
        %v4018 = vpow.pop %v4017
        %v4019 = vmul.f32 %v3973, 1.442695
        %v4020 = vpow.pop %v4019
        %v4021 = vmul.f32 %v3974, 1.442695
        %v4022 = vpow.pop %v4021
        %v4023 = vmul.f32 %v3975, 1.442695
        %v4024 = vpow.pop %v4023
        %v4025 = vmul.f32 %v3976, 1.442695
        %v4026 = vpow.pop %v4025
        %v4027 = vmul.f32 %v3977, 1.442695
        %v4028 = vpow.pop %v4027
        %v4029 = vmul.f32 %v3978, 1.442695
        %v4030 = vpow.pop %v4029
        %v4031 = vmul.f32 %v3979, 1.442695
        %v4032 = vpow.pop %v4031
        %v4033 = vmul.f32 %v3980, 1.442695
        %v4034 = vpow.pop %v4033
        %v4035 = vmul.f32 %v3981, 1.442695
        %v4036 = vpow.pop %v4035
        %v4037 = vmul.f32 %v3982, 1.442695
        %v4038 = vpow.pop %v4037
        %v4039 = vmul.f32 %v3983, 1.442695
        %v4040 = vpow.pop %v4039
        %v4041 = vmul.f32 %v3984, 1.442695
        %v4042 = vpow.pop %v4041
        %v4043 = vmul.f32 %v3985, 1.442695
        %v4044 = vpow.pop %v4043
        %v4045 = vmul.f32 %v3986, 1.442695
        %v4046 = vpow.pop %v4045
        %v4047 = vmul.f32 %v3987, 1.442695
        %v4048 = vpow.pop %v4047
        %v4049 = vmul.f32 %v3988, 1.442695
        %v4050 = vpow.pop %v4049
        %v4051 = vmul.f32 %v3989, 1.442695
        %v4052 = vpow.pop %v4051
        %v4053 = vmul.f32 %v3990, 1.442695
        %v4054 = vpow.pop %v4053
        %v4055 = vadd.f32 %v3992, 1.0
        %v4056 = vadd.f32 %v3994, 1.0
        %v4057 = vadd.f32 %v3996, 1.0
        %v4058 = vadd.f32 %v3998, 1.0
        %v4059 = vadd.f32 %v4000, 1.0
        %v4060 = vadd.f32 %v4002, 1.0
        %v4061 = vadd.f32 %v4004, 1.0
        %v4062 = vadd.f32 %v4006, 1.0
        %v4063 = vadd.f32 %v4008, 1.0
        %v4064 = vadd.f32 %v4010, 1.0
        %v4065 = vadd.f32 %v4012, 1.0
        %v4066 = vadd.f32 %v4014, 1.0
        %v4067 = vadd.f32 %v4016, 1.0
        %v4068 = vadd.f32 %v4018, 1.0
        %v4069 = vadd.f32 %v4020, 1.0
        %v4070 = vadd.f32 %v4022, 1.0
        %v4071 = vadd.f32 %v4024, 1.0
        %v4072 = vadd.f32 %v4026, 1.0
        %v4073 = vadd.f32 %v4028, 1.0
        %v4074 = vadd.f32 %v4030, 1.0
        %v4075 = vadd.f32 %v4032, 1.0
        %v4076 = vadd.f32 %v4034, 1.0
        %v4077 = vadd.f32 %v4036, 1.0
        %v4078 = vadd.f32 %v4038, 1.0
        %v4079 = vadd.f32 %v4040, 1.0
        %v4080 = vadd.f32 %v4042, 1.0
        %v4081 = vadd.f32 %v4044, 1.0
        %v4082 = vadd.f32 %v4046, 1.0
        %v4083 = vadd.f32 %v4048, 1.0
        %v4084 = vadd.f32 %v4050, 1.0
        %v4085 = vadd.f32 %v4052, 1.0
        %v4086 = vadd.f32 %v4054, 1.0
        %v4087 = vlog2.pop %v4055
        %v4088 = vmul.f32 %v4087, 0.6931472
        %v4089 = vlog2.pop %v4056
        %v4090 = vmul.f32 %v4089, 0.6931472
        %v4091 = vlog2.pop %v4057
        %v4092 = vmul.f32 %v4091, 0.6931472
        %v4093 = vlog2.pop %v4058
        %v4094 = vmul.f32 %v4093, 0.6931472
        %v4095 = vlog2.pop %v4059
        %v4096 = vmul.f32 %v4095, 0.6931472
        %v4097 = vlog2.pop %v4060
        %v4098 = vmul.f32 %v4097, 0.6931472
        %v4099 = vlog2.pop %v4061
        %v4100 = vmul.f32 %v4099, 0.6931472
        %v4101 = vlog2.pop %v4062
        %v4102 = vmul.f32 %v4101, 0.6931472
        %v4103 = vlog2.pop %v4063
        %v4104 = vmul.f32 %v4103, 0.6931472
        %v4105 = vlog2.pop %v4064
        %v4106 = vmul.f32 %v4105, 0.6931472
        %v4107 = vlog2.pop %v4065
        %v4108 = vmul.f32 %v4107, 0.6931472
        %v4109 = vlog2.pop %v4066
        %v4110 = vmul.f32 %v4109, 0.6931472
        %v4111 = vlog2.pop %v4067
        %v4112 = vmul.f32 %v4111, 0.6931472
        %v4113 = vlog2.pop %v4068
        %v4114 = vmul.f32 %v4113, 0.6931472
        %v4115 = vlog2.pop %v4069
        %v4116 = vmul.f32 %v4115, 0.6931472
        %v4117 = vlog2.pop %v4070
        %v4118 = vmul.f32 %v4117, 0.6931472
        %v4119 = vlog2.pop %v4071
        %v4120 = vmul.f32 %v4119, 0.6931472
        %v4121 = vlog2.pop %v4072
        %v4122 = vmul.f32 %v4121, 0.6931472
        %v4123 = vlog2.pop %v4073
        %v4124 = vmul.f32 %v4123, 0.6931472
        %v4125 = vlog2.pop %v4074
        %v4126 = vmul.f32 %v4125, 0.6931472
        %v4127 = vlog2.pop %v4075
        %v4128 = vmul.f32 %v4127, 0.6931472
        %v4129 = vlog2.pop %v4076
        %v4130 = vmul.f32 %v4129, 0.6931472
        %v4131 = vlog2.pop %v4077
        %v4132 = vmul.f32 %v4131, 0.6931472
        %v4133 = vlog2.pop %v4078
        %v4134 = vmul.f32 %v4133, 0.6931472
        %v4135 = vlog2.pop %v4079
        %v4136 = vmul.f32 %v4135, 0.6931472
        %v4137 = vlog2.pop %v4080
        %v4138 = vmul.f32 %v4137, 0.6931472
        %v4139 = vlog2.pop %v4081
        %v4140 = vmul.f32 %v4139, 0.6931472
        %v4141 = vlog2.pop %v4082
        %v4142 = vmul.f32 %v4141, 0.6931472
        %v4143 = vlog2.pop %v4083
        %v4144 = vmul.f32 %v4143, 0.6931472
        %v4145 = vlog2.pop %v4084
        %v4146 = vmul.f32 %v4145, 0.6931472
        %v4147 = vlog2.pop %v4085
        %v4148 = vmul.f32 %v4147, 0.6931472
        %v4149 = vlog2.pop %v4086
        %v4150 = vmul.f32 %v4149, 0.6931472
        %v4151 = vmul.f32 %v4088, %v910
        %v4152 = vmul.f32 %v4090, %v910
        %v4153 = vmul.f32 %v4092, %v910
        %v4154 = vmul.f32 %v4094, %v910
        %v4155 = vmul.f32 %v4096, %v910
        %v4156 = vmul.f32 %v4098, %v910
        %v4157 = vmul.f32 %v4100, %v910
        %v4158 = vmul.f32 %v4102, %v910
        %v4159 = vmul.f32 %v4104, %v910
        %v4160 = vmul.f32 %v4106, %v910
        %v4161 = vmul.f32 %v4108, %v910
        %v4162 = vmul.f32 %v4110, %v910
        %v4163 = vmul.f32 %v4112, %v910
        %v4164 = vmul.f32 %v4114, %v910
        %v4165 = vmul.f32 %v4116, %v910
        %v4166 = vmul.f32 %v4118, %v910
        %v4167 = vmul.f32 %v4120, %v910
        %v4168 = vmul.f32 %v4122, %v910
        %v4169 = vmul.f32 %v4124, %v910
        %v4170 = vmul.f32 %v4126, %v910
        %v4171 = vmul.f32 %v4128, %v910
        %v4172 = vmul.f32 %v4130, %v910
        %v4173 = vmul.f32 %v4132, %v910
        %v4174 = vmul.f32 %v4134, %v910
        %v4175 = vmul.f32 %v4136, %v910
        %v4176 = vmul.f32 %v4138, %v910
        %v4177 = vmul.f32 %v4140, %v910
        %v4178 = vmul.f32 %v4142, %v910
        %v4179 = vmul.f32 %v4144, %v910
        %v4180 = vmul.f32 %v4146, %v910
        %v4181 = vmul.f32 %v4148, %v910
        %v4182 = vmul.f32 %v4150, %v910
        %vm4183 = vcmp.gt.f32.partialorder %v3927, 20.0
        %vm4184 = vcmp.gt.f32.partialorder %v3928, 20.0
        %vm4185 = vcmp.gt.f32.partialorder %v3929, 20.0
        %vm4186 = vcmp.gt.f32.partialorder %v3930, 20.0
        %vm4187 = vcmp.gt.f32.partialorder %v3931, 20.0
        %vm4188 = vcmp.gt.f32.partialorder %v3932, 20.0
        %vm4189 = vcmp.gt.f32.partialorder %v3933, 20.0
        %vm4190 = vcmp.gt.f32.partialorder %v3934, 20.0
        %vm4191 = vcmp.gt.f32.partialorder %v3935, 20.0
        %vm4192 = vcmp.gt.f32.partialorder %v3936, 20.0
        %vm4193 = vcmp.gt.f32.partialorder %v3937, 20.0
        %vm4194 = vcmp.gt.f32.partialorder %v3938, 20.0
        %vm4195 = vcmp.gt.f32.partialorder %v3939, 20.0
        %vm4196 = vcmp.gt.f32.partialorder %v3940, 20.0
        %vm4197 = vcmp.gt.f32.partialorder %v3941, 20.0
        %vm4198 = vcmp.gt.f32.partialorder %v3942, 20.0
        %vm4199 = vcmp.gt.f32.partialorder %v3943, 20.0
        %vm4200 = vcmp.gt.f32.partialorder %v3944, 20.0
        %vm4201 = vcmp.gt.f32.partialorder %v3945, 20.0
        %vm4202 = vcmp.gt.f32.partialorder %v3946, 20.0
        %vm4203 = vcmp.gt.f32.partialorder %v3947, 20.0
        %vm4204 = vcmp.gt.f32.partialorder %v3948, 20.0
        %vm4205 = vcmp.gt.f32.partialorder %v3949, 20.0
        %vm4206 = vcmp.gt.f32.partialorder %v3950, 20.0
        %vm4207 = vcmp.gt.f32.partialorder %v3951, 20.0
        %vm4208 = vcmp.gt.f32.partialorder %v3952, 20.0
        %vm4209 = vcmp.gt.f32.partialorder %v3953, 20.0
        %vm4210 = vcmp.gt.f32.partialorder %v3954, 20.0
        %vm4211 = vcmp.gt.f32.partialorder %v3955, 20.0
        %vm4212 = vcmp.gt.f32.partialorder %v3956, 20.0
        %vm4213 = vcmp.gt.f32.partialorder %v3957, 20.0
        %vm4214 = vcmp.gt.f32.partialorder %v3958, 20.0
        %v4215 = vsel %vm4183, %v3895, %v4151
        %v4216 = vsel %vm4184, %v3896, %v4152
        %v4217 = vsel %vm4185, %v3897, %v4153
        %v4218 = vsel %vm4186, %v3898, %v4154
        %v4219 = vsel %vm4187, %v3899, %v4155
        %v4220 = vsel %vm4188, %v3900, %v4156
        %v4221 = vsel %vm4189, %v3901, %v4157
        %v4222 = vsel %vm4190, %v3902, %v4158
        %v4223 = vsel %vm4191, %v3903, %v4159
        %v4224 = vsel %vm4192, %v3904, %v4160
        %v4225 = vsel %vm4193, %v3905, %v4161
        %v4226 = vsel %vm4194, %v3906, %v4162
        %v4227 = vsel %vm4195, %v3907, %v4163
        %v4228 = vsel %vm4196, %v3908, %v4164
        %v4229 = vsel %vm4197, %v3909, %v4165
        %v4230 = vsel %vm4198, %v3910, %v4166
        %v4231 = vsel %vm4199, %v3911, %v4167
        %v4232 = vsel %vm4200, %v3912, %v4168
        %v4233 = vsel %vm4201, %v3913, %v4169
        %v4234 = vsel %vm4202, %v3914, %v4170
        %v4235 = vsel %vm4203, %v3915, %v4171
        %v4236 = vsel %vm4204, %v3916, %v4172
        %v4237 = vsel %vm4205, %v3917, %v4173
        %v4238 = vsel %vm4206, %v3918, %v4174
        %v4239 = vsel %vm4207, %v3919, %v4175
        %v4240 = vsel %vm4208, %v3920, %v4176
        %v4241 = vsel %vm4209, %v3921, %v4177
        %v4242 = vsel %vm4210, %v3922, %v4178
        %v4243 = vsel %vm4211, %v3923, %v4179
        %v4244 = vsel %vm4212, %v3924, %v4180
        %v4245 = vsel %vm4213, %v3925, %v4181
        %v4246 = vsel %vm4214, %v3926, %v4182
        %s4247 = scalar_lea.vmem [#allocation7], 128
        %v4248 = vld [vmem:[%s4247] sm:$0xff]
        %v4249 = vld [vmem:[%s4247 + $0x8] sm:$0xff]
        %v4250 = vld [vmem:[%s4247 + $0x10] sm:$0xff]
        %v4251 = vld [vmem:[%s4247 + $0x18] sm:$0xff]
        %4252 = vset.pattern.permute.xlu0 5
        %4253 = vperm.xlu0 %4252, %v260
        %v4254 = vpop.permute.xlu0 %4253
        %4256 = vset.pattern.permute.xlu0 5
        %4257 = vperm.xlu0 %4256, %v261
        %v4258 = vpop.permute.xlu0 %4257
        %4259 = vset.pattern.permute.xlu0 5
        %4260 = vperm.xlu0 %4259, %v262
        %v4261 = vpop.permute.xlu0 %4260
        %4262 = vset.pattern.permute.xlu0 5
        %4263 = vperm.xlu0 %4262, %v263
        %v4264 = vpop.permute.xlu0 %4263
        %v4266 = vsel %vm1027, %v4248, 0
        %v4269 = vsel %vm1027, %v4249, 0
        %v4272 = vsel %vm1027, %v4250, 0
        %v4275 = vsel %vm1027, %v4251, 0
        %4277 = vmatprep.subr.mxu0 %v4216
        %4278 = vmatpush1.msra.mxu0 %v4215
        %4279 = vmatprep.subr.mxu0 %v4224
        %4280 = vmatpush1.msra.mxu0 %v4223
        %4281 = vmatprep.subr.mxu0 %v4232
        %4282 = vmatpush1.msra.mxu0 %v4231
        %4283 = vmatprep.subr.mxu0 %v4240
        %4284 = vmatpush1.msra.mxu0 %v4239
        %4285 = vmatprep.subr.mxu0 0.0
        %4286 = vmatpush1.msra.mxu0 0.0
        %4287 = vmatprep.subr.mxu0 0.0
        %4288 = vmatpush1.msra.mxu0 0.0
        %4289 = vmatprep.subr.mxu0 0.0
        %4290 = vmatpush1.msra.mxu0 0.0
        %4291 = vmatprep.subr.mxu0 0.0
        %4292 = vmatpush1.msra.mxu0 0.0
        %4293 = vmatprep.subr.mxu0 0.0
        %4294 = vmatpush1.msra.mxu0 0.0
        %4295 = vmatprep.subr.mxu0 0.0
        %4296 = vmatpush1.msra.mxu0 0.0
        %4297 = vmatprep.subr.mxu0 0.0
        %4298 = vmatpush1.msra.mxu0 0.0
        %4299 = vmatprep.subr.mxu0 0.0
        %4300 = vmatpush1.msra.mxu0 0.0
        %4301 = vmatprep.subr.mxu0 0.0
        %4302 = vmatpush1.msra.mxu0 0.0
        %4303 = vmatprep.subr.mxu0 0.0
        %4304 = vmatpush1.msra.mxu0 0.0
        %4305 = vmatprep.subr.mxu0 0.0
        %4306 = vmatpush1.msra.mxu0 0.0
        %4307 = vmatprep.subr.mxu0 0.0
        %4308 = vmatpush1.msra.mxu0 0.0
        %4309 = vmatprep.subr.mxu0 0.0
        %4310 = vmatpush1.msra.mxu0 0.0
        %4311 = vmatprep.subr.mxu0 0.0
        %4312 = vmatpush1.msra.mxu0 0.0
        %4313 = vmatprep.subr.mxu0 0.0
        %4314 = vmatpush1.msra.mxu0 0.0
        %4315 = vmatprep.subr.mxu0 0.0
        %4316 = vmatpush1.msra.mxu0 0.0
        %4317 = vmatprep.subr.mxu0 0.0
        %4318 = vmatpush1.msra.mxu0 0.0
        %4319 = vmatprep.subr.mxu0 0.0
        %4320 = vmatpush1.msra.mxu0 0.0
        %4321 = vmatprep.subr.mxu0 0.0
        %4322 = vmatpush1.msra.mxu0 0.0
        %4323 = vmatprep.subr.mxu0 0.0
        %4324 = vmatpush1.msra.mxu0 0.0
        %4325 = vmatprep.subr.mxu0 0.0
        %4326 = vmatpush1.msra.mxu0 0.0
        %4327 = vmatprep.subr.mxu0 0.0
        %4328 = vmatpush1.msra.mxu0 0.0
        %4329 = vmatprep.subr.mxu0 0.0
        %4330 = vmatpush1.msra.mxu0 0.0
        %4331 = vmatprep.subr.mxu0 0.0
        %4332 = vmatpush1.msra.mxu0 0.0
        %4333 = vmatprep.subr.mxu0 0.0
        %4334 = vmatpush1.msra.mxu0 0.0
        %4335 = vmatprep.subr.mxu0 0.0
        %4336 = vmatpush1.msra.mxu0 0.0
        %4337 = vmatprep.subr.mxu0 0.0
        %4338 = vmatpush1.msra.mxu0 0.0
        %4339 = vmatprep.subr.mxu0 0.0
        %4340 = vmatpush1.msra.mxu0 0.0
        %4341 = vmatprep.mubr.f32.mxu0 0.0
        %4342 = vmatmul.mubr.f32.gmra.mrb[0].mxu0 %v4266
        %v4343 = vpop.f32.mrb[0].mxu0
        %v4344 = vadd.f32 %v4254, %v4343
        %v4345 = vpop.f32.mrb[0].mxu0
        %v4346 = vadd.f32 %v4254, %v4345
        %4347 = vmatprep.mubr.f32.mxu0 0.0
        %4348 = vmatmul.mubr.f32.gmra.mrb[0].mxu0 %v4269
        %v4349 = vpop.f32.mrb[0].mxu0
        %v4350 = vpop.f32.mrb[0].mxu0
        %4351 = vmatprep.mubr.f32.mxu0 0.0
        %4352 = vmatmul.mubr.f32.gmra.mrb[0].mxu0 %v4272
        %v4353 = vpop.f32.mrb[0].mxu0
        %v4354 = vpop.f32.mrb[0].mxu0
        %4355 = vmatprep.mubr.f32.mxu0 0.0
        %4356 = vmatmul.mubr.f32.gmra.mrb[0].mxu0 %v4275
        %v4357 = vpop.f32.mrb[0].mxu0
        %v4358 = vpop.f32.mrb[0].mxu0
        %4359 = vdwg.mxu0
        %4360 = vmatprep.subr.mxu0 %v4218
        %4361 = vmatpush1.msra.mxu0 %v4217
        %4362 = vmatprep.subr.mxu0 %v4226
        %4363 = vmatpush1.msra.mxu0 %v4225
        %4364 = vmatprep.subr.mxu0 %v4234
        %4365 = vmatpush1.msra.mxu0 %v4233
        %4366 = vmatprep.subr.mxu0 %v4242
        %4367 = vmatpush1.msra.mxu0 %v4241
        %4368 = vmatprep.subr.mxu0 0.0
        %4369 = vmatpush1.msra.mxu0 0.0
        %4370 = vmatprep.subr.mxu0 0.0
        %4371 = vmatpush1.msra.mxu0 0.0
        %4372 = vmatprep.subr.mxu0 0.0
        %4373 = vmatpush1.msra.mxu0 0.0
        %4374 = vmatprep.subr.mxu0 0.0
        %4375 = vmatpush1.msra.mxu0 0.0
        %4376 = vmatprep.subr.mxu0 0.0
        %4377 = vmatpush1.msra.mxu0 0.0
        %4378 = vmatprep.subr.mxu0 0.0
        %4379 = vmatpush1.msra.mxu0 0.0
        %4380 = vmatprep.subr.mxu0 0.0
        %4381 = vmatpush1.msra.mxu0 0.0
        %4382 = vmatprep.subr.mxu0 0.0
        %4383 = vmatpush1.msra.mxu0 0.0
        %4384 = vmatprep.subr.mxu0 0.0
        %4385 = vmatpush1.msra.mxu0 0.0
        %4386 = vmatprep.subr.mxu0 0.0
        %4387 = vmatpush1.msra.mxu0 0.0
        %4388 = vmatprep.subr.mxu0 0.0
        %4389 = vmatpush1.msra.mxu0 0.0
        %4390 = vmatprep.subr.mxu0 0.0
        %4391 = vmatpush1.msra.mxu0 0.0
        %4392 = vmatprep.subr.mxu0 0.0
        %4393 = vmatpush1.msra.mxu0 0.0
        %4394 = vmatprep.subr.mxu0 0.0
        %4395 = vmatpush1.msra.mxu0 0.0
        %4396 = vmatprep.subr.mxu0 0.0
        %4397 = vmatpush1.msra.mxu0 0.0
        %4398 = vmatprep.subr.mxu0 0.0
        %4399 = vmatpush1.msra.mxu0 0.0
        %4400 = vmatprep.subr.mxu0 0.0
        %4401 = vmatpush1.msra.mxu0 0.0
        %4402 = vmatprep.subr.mxu0 0.0
        %4403 = vmatpush1.msra.mxu0 0.0
        %4404 = vmatprep.subr.mxu0 0.0
        %4405 = vmatpush1.msra.mxu0 0.0
        %4406 = vmatprep.subr.mxu0 0.0
        %4407 = vmatpush1.msra.mxu0 0.0
        %4408 = vmatprep.subr.mxu0 0.0
        %4409 = vmatpush1.msra.mxu0 0.0
        %4410 = vmatprep.subr.mxu0 0.0
        %4411 = vmatpush1.msra.mxu0 0.0
        %4412 = vmatprep.subr.mxu0 0.0
        %4413 = vmatpush1.msra.mxu0 0.0
        %4414 = vmatprep.subr.mxu0 0.0
        %4415 = vmatpush1.msra.mxu0 0.0
        %4416 = vmatprep.subr.mxu0 0.0
        %4417 = vmatpush1.msra.mxu0 0.0
        %4418 = vmatprep.subr.mxu0 0.0
        %4419 = vmatpush1.msra.mxu0 0.0
        %4420 = vmatprep.subr.mxu0 0.0
        %4421 = vmatpush1.msra.mxu0 0.0
        %4422 = vmatprep.subr.mxu0 0.0
        %4423 = vmatpush1.msra.mxu0 0.0
        %4424 = vmatprep.mubr.f32.mxu0 0.0
        %4425 = vmatmul.mubr.f32.gmra.mrb[0].mxu0 %v4266
        %v4426 = vpop.f32.mrb[0].mxu0
        %v4427 = vadd.f32 %v4254, %v4426
        %v4428 = vpop.f32.mrb[0].mxu0
        %v4429 = vadd.f32 %v4254, %v4428
        %4430 = vmatprep.mubr.f32.mxu0 0.0
        %4431 = vmatmul.mubr.f32.gmra.mrb[0].mxu0 %v4269
        %v4432 = vpop.f32.mrb[0].mxu0
        %v4433 = vpop.f32.mrb[0].mxu0
        %4434 = vmatprep.mubr.f32.mxu0 0.0
        %4435 = vmatmul.mubr.f32.gmra.mrb[0].mxu0 %v4272
        %v4436 = vpop.f32.mrb[0].mxu0
        %v4437 = vpop.f32.mrb[0].mxu0
        %4438 = vmatprep.mubr.f32.mxu0 0.0
        %4439 = vmatmul.mubr.f32.gmra.mrb[0].mxu0 %v4275
        %v4440 = vpop.f32.mrb[0].mxu0
        %v4441 = vpop.f32.mrb[0].mxu0
        %4442 = vdwg.mxu0
        %4443 = vmatprep.subr.mxu0 %v4220
        %4444 = vmatpush1.msra.mxu0 %v4219
        %4445 = vmatprep.subr.mxu0 %v4228
        %4446 = vmatpush1.msra.mxu0 %v4227
        %4447 = vmatprep.subr.mxu0 %v4236
        %4448 = vmatpush1.msra.mxu0 %v4235
        %4449 = vmatprep.subr.mxu0 %v4244
        %4450 = vmatpush1.msra.mxu0 %v4243
        %4451 = vmatprep.subr.mxu0 0.0
        %4452 = vmatpush1.msra.mxu0 0.0
        %4453 = vmatprep.subr.mxu0 0.0
        %4454 = vmatpush1.msra.mxu0 0.0
        %4455 = vmatprep.subr.mxu0 0.0
        %4456 = vmatpush1.msra.mxu0 0.0
        %4457 = vmatprep.subr.mxu0 0.0
        %4458 = vmatpush1.msra.mxu0 0.0
        %4459 = vmatprep.subr.mxu0 0.0
        %4460 = vmatpush1.msra.mxu0 0.0
        %4461 = vmatprep.subr.mxu0 0.0
        %4462 = vmatpush1.msra.mxu0 0.0
        %4463 = vmatprep.subr.mxu0 0.0
        %4464 = vmatpush1.msra.mxu0 0.0
        %4465 = vmatprep.subr.mxu0 0.0
        %4466 = vmatpush1.msra.mxu0 0.0
        %4467 = vmatprep.subr.mxu0 0.0
        %4468 = vmatpush1.msra.mxu0 0.0
        %4469 = vmatprep.subr.mxu0 0.0
        %4470 = vmatpush1.msra.mxu0 0.0
        %4471 = vmatprep.subr.mxu0 0.0
        %4472 = vmatpush1.msra.mxu0 0.0
        %4473 = vmatprep.subr.mxu0 0.0
        %4474 = vmatpush1.msra.mxu0 0.0
        %4475 = vmatprep.subr.mxu0 0.0
        %4476 = vmatpush1.msra.mxu0 0.0
        %4477 = vmatprep.subr.mxu0 0.0
        %4478 = vmatpush1.msra.mxu0 0.0
        %4479 = vmatprep.subr.mxu0 0.0
        %4480 = vmatpush1.msra.mxu0 0.0
        %4481 = vmatprep.subr.mxu0 0.0
        %4482 = vmatpush1.msra.mxu0 0.0
        %4483 = vmatprep.subr.mxu0 0.0
        %4484 = vmatpush1.msra.mxu0 0.0
        %4485 = vmatprep.subr.mxu0 0.0
        %4486 = vmatpush1.msra.mxu0 0.0
        %4487 = vmatprep.subr.mxu0 0.0
        %4488 = vmatpush1.msra.mxu0 0.0
        %4489 = vmatprep.subr.mxu0 0.0
        %4490 = vmatpush1.msra.mxu0 0.0
        %4491 = vmatprep.subr.mxu0 0.0
        %4492 = vmatpush1.msra.mxu0 0.0
        %4493 = vmatprep.subr.mxu0 0.0
        %4494 = vmatpush1.msra.mxu0 0.0
        %4495 = vmatprep.subr.mxu0 0.0
        %4496 = vmatpush1.msra.mxu0 0.0
        %4497 = vmatprep.subr.mxu0 0.0
        %4498 = vmatpush1.msra.mxu0 0.0
        %4499 = vmatprep.subr.mxu0 0.0
        %4500 = vmatpush1.msra.mxu0 0.0
        %4501 = vmatprep.subr.mxu0 0.0
        %4502 = vmatpush1.msra.mxu0 0.0
        %4503 = vmatprep.subr.mxu0 0.0
        %4504 = vmatpush1.msra.mxu0 0.0
        %4505 = vmatprep.subr.mxu0 0.0
        %4506 = vmatpush1.msra.mxu0 0.0
        %4507 = vmatprep.mubr.f32.mxu0 0.0
        %4508 = vmatmul.mubr.f32.gmra.mrb[0].mxu0 %v4266
        %v4509 = vpop.f32.mrb[0].mxu0
        %v4510 = vadd.f32 %v4254, %v4509
        %v4511 = vpop.f32.mrb[0].mxu0
        %v4512 = vadd.f32 %v4254, %v4511
        %4513 = vmatprep.mubr.f32.mxu0 0.0
        %4514 = vmatmul.mubr.f32.gmra.mrb[0].mxu0 %v4269
        %v4515 = vpop.f32.mrb[0].mxu0
        %v4516 = vpop.f32.mrb[0].mxu0
        %4517 = vmatprep.mubr.f32.mxu0 0.0
        %4518 = vmatmul.mubr.f32.gmra.mrb[0].mxu0 %v4272
        %v4519 = vpop.f32.mrb[0].mxu0
        %v4520 = vpop.f32.mrb[0].mxu0
        %4521 = vmatprep.mubr.f32.mxu0 0.0
        %4522 = vmatmul.mubr.f32.gmra.mrb[0].mxu0 %v4275
        %v4523 = vpop.f32.mrb[0].mxu0
        %v4524 = vpop.f32.mrb[0].mxu0
        %4525 = vdwg.mxu0
        %4526 = vmatprep.subr.mxu0 %v4222
        %4527 = vmatpush1.msra.mxu0 %v4221
        %4528 = vmatprep.subr.mxu0 %v4230
        %4529 = vmatpush1.msra.mxu0 %v4229
        %4530 = vmatprep.subr.mxu0 %v4238
        %4531 = vmatpush1.msra.mxu0 %v4237
        %4532 = vmatprep.subr.mxu0 %v4246
        %4533 = vmatpush1.msra.mxu0 %v4245
        %4534 = vmatprep.subr.mxu0 0.0
        %4535 = vmatpush1.msra.mxu0 0.0
        %4536 = vmatprep.subr.mxu0 0.0
        %4537 = vmatpush1.msra.mxu0 0.0
        %4538 = vmatprep.subr.mxu0 0.0
        %4539 = vmatpush1.msra.mxu0 0.0
        %4540 = vmatprep.subr.mxu0 0.0
        %4541 = vmatpush1.msra.mxu0 0.0
        %4542 = vmatprep.subr.mxu0 0.0
        %4543 = vmatpush1.msra.mxu0 0.0
        %4544 = vmatprep.subr.mxu0 0.0
        %4545 = vmatpush1.msra.mxu0 0.0
        %4546 = vmatprep.subr.mxu0 0.0
        %4547 = vmatpush1.msra.mxu0 0.0
        %4548 = vmatprep.subr.mxu0 0.0
        %4549 = vmatpush1.msra.mxu0 0.0
        %4550 = vmatprep.subr.mxu0 0.0
        %4551 = vmatpush1.msra.mxu0 0.0
        %4552 = vmatprep.subr.mxu0 0.0
        %4553 = vmatpush1.msra.mxu0 0.0
        %4554 = vmatprep.subr.mxu0 0.0
        %4555 = vmatpush1.msra.mxu0 0.0
        %4556 = vmatprep.subr.mxu0 0.0
        %4557 = vmatpush1.msra.mxu0 0.0
        %4558 = vmatprep.subr.mxu0 0.0
        %4559 = vmatpush1.msra.mxu0 0.0
        %4560 = vmatprep.subr.mxu0 0.0
        %4561 = vmatpush1.msra.mxu0 0.0
        %4562 = vmatprep.subr.mxu0 0.0
        %4563 = vmatpush1.msra.mxu0 0.0
        %4564 = vmatprep.subr.mxu0 0.0
        %4565 = vmatpush1.msra.mxu0 0.0
        %4566 = vmatprep.subr.mxu0 0.0
        %4567 = vmatpush1.msra.mxu0 0.0
        %4568 = vmatprep.subr.mxu0 0.0
        %4569 = vmatpush1.msra.mxu0 0.0
        %4570 = vmatprep.subr.mxu0 0.0
        %4571 = vmatpush1.msra.mxu0 0.0
        %4572 = vmatprep.subr.mxu0 0.0
        %4573 = vmatpush1.msra.mxu0 0.0
        %4574 = vmatprep.subr.mxu0 0.0
        %4575 = vmatpush1.msra.mxu0 0.0
        %4576 = vmatprep.subr.mxu0 0.0
        %4577 = vmatpush1.msra.mxu0 0.0
        %4578 = vmatprep.subr.mxu0 0.0
        %4579 = vmatpush1.msra.mxu0 0.0
        %4580 = vmatprep.subr.mxu0 0.0
        %4581 = vmatpush1.msra.mxu0 0.0
        %4582 = vmatprep.subr.mxu0 0.0
        %4583 = vmatpush1.msra.mxu0 0.0
        %4584 = vmatprep.subr.mxu0 0.0
        %4585 = vmatpush1.msra.mxu0 0.0
        %4586 = vmatprep.subr.mxu0 0.0
        %4587 = vmatpush1.msra.mxu0 0.0
        %4588 = vmatprep.subr.mxu0 0.0
        %4589 = vmatpush1.msra.mxu0 0.0
        %4590 = vmatprep.mubr.f32.mxu0 0.0
        %4591 = vmatmul.mubr.f32.gmra.mrb[0].mxu0 %v4266
        %v4592 = vpop.f32.mrb[0].mxu0
        %v4593 = vadd.f32 %v4254, %v4592
        %v4594 = vpop.f32.mrb[0].mxu0
        %v4595 = vadd.f32 %v4254, %v4594
        %4596 = vmatprep.mubr.f32.mxu0 0.0
        %4597 = vmatmul.mubr.f32.gmra.mrb[0].mxu0 %v4269
        %v4598 = vpop.f32.mrb[0].mxu0
        %v4599 = vpop.f32.mrb[0].mxu0
        %4600 = vmatprep.mubr.f32.mxu0 0.0
        %4601 = vmatmul.mubr.f32.gmra.mrb[0].mxu0 %v4272
        %v4602 = vpop.f32.mrb[0].mxu0
        %v4603 = vpop.f32.mrb[0].mxu0
        %4604 = vmatprep.mubr.f32.mxu0 0.0
        %4605 = vmatmul.mubr.f32.gmra.mrb[0].mxu0 %v4275
        %v4606 = vpop.f32.mrb[0].mxu0
        %v4607 = vpop.f32.mrb[0].mxu0
        %4608 = vdwg.mxu0
        %4609 = vst [vmem:[%s257] sm:$0xff] %v4344
        %4610 = vst [vmem:[%s257 + $0x8] sm:$0xff] %v4346
        %4611 = vst [vmem:[%s257 + $0x10] sm:$0xff] %v4427
        %4612 = vst [vmem:[%s257 + $0x18] sm:$0xff] %v4429
        %4613 = vst [vmem:[%s257 + $0x20] sm:$0xff] %v4510
        %4614 = vst [vmem:[%s257 + $0x28] sm:$0xff] %v4512
        %4615 = vst [vmem:[%s257 + $0x30] sm:$0xff] %v4593
        %4616 = vst [vmem:[%s257 + $0x38] sm:$0xff] %v4595
        %s4617 = sand.u32 %s120, 1
        %s4618 = scalar_lea.sflag [#allocation4], %s4617
        %s4619 = sand.u32 %s120, 1
        %s4620 = smul.addr %s4619, 64
        %s4621 = scalar_lea.vmem [#allocation10], %s4620
        // Predicated region
        $region53: #{fwd.1} parent=35 // pred_check
          %p4622 = pneg %p130
        $region54: #{fwd.1} parent=35 // pred_check_branch
          %4624 = sbr.rel (%p4622) target = $region56
        $region55: #{fwd.1} parent=35 // pred_region
          %s4625 = smul.u32 8, %s23
          %s4627 = ssub.s32 1024, 1024
          %4628 = vsyncadd %s4618, %s4627
          %s4629 = smul.addr %s4625, 128
          %s4630 = scalar_lea.hbm %s4, %s4629
          %s4632 = sshll.u32 %s4621, 4
          %s4633 = int_to_ptr.vmem [resolvable:$true] %s4632
          %4635 = dma.vmem_to_hbm [thread:$0]  %s4633, 1024, %s4630, %s4618
        $region56: #{fwd.1} parent=35 // pred_fallthru
          _
      $region36: #{fwd.1} parent=5 // pred_fallthru
        _
      %p4636 = scmp.le.s32.totalorder 2, %s18
      // Predicated region
      $region57: #{fwd.1} parent=5 // pred_check
        %p4637 = pneg %p4636
      $region58: #{fwd.1} parent=5 // pred_check_branch
        %4639 = sbr.rel (%p4637) target = $region60
      $region59: #{fwd.1} parent=5 // pred_region
        %s4640 = ssub.s32 %s18, 2
        // Predicated region
        $region61: #{fwd.1} parent=59 // pred_check
          %p4641 = pneg %p136
        $region62: #{fwd.1} parent=59 // pred_check_branch
          %4643 = sbr.rel (%p4641) target = $region64
        $region63: #{fwd.1} parent=59 // pred_region
          %s4644 = sand.u32 %s121, 1
          %s4645 = scalar_lea.sflag [#allocation4], %s4644
          %s4646 = sand.u32 %s121, 1
          %s4647 = smul.addr %s4646, 64
          %s4648 = scalar_lea.vmem [#allocation10], %s4647
          %4649 = dma.done %s4645, 1024
        $region64: #{fwd.1} parent=59 // pred_fallthru
          _
      $region60: #{fwd.1} parent=5 // pred_fallthru
        _
    $region6: #{fwd.1} parent=1 // loop_footer
      %s22 = sadd.s32 1, %s18
    $region7: #{fwd.1} parent=1 // loop_footer_branch
      %17 = sbr.rel target = $region3
    $region8: #{fwd.1} parent=1 // loop_exit
      _
    %4650 = vsyncpa [#allocation3], 1
    %s4651 = scalar_lea.sflag [#allocation3], 1
    %4652 = vsyncpa %s4651, 1
    %4653 = vsyncpa [#allocation6], 1
    %4654 = vsyncpa [#allocation9], 1
    %4655 = vsyncpa [#allocation4], 1
    %s4656 = scalar_lea.sflag [#allocation4], 1
    %4657 = vsyncpa %s4656, 1

</llo_original>
